<compile_context>
chip_gen: v7x
topology: tpu7x:2x2x1
jax: 0.10.0
libtpu: 0.0.40
codegen_flags: <defaults>
</compile_context>

<pallas_src>
import jax
import jax.numpy as jnp
from jax.experimental import pallas as pl
from jax.experimental.pallas import tpu as pltpu


def _fused_double_conv_kernel(xa_ref, xh_ref, w1_ref, b1_ref, w2_ref, b2_ref,
                              o_ref, mid_ref, acc1_ref, acc2_ref):
    # xa_ref : (1, tile_h,     W+2, Cin)  body rows of the padded input
    # xh_ref : (1, 4,          W+2, Cin)  4 halo rows just below the body rows
    # w1_ref : (3, 3*Cin,  Cmid)          per-kh weight, kw/cin flattened into K
    # b1_ref : (1, Cmid)
    # w2_ref : (3, 3*Cmid, Cout)
    # b2_ref : (1, Cout)
    # o_ref  : (1, tile_h, W, Cout)
    # mid_ref: (tile_h+2, W+2, Cmid)  VMEM conv1 output, zero-padded along W
    # acc1_ref: ((tile_h+2)*W, Cmid) f32   acc2_ref: (tile_h*W, Cout) f32
    t = pl.program_id(1)
    n_t = pl.num_programs(1)

    tile_h = xa_ref.shape[1]
    wp = xa_ref.shape[2]
    w = wp - 2
    cin = xa_ref.shape[3]
    cmid = mid_ref.shape[-1]
    cout = o_ref.shape[-1]
    r1 = tile_h + 2          # conv1 rows computed per tile (1-row halo each side)

    # (tile_h + 4, W+2, Cin) input window: body block + 4-row halo block.
    x_win = jnp.concatenate([xa_ref[0], xh_ref[0]], axis=0)

    # ---------------- conv1 (3x3, pad=1) + ReLU -> mid scratch ----------------
    # One matmul per kh with K = 3*Cin (kw taps concatenated on the K axis).
    for kh in range(3):
        win = x_win[kh:kh + r1]                                   # (r1, W+2, Cin)
        patch = jnp.concatenate(
            [win[:, kw:kw + w, :] for kw in range(3)], axis=-1
        ).reshape(r1 * w, 3 * cin)                                # (r1*W, 3*Cin)
        contrib = jnp.dot(patch, w1_ref[kh],
                          preferred_element_type=jnp.float32)
        if kh == 0:
            acc1_ref[...] = contrib
        else:
            acc1_ref[...] += contrib

    y1 = jnp.maximum(acc1_ref[...] + b1_ref[...], 0.0)            # (r1*W, Cmid) f32
    mid_ref[:, 1:w + 1, :] = y1.reshape(r1, w, cmid).astype(mid_ref.dtype)

    # conv2's zero padding, synthesized in VMEM (no HBM pad round-trip):
    zcol = jnp.zeros((r1, 1, cmid), mid_ref.dtype)
    mid_ref[:, 0:1, :] = zcol
    mid_ref[:, w + 1:w + 2, :] = zcol

    @pl.when(t == 0)
    def _():  # conv1 row above the image is conv2's zero padding, not a recompute
        mid_ref[0:1, :, :] = jnp.zeros((1, wp, cmid), mid_ref.dtype)

    @pl.when(t == n_t - 1)
    def _():  # conv1 row below the image is conv2's zero padding
        mid_ref[r1 - 1:r1, :, :] = jnp.zeros((1, wp, cmid), mid_ref.dtype)

    # ---------------- conv2 (3x3, pad=1) + ReLU -> output ---------------------
    for kh in range(3):
        win = mid_ref[kh:kh + tile_h]                             # (tile_h, W+2, Cmid)
        patch = jnp.concatenate(
            [win[:, kw:kw + w, :] for kw in range(3)], axis=-1
        ).reshape(tile_h * w, 3 * cmid)                           # (tile_h*W, 3*Cmid)
        contrib = jnp.dot(patch, w2_ref[kh],
                          preferred_element_type=jnp.float32)
        if kh == 0:
            acc2_ref[...] = contrib
        else:
            acc2_ref[...] += contrib

    y2 = jnp.maximum(acc2_ref[...] + b2_ref[...], 0.0)            # (tile_h*W, Cout) f32
    o_ref[...] = y2.reshape(1, tile_h, w, cout).astype(o_ref.dtype)


def _choose_tile_h(H, max_tile=64):
    for cand in range(min(H, max_tile), 3, -1):
        if H % cand == 0 and cand % 4 == 0:
            return cand
    raise ValueError(f"H={H} must have a divisor that is a multiple of 4")


def _double_conv_relu_nhwc(x, w1, b1, w2, b2, tile_h=None):
    """x: (N,H,W,Cin) NHWC; w1:(3,3,Cin,Cmid); w2:(3,3,Cmid,Cout) -> (N,H,W,Cout)."""
    N, H, W, Cin = x.shape
    Cmid = w1.shape[-1]
    Cout = w2.shape[-1]

    tile_h = _choose_tile_h(H) if tile_h is None else tile_h
    assert H % tile_h == 0 and tile_h % 4 == 0, (H, tile_h)
    n_tiles = H // tile_h
    halo_blk = tile_h // 4   # block index step for the 4-row halo block

    # Single spatial pre-pad of the *input* only: 2 rows (fused 2-conv halo) and
    # 1 column each side. The intermediate's padding is done in-kernel.
    xp = jnp.pad(x, ((0, 0), (2, 2), (1, 1), (0, 0)))

    # Flatten (kw, cin) into the contraction axis once, outside the kernel.
    w1r = w1.reshape(3, 3 * Cin, Cmid)
    w2r = w2.reshape(3, 3 * Cmid, Cout)
    b1r = b1.reshape(1, Cmid)
    b2r = b2.reshape(1, Cout)

    # TODO(synk): weights/biases could be single-buffered (pipeline_mode) since
    # their block index is constant; left default to keep lowering simple.
    return pl.pallas_call(
        _fused_double_conv_kernel,
        out_shape=jax.ShapeDtypeStruct((N, H, W, Cout), x.dtype),
        grid=(N, n_tiles),
        in_specs=[
            pl.BlockSpec((1, tile_h, W + 2, Cin), lambda n, t: (n, t, 0, 0)),
            pl.BlockSpec((1, 4, W + 2, Cin),
                         lambda n, t: (n, (t + 1) * halo_blk, 0, 0)),
            pl.BlockSpec((3, 3 * Cin, Cmid), lambda n, t: (0, 0, 0)),
            pl.BlockSpec((1, Cmid), lambda n, t: (0, 0)),
            pl.BlockSpec((3, 3 * Cmid, Cout), lambda n, t: (0, 0, 0)),
            pl.BlockSpec((1, Cout), lambda n, t: (0, 0)),
        ],
        out_specs=pl.BlockSpec((1, tile_h, W, Cout), lambda n, t: (n, t, 0, 0)),
        scratch_shapes=[
            pltpu.VMEM((tile_h + 2, W + 2, Cmid), x.dtype),        # conv1 output
            pltpu.VMEM(((tile_h + 2) * W, Cmid), jnp.float32),     # conv1 f32 acc
            pltpu.VMEM((tile_h * W, Cout), jnp.float32),           # conv2 f32 acc
        ],
        compiler_params=pltpu.CompilerParams(
            dimension_semantics=("parallel", "parallel"),
            # Budget that fits v7x (64 MiB VMEM); raise toward ~100 MiB and use
            # larger tile_h on v5e/v6e (128 MiB VMEM).
            vmem_limit_bytes=48 * 1024 * 1024,
        ),
    )(xp, xp, w1r, b1r, w2r, b2r)


def double_conv_relu(x_nchw, params, tile_h=None):
    """Forward of DoubleConv_ReLU. x_nchw: (N, Cin, H, W) -> (N, Cout, H, W)."""
    w1, b1, w2, b2 = params
    x = jnp.transpose(x_nchw, (0, 2, 3, 1))            # NCHW -> NHWC
    y = _double_conv_relu_nhwc(x, w1, b1, w2, b2, tile_h=tile_h)
    return jnp.transpose(y, (0, 3, 1, 2))               # NHWC -> NCHW


def init_params(key, in_channels, out_channels, dtype=jnp.float32):
    """Deterministic parameter init (kaiming-uniform-like scale, as in nn.Conv2d)."""
    k1, k2, k3, k4 = jax.random.split(key, 4)
    fan_in1 = in_channels * 3 * 3
    fan_in2 = out_channels * 3 * 3
    lim1 = 1.0 / (fan_in1 ** 0.5)
    lim2 = 1.0 / (fan_in2 ** 0.5)
    w1 = jax.random.uniform(k1, (3, 3, in_channels, out_channels), dtype, -lim1, lim1)
    b1 = jax.random.uniform(k2, (out_channels,), dtype, -lim1, lim1)
    w2 = jax.random.uniform(k3, (3, 3, out_channels, out_channels), dtype, -lim2, lim2)
    b2 = jax.random.uniform(k4, (out_channels,), dtype, -lim2, lim2)
    return (w1, b1, w2, b2)


def _reference(x_nchw, params):
    """Pure-JAX reference via lax.conv_general_dilated (matches PyTorch NCHW conv)."""
    w1, b1, w2, b2 = params

    def conv(x, w, b):
        y = jax.lax.conv_general_dilated(
            x, jnp.transpose(w, (3, 2, 0, 1)),
            window_strides=(1, 1), padding=((1, 1), (1, 1)),
            dimension_numbers=("NCHW", "OIHW", "NCHW"))
        return jnp.maximum(y + b[None, :, None, None], 0.0)

    return conv(conv(x_nchw, w1, b1), w2, b2)


if __name__ == "__main__":
    key = jax.random.PRNGKey(0)
    kx, kp = jax.random.split(key)

    N, Cin, Cout, H, W = 2, 4, 8, 16, 16
    x = jax.random.normal(kx, (N, Cin, H, W), jnp.float32)
    params = init_params(kp, Cin, Cout)

    # tile_h=8 -> 2 row tiles per image: exercises the halo + boundary-pad path.
    out = double_conv_relu(x, params, tile_h=8)
    out = jax.block_until_ready(out)

    ref = _reference(x, params)
    assert out.shape == (N, Cout, H, W)
    assert jnp.allclose(out, ref, atol=2e-4, rtol=2e-4), float(jnp.max(jnp.abs(out - ref)))

    print("KERNEL_OK")
</pallas_src>

<mosaic_0001>
module attributes {stable_mosaic.version = 11 : i64} {
  func.func @_fused_double_conv_kernel(%arg0: i32, %arg1: i32, %arg2: memref<1x8x18x4xf32, #tpu.memory_space<vmem>>, %arg3: memref<1x4x18x4xf32, #tpu.memory_space<vmem>>, %arg4: memref<3x12x8xf32, #tpu.memory_space<vmem>>, %arg5: memref<1x8xf32, #tpu.memory_space<vmem>>, %arg6: memref<3x24x8xf32, #tpu.memory_space<vmem>>, %arg7: memref<1x8xf32, #tpu.memory_space<vmem>>, %arg8: memref<1x8x16x8xf32, #tpu.memory_space<vmem>>, %arg9: memref<10x18x8xf32, #tpu.memory_space<vmem>>, %arg10: memref<160x8xf32, #tpu.memory_space<vmem>>, %arg11: memref<128x8xf32, #tpu.memory_space<vmem>>) attributes {dimension_semantics = [#tpu.dimension_semantics<parallel>, #tpu.dimension_semantics<parallel>], iteration_bounds = array<i64: 2, 2>, scalar_prefetch = 0 : i64, scratch_operands = 3 : i64, tpu.core_type = #tpu.core_type<tc>, window_params = [{transform_indices = @transform_0, window_bounds = array<i64: 1, 8, 18, 4>}, {transform_indices = @transform_1, window_bounds = array<i64: 1, 4, 18, 4>}, {pipeline_mode = #tpu.pipeline_mode<synchronous>, transform_indices = @transform_2, window_bounds = array<i64: 3, 12, 8>}, {pipeline_mode = #tpu.pipeline_mode<synchronous>, transform_indices = @transform_3, window_bounds = array<i64: 1, 8>}, {pipeline_mode = #tpu.pipeline_mode<synchronous>, transform_indices = @transform_4, window_bounds = array<i64: 3, 24, 8>}, {pipeline_mode = #tpu.pipeline_mode<synchronous>, transform_indices = @transform_5, window_bounds = array<i64: 1, 8>}, {transform_indices = @transform_6, window_bounds = array<i64: 1, 8, 16, 8>}]} {
    %c0 = arith.constant 0 : index
    %c0_0 = arith.constant 0 : index
    %c0_1 = arith.constant 0 : index
    %c0_2 = arith.constant 0 : index
    %0 = vector.load %arg2[%c0, %c0_0, %c0_1, %c0_2] : memref<1x8x18x4xf32, #tpu.memory_space<vmem>>, vector<1x8x18x4xf32>
    %1 = vector.shape_cast %0 : vector<1x8x18x4xf32> to vector<8x18x4xf32>
    %c0_3 = arith.constant 0 : index
    %c0_4 = arith.constant 0 : index
    %c0_5 = arith.constant 0 : index
    %c0_6 = arith.constant 0 : index
    %2 = vector.load %arg3[%c0_3, %c0_4, %c0_5, %c0_6] : memref<1x4x18x4xf32, #tpu.memory_space<vmem>>, vector<1x4x18x4xf32>
    %3 = vector.shape_cast %2 : vector<1x4x18x4xf32> to vector<4x18x4xf32>
    %4 = tpu.concatenate %1, %3 in 0 : vector<8x18x4xf32>, vector<4x18x4xf32> -> vector<12x18x4xf32>
    %5 = vector.extract_strided_slice %4 {offsets = [0, 0, 0], sizes = [10, 18, 4], strides = [1, 1, 1]} : vector<12x18x4xf32> to vector<10x18x4xf32>
    %6 = vector.extract_strided_slice %5 {offsets = [0, 0, 0], sizes = [10, 16, 4], strides = [1, 1, 1]} : vector<10x18x4xf32> to vector<10x16x4xf32>
    %7 = vector.extract_strided_slice %5 {offsets = [0, 1, 0], sizes = [10, 16, 4], strides = [1, 1, 1]} : vector<10x18x4xf32> to vector<10x16x4xf32>
    %8 = vector.extract_strided_slice %5 {offsets = [0, 2, 0], sizes = [10, 16, 4], strides = [1, 1, 1]} : vector<10x18x4xf32> to vector<10x16x4xf32>
    %9 = tpu.concatenate %6, %7, %8 in 2 : vector<10x16x4xf32>, vector<10x16x4xf32>, vector<10x16x4xf32> -> vector<10x16x12xf32>
    %10 = vector.shape_cast %9 : vector<10x16x12xf32> to vector<160x12xf32>
    %c0_7 = arith.constant 0 : index
    %c0_8 = arith.constant 0 : index
    %c0_9 = arith.constant 0 : index
    %11 = vector.load %arg4[%c0_7, %c0_8, %c0_9] : memref<3x12x8xf32, #tpu.memory_space<vmem>>, vector<1x12x8xf32>
    %12 = vector.shape_cast %11 : vector<1x12x8xf32> to vector<12x8xf32>
    %cst = arith.constant dense<0.000000e+00> : vector<160x8xf32>
    %13 = tpu.matmul %10, %12, %cst {dimension_numbers = #tpu.dot_dimension_numbers<[1], [0], [0], [1], [0, 0, 1, 1], [], []>} : vector<160x12xf32>, vector<12x8xf32>, vector<160x8xf32> -> vector<160x8xf32>
    %c0_10 = arith.constant 0 : index
    %c0_11 = arith.constant 0 : index
    %14 = vector.load %arg10[%c0_10, %c0_11] : memref<160x8xf32, #tpu.memory_space<vmem>>, vector<160x8xf32>
    tpu.vector_store %arg10[%c0_10, %c0_11], %13 {strides = array<i32>} : memref<160x8xf32, #tpu.memory_space<vmem>>, vector<160x8xf32>,
    %15 = vector.extract_strided_slice %4 {offsets = [1, 0, 0], sizes = [10, 18, 4], strides = [1, 1, 1]} : vector<12x18x4xf32> to vector<10x18x4xf32>
    %16 = vector.extract_strided_slice %15 {offsets = [0, 0, 0], sizes = [10, 16, 4], strides = [1, 1, 1]} : vector<10x18x4xf32> to vector<10x16x4xf32>
    %17 = vector.extract_strided_slice %15 {offsets = [0, 1, 0], sizes = [10, 16, 4], strides = [1, 1, 1]} : vector<10x18x4xf32> to vector<10x16x4xf32>
    %18 = vector.extract_strided_slice %15 {offsets = [0, 2, 0], sizes = [10, 16, 4], strides = [1, 1, 1]} : vector<10x18x4xf32> to vector<10x16x4xf32>
    %19 = tpu.concatenate %16, %17, %18 in 2 : vector<10x16x4xf32>, vector<10x16x4xf32>, vector<10x16x4xf32> -> vector<10x16x12xf32>
    %20 = vector.shape_cast %19 : vector<10x16x12xf32> to vector<160x12xf32>
    %c1 = arith.constant 1 : index
    %c0_12 = arith.constant 0 : index
    %c0_13 = arith.constant 0 : index
    %21 = vector.load %arg4[%c1, %c0_12, %c0_13] : memref<3x12x8xf32, #tpu.memory_space<vmem>>, vector<1x12x8xf32>
    %22 = vector.shape_cast %21 : vector<1x12x8xf32> to vector<12x8xf32>
    %cst_14 = arith.constant dense<0.000000e+00> : vector<160x8xf32>
    %23 = tpu.matmul %20, %22, %cst_14 {dimension_numbers = #tpu.dot_dimension_numbers<[1], [0], [0], [1], [0, 0, 1, 1], [], []>} : vector<160x12xf32>, vector<12x8xf32>, vector<160x8xf32> -> vector<160x8xf32>
    %c0_15 = arith.constant 0 : index
    %c0_16 = arith.constant 0 : index
    %24 = vector.load %arg10[%c0_15, %c0_16] : memref<160x8xf32, #tpu.memory_space<vmem>>, vector<160x8xf32>
    %25 = arith.addf %24, %23 : vector<160x8xf32>
    %c0_17 = arith.constant 0 : index
    %c0_18 = arith.constant 0 : index
    %26 = vector.load %arg10[%c0_17, %c0_18] : memref<160x8xf32, #tpu.memory_space<vmem>>, vector<160x8xf32>
    tpu.vector_store %arg10[%c0_17, %c0_18], %25 {strides = array<i32>} : memref<160x8xf32, #tpu.memory_space<vmem>>, vector<160x8xf32>,
    %27 = vector.extract_strided_slice %4 {offsets = [2, 0, 0], sizes = [10, 18, 4], strides = [1, 1, 1]} : vector<12x18x4xf32> to vector<10x18x4xf32>
    %28 = vector.extract_strided_slice %27 {offsets = [0, 0, 0], sizes = [10, 16, 4], strides = [1, 1, 1]} : vector<10x18x4xf32> to vector<10x16x4xf32>
    %29 = vector.extract_strided_slice %27 {offsets = [0, 1, 0], sizes = [10, 16, 4], strides = [1, 1, 1]} : vector<10x18x4xf32> to vector<10x16x4xf32>
    %30 = vector.extract_strided_slice %27 {offsets = [0, 2, 0], sizes = [10, 16, 4], strides = [1, 1, 1]} : vector<10x18x4xf32> to vector<10x16x4xf32>
    %31 = tpu.concatenate %28, %29, %30 in 2 : vector<10x16x4xf32>, vector<10x16x4xf32>, vector<10x16x4xf32> -> vector<10x16x12xf32>
    %32 = vector.shape_cast %31 : vector<10x16x12xf32> to vector<160x12xf32>
    %c2 = arith.constant 2 : index
    %c0_19 = arith.constant 0 : index
    %c0_20 = arith.constant 0 : index
    %33 = vector.load %arg4[%c2, %c0_19, %c0_20] : memref<3x12x8xf32, #tpu.memory_space<vmem>>, vector<1x12x8xf32>
    %34 = vector.shape_cast %33 : vector<1x12x8xf32> to vector<12x8xf32>
    %cst_21 = arith.constant dense<0.000000e+00> : vector<160x8xf32>
    %35 = tpu.matmul %32, %34, %cst_21 {dimension_numbers = #tpu.dot_dimension_numbers<[1], [0], [0], [1], [0, 0, 1, 1], [], []>} : vector<160x12xf32>, vector<12x8xf32>, vector<160x8xf32> -> vector<160x8xf32>
    %c0_22 = arith.constant 0 : index
    %c0_23 = arith.constant 0 : index
    %36 = vector.load %arg10[%c0_22, %c0_23] : memref<160x8xf32, #tpu.memory_space<vmem>>, vector<160x8xf32>
    %37 = arith.addf %36, %35 : vector<160x8xf32>
    %c0_24 = arith.constant 0 : index
    %c0_25 = arith.constant 0 : index
    %38 = vector.load %arg10[%c0_24, %c0_25] : memref<160x8xf32, #tpu.memory_space<vmem>>, vector<160x8xf32>
    tpu.vector_store %arg10[%c0_24, %c0_25], %37 {strides = array<i32>} : memref<160x8xf32, #tpu.memory_space<vmem>>, vector<160x8xf32>,
    %c0_26 = arith.constant 0 : index
    %c0_27 = arith.constant 0 : index
    %39 = vector.load %arg10[%c0_26, %c0_27] : memref<160x8xf32, #tpu.memory_space<vmem>>, vector<160x8xf32>
    %c0_28 = arith.constant 0 : index
    %c0_29 = arith.constant 0 : index
    %40 = vector.load %arg5[%c0_28, %c0_29] : memref<1x8xf32, #tpu.memory_space<vmem>>, vector<1x8xf32>
    %41 = vector.broadcast %40 : vector<1x8xf32> to vector<160x8xf32>
    %42 = arith.addf %39, %41 : vector<160x8xf32>
    %cst_30 = arith.constant 0.000000e+00 : f32
    %43 = vector.broadcast %cst_30 : f32 to vector<160x8xf32>
    %44 = arith.maximumf %42, %43 : vector<160x8xf32>
    %45 = vector.shape_cast %44 : vector<160x8xf32> to vector<10x16x8xf32>
    %c0_31 = arith.constant 0 : index
    %c1_32 = arith.constant 1 : index
    %c0_33 = arith.constant 0 : index
    %46 = vector.load %arg9[%c0_31, %c1_32, %c0_33] : memref<10x18x8xf32, #tpu.memory_space<vmem>>, vector<10x16x8xf32>
    tpu.vector_store %arg9[%c0_31, %c1_32, %c0_33], %45 {strides = array<i32>} : memref<10x18x8xf32, #tpu.memory_space<vmem>>, vector<10x16x8xf32>,
    %cst_34 = arith.constant 0.000000e+00 : f32
    %47 = vector.broadcast %cst_34 : f32 to vector<10x1x8xf32>
    %c0_35 = arith.constant 0 : index
    %c0_36 = arith.constant 0 : index
    %c0_37 = arith.constant 0 : index
    %48 = vector.load %arg9[%c0_35, %c0_36, %c0_37] : memref<10x18x8xf32, #tpu.memory_space<vmem>>, vector<10x1x8xf32>
    tpu.vector_store %arg9[%c0_35, %c0_36, %c0_37], %47 {strides = array<i32>} : memref<10x18x8xf32, #tpu.memory_space<vmem>>, vector<10x1x8xf32>,
    %c0_38 = arith.constant 0 : index
    %c17 = arith.constant 17 : index
    %c0_39 = arith.constant 0 : index
    %49 = vector.load %arg9[%c0_38, %c17, %c0_39] : memref<10x18x8xf32, #tpu.memory_space<vmem>>, vector<10x1x8xf32>
    tpu.vector_store %arg9[%c0_38, %c17, %c0_39], %47 {strides = array<i32>} : memref<10x18x8xf32, #tpu.memory_space<vmem>>, vector<10x1x8xf32>,
    %c0_i32 = arith.constant 0 : i32
    %50 = arith.cmpi eq, %arg1, %c0_i32 : i32
    %51 = arith.extui %50 : i1 to i32
    %c0_i32_40 = arith.constant 0 : i32
    %52 = arith.cmpi ne, %51, %c0_i32_40 : i32
    scf.if %52 {
      %cst_82 = arith.constant 0.000000e+00 : f32
      %98 = vector.broadcast %cst_82 : f32 to vector<1x18x8xf32>
      %c0_83 = arith.constant 0 : index
      %c0_84 = arith.constant 0 : index
      %c0_85 = arith.constant 0 : index
      %99 = vector.load %arg9[%c0_83, %c0_84, %c0_85] : memref<10x18x8xf32, #tpu.memory_space<vmem>>, vector<1x18x8xf32>
      tpu.vector_store %arg9[%c0_83, %c0_84, %c0_85], %98 {strides = array<i32>} : memref<10x18x8xf32, #tpu.memory_space<vmem>>, vector<1x18x8xf32>,
    } else {
    }
    %c1_i32 = arith.constant 1 : i32
    %53 = arith.cmpi eq, %arg1, %c1_i32 : i32
    %54 = arith.extui %53 : i1 to i32
    %c0_i32_41 = arith.constant 0 : i32
    %55 = arith.cmpi ne, %54, %c0_i32_41 : i32
    scf.if %55 {
      %cst_82 = arith.constant 0.000000e+00 : f32
      %98 = vector.broadcast %cst_82 : f32 to vector<1x18x8xf32>
      %c9 = arith.constant 9 : index
      %c0_83 = arith.constant 0 : index
      %c0_84 = arith.constant 0 : index
      %99 = vector.load %arg9[%c9, %c0_83, %c0_84] : memref<10x18x8xf32, #tpu.memory_space<vmem>>, vector<1x18x8xf32>
      tpu.vector_store %arg9[%c9, %c0_83, %c0_84], %98 {strides = array<i32>} : memref<10x18x8xf32, #tpu.memory_space<vmem>>, vector<1x18x8xf32>,
    } else {
    }
    %c0_42 = arith.constant 0 : index
    %c0_43 = arith.constant 0 : index
    %c0_44 = arith.constant 0 : index
    %56 = vector.load %arg9[%c0_42, %c0_43, %c0_44] : memref<10x18x8xf32, #tpu.memory_space<vmem>>, vector<8x18x8xf32>
    %57 = vector.extract_strided_slice %56 {offsets = [0, 0, 0], sizes = [8, 16, 8], strides = [1, 1, 1]} : vector<8x18x8xf32> to vector<8x16x8xf32>
    %58 = vector.extract_strided_slice %56 {offsets = [0, 1, 0], sizes = [8, 16, 8], strides = [1, 1, 1]} : vector<8x18x8xf32> to vector<8x16x8xf32>
    %59 = vector.extract_strided_slice %56 {offsets = [0, 2, 0], sizes = [8, 16, 8], strides = [1, 1, 1]} : vector<8x18x8xf32> to vector<8x16x8xf32>
    %60 = tpu.concatenate %57, %58, %59 in 2 : vector<8x16x8xf32>, vector<8x16x8xf32>, vector<8x16x8xf32> -> vector<8x16x24xf32>
    %61 = vector.shape_cast %60 : vector<8x16x24xf32> to vector<128x24xf32>
    %c0_45 = arith.constant 0 : index
    %c0_46 = arith.constant 0 : index
    %c0_47 = arith.constant 0 : index
    %62 = vector.load %arg6[%c0_45, %c0_46, %c0_47] : memref<3x24x8xf32, #tpu.memory_space<vmem>>, vector<1x24x8xf32>
    %63 = vector.shape_cast %62 : vector<1x24x8xf32> to vector<24x8xf32>
    %cst_48 = arith.constant dense<0.000000e+00> : vector<128x8xf32>
    %64 = tpu.matmul %61, %63, %cst_48 {dimension_numbers = #tpu.dot_dimension_numbers<[1], [0], [0], [1], [0, 0, 1, 1], [], []>} : vector<128x24xf32>, vector<24x8xf32>, vector<128x8xf32> -> vector<128x8xf32>
    %c0_49 = arith.constant 0 : index
    %c0_50 = arith.constant 0 : index
    %65 = vector.load %arg11[%c0_49, %c0_50] : memref<128x8xf32, #tpu.memory_space<vmem>>, vector<128x8xf32>
    tpu.vector_store %arg11[%c0_49, %c0_50], %64 {strides = array<i32>} : memref<128x8xf32, #tpu.memory_space<vmem>>, vector<128x8xf32>,
    %c1_51 = arith.constant 1 : index
    %c0_52 = arith.constant 0 : index
    %c0_53 = arith.constant 0 : index
    %66 = vector.load %arg9[%c1_51, %c0_52, %c0_53] : memref<10x18x8xf32, #tpu.memory_space<vmem>>, vector<8x18x8xf32>
    %67 = vector.extract_strided_slice %66 {offsets = [0, 0, 0], sizes = [8, 16, 8], strides = [1, 1, 1]} : vector<8x18x8xf32> to vector<8x16x8xf32>
    %68 = vector.extract_strided_slice %66 {offsets = [0, 1, 0], sizes = [8, 16, 8], strides = [1, 1, 1]} : vector<8x18x8xf32> to vector<8x16x8xf32>
    %69 = vector.extract_strided_slice %66 {offsets = [0, 2, 0], sizes = [8, 16, 8], strides = [1, 1, 1]} : vector<8x18x8xf32> to vector<8x16x8xf32>
    %70 = tpu.concatenate %67, %68, %69 in 2 : vector<8x16x8xf32>, vector<8x16x8xf32>, vector<8x16x8xf32> -> vector<8x16x24xf32>
    %71 = vector.shape_cast %70 : vector<8x16x24xf32> to vector<128x24xf32>
    %c1_54 = arith.constant 1 : index
    %c0_55 = arith.constant 0 : index
    %c0_56 = arith.constant 0 : index
    %72 = vector.load %arg6[%c1_54, %c0_55, %c0_56] : memref<3x24x8xf32, #tpu.memory_space<vmem>>, vector<1x24x8xf32>
    %73 = vector.shape_cast %72 : vector<1x24x8xf32> to vector<24x8xf32>
    %cst_57 = arith.constant dense<0.000000e+00> : vector<128x8xf32>
    %74 = tpu.matmul %71, %73, %cst_57 {dimension_numbers = #tpu.dot_dimension_numbers<[1], [0], [0], [1], [0, 0, 1, 1], [], []>} : vector<128x24xf32>, vector<24x8xf32>, vector<128x8xf32> -> vector<128x8xf32>
    %c0_58 = arith.constant 0 : index
    %c0_59 = arith.constant 0 : index
    %75 = vector.load %arg11[%c0_58, %c0_59] : memref<128x8xf32, #tpu.memory_space<vmem>>, vector<128x8xf32>
    %76 = arith.addf %75, %74 : vector<128x8xf32>
    %c0_60 = arith.constant 0 : index
    %c0_61 = arith.constant 0 : index
    %77 = vector.load %arg11[%c0_60, %c0_61] : memref<128x8xf32, #tpu.memory_space<vmem>>, vector<128x8xf32>
    tpu.vector_store %arg11[%c0_60, %c0_61], %76 {strides = array<i32>} : memref<128x8xf32, #tpu.memory_space<vmem>>, vector<128x8xf32>,
    %c2_62 = arith.constant 2 : index
    %c0_63 = arith.constant 0 : index
    %c0_64 = arith.constant 0 : index
    %78 = vector.load %arg9[%c2_62, %c0_63, %c0_64] : memref<10x18x8xf32, #tpu.memory_space<vmem>>, vector<8x18x8xf32>
    %79 = vector.extract_strided_slice %78 {offsets = [0, 0, 0], sizes = [8, 16, 8], strides = [1, 1, 1]} : vector<8x18x8xf32> to vector<8x16x8xf32>
    %80 = vector.extract_strided_slice %78 {offsets = [0, 1, 0], sizes = [8, 16, 8], strides = [1, 1, 1]} : vector<8x18x8xf32> to vector<8x16x8xf32>
    %81 = vector.extract_strided_slice %78 {offsets = [0, 2, 0], sizes = [8, 16, 8], strides = [1, 1, 1]} : vector<8x18x8xf32> to vector<8x16x8xf32>
    %82 = tpu.concatenate %79, %80, %81 in 2 : vector<8x16x8xf32>, vector<8x16x8xf32>, vector<8x16x8xf32> -> vector<8x16x24xf32>
    %83 = vector.shape_cast %82 : vector<8x16x24xf32> to vector<128x24xf32>
    %c2_65 = arith.constant 2 : index
    %c0_66 = arith.constant 0 : index
    %c0_67 = arith.constant 0 : index
    %84 = vector.load %arg6[%c2_65, %c0_66, %c0_67] : memref<3x24x8xf32, #tpu.memory_space<vmem>>, vector<1x24x8xf32>
    %85 = vector.shape_cast %84 : vector<1x24x8xf32> to vector<24x8xf32>
    %cst_68 = arith.constant dense<0.000000e+00> : vector<128x8xf32>
    %86 = tpu.matmul %83, %85, %cst_68 {dimension_numbers = #tpu.dot_dimension_numbers<[1], [0], [0], [1], [0, 0, 1, 1], [], []>} : vector<128x24xf32>, vector<24x8xf32>, vector<128x8xf32> -> vector<128x8xf32>
    %c0_69 = arith.constant 0 : index
    %c0_70 = arith.constant 0 : index
    %87 = vector.load %arg11[%c0_69, %c0_70] : memref<128x8xf32, #tpu.memory_space<vmem>>, vector<128x8xf32>
    %88 = arith.addf %87, %86 : vector<128x8xf32>
    %c0_71 = arith.constant 0 : index
    %c0_72 = arith.constant 0 : index
    %89 = vector.load %arg11[%c0_71, %c0_72] : memref<128x8xf32, #tpu.memory_space<vmem>>, vector<128x8xf32>
    tpu.vector_store %arg11[%c0_71, %c0_72], %88 {strides = array<i32>} : memref<128x8xf32, #tpu.memory_space<vmem>>, vector<128x8xf32>,
    %c0_73 = arith.constant 0 : index
    %c0_74 = arith.constant 0 : index
    %90 = vector.load %arg11[%c0_73, %c0_74] : memref<128x8xf32, #tpu.memory_space<vmem>>, vector<128x8xf32>
    %c0_75 = arith.constant 0 : index
    %c0_76 = arith.constant 0 : index
    %91 = vector.load %arg7[%c0_75, %c0_76] : memref<1x8xf32, #tpu.memory_space<vmem>>, vector<1x8xf32>
    %92 = vector.broadcast %91 : vector<1x8xf32> to vector<128x8xf32>
    %93 = arith.addf %90, %92 : vector<128x8xf32>
    %cst_77 = arith.constant 0.000000e+00 : f32
    %94 = vector.broadcast %cst_77 : f32 to vector<128x8xf32>
    %95 = arith.maximumf %93, %94 : vector<128x8xf32>
    %96 = vector.shape_cast %95 : vector<128x8xf32> to vector<1x8x16x8xf32>
    %c0_78 = arith.constant 0 : index
    %c0_79 = arith.constant 0 : index
    %c0_80 = arith.constant 0 : index
    %c0_81 = arith.constant 0 : index
    %97 = vector.load %arg8[%c0_78, %c0_79, %c0_80, %c0_81] : memref<1x8x16x8xf32, #tpu.memory_space<vmem>>, vector<1x8x16x8xf32>
    tpu.vector_store %arg8[%c0_78, %c0_79, %c0_80, %c0_81], %96 {strides = array<i32>} : memref<1x8x16x8xf32, #tpu.memory_space<vmem>>, vector<1x8x16x8xf32>,
    return
  }
  func.func @transform_0(%arg0: i32, %arg1: i32) -> (i32, i32, i32, i32) {
    %c0_i32 = arith.constant 0 : i32
    %c0_i32_0 = arith.constant 0 : i32
    %c0_i32_1 = arith.constant 0 : i32
    return %arg0, %arg1, %c0_i32, %c0_i32_0 : i32, i32, i32, i32
  }
  func.func @transform_1(%arg0: i32, %arg1: i32) -> (i32, i32, i32, i32) {
    %c1_i32 = arith.constant 1 : i32
    %0 = arith.addi %arg1, %c1_i32 : i32
    %c2_i32 = arith.constant 2 : i32
    %1 = arith.muli %0, %c2_i32 : i32
    %c0_i32 = arith.constant 0 : i32
    %c0_i32_0 = arith.constant 0 : i32
    %c0_i32_1 = arith.constant 0 : i32
    return %arg0, %1, %c0_i32, %c0_i32_0 : i32, i32, i32, i32
  }
  func.func @transform_2(%arg0: i32, %arg1: i32) -> (i32, i32, i32) {
    %c0_i32 = arith.constant 0 : i32
    %c0_i32_0 = arith.constant 0 : i32
    %c0_i32_1 = arith.constant 0 : i32
    %c0_i32_2 = arith.constant 0 : i32
    return %c0_i32, %c0_i32_0, %c0_i32_1 : i32, i32, i32
  }
  func.func @transform_3(%arg0: i32, %arg1: i32) -> (i32, i32) {
    %c0_i32 = arith.constant 0 : i32
    %c0_i32_0 = arith.constant 0 : i32
    %c0_i32_1 = arith.constant 0 : i32
    return %c0_i32, %c0_i32_0 : i32, i32
  }
  func.func @transform_4(%arg0: i32, %arg1: i32) -> (i32, i32, i32) {
    %c0_i32 = arith.constant 0 : i32
    %c0_i32_0 = arith.constant 0 : i32
    %c0_i32_1 = arith.constant 0 : i32
    %c0_i32_2 = arith.constant 0 : i32
    return %c0_i32, %c0_i32_0, %c0_i32_1 : i32, i32, i32
  }
  func.func @transform_5(%arg0: i32, %arg1: i32) -> (i32, i32) {
    %c0_i32 = arith.constant 0 : i32
    %c0_i32_0 = arith.constant 0 : i32
    %c0_i32_1 = arith.constant 0 : i32
    return %c0_i32, %c0_i32_0 : i32, i32
  }
  func.func @transform_6(%arg0: i32, %arg1: i32) -> (i32, i32, i32, i32) {
    %c0_i32 = arith.constant 0 : i32
    %c0_i32_0 = arith.constant 0 : i32
    %c0_i32_1 = arith.constant 0 : i32
    return %arg0, %arg1, %c0_i32, %c0_i32_0 : i32, i32, i32, i32
  }
}

</mosaic_0001>

<llo_original>
// kernel: tpu_custom_call.1
$region0: #{tpu_custom_call.1}
  #allocation0 [shape = 'u32[]', space=smem, size = 0x4, offset = 0x4, fixed_abs, tag = 'smem constant byte address 0x4 - core index']
  #allocation1 [shape = 'u32[144,128]{1,0:T(1,128)}', space=vmem, size = 0x12000, scoped, tag = 'internal scratch']
  #allocation2 [shape = 'f32[10,18,8]{2,1,0:T(8,128)}', space=vmem, size = 0x1e000, scoped, tag = 'scratch operand']
  #allocation3 [shape = 'f32[160,8]{1,0:T(8,128)}', space=vmem, size = 0x14000, scoped, tag = 'scratch operand']
  #allocation4 [shape = 'f32[128,8]{1,0:T(8,128)}', space=vmem, size = 0x10000, scoped, tag = 'scratch operand']
  %s0 = inlined_call_operand.vmem [shape: f32[2,20,18,4], index: 0, kind: input, shape index: {}]
  %s1 = inlined_call_operand.vmem [shape: f32[2,20,18,4], index: 1, kind: input, shape index: {}]
  %s2 = inlined_call_operand.vmem [shape: f32[3,12,8], index: 2, kind: input, shape index: {}]
  %s3 = inlined_call_operand.vmem [shape: f32[1,8], index: 3, kind: input, shape index: {}]
  %s4 = inlined_call_operand.vmem [shape: f32[3,24,8], index: 4, kind: input, shape index: {}]
  %s5 = inlined_call_operand.vmem [shape: f32[1,8], index: 5, kind: input, shape index: {}]
  %s6 = inlined_call_operand.vmem [shape: f32[2,16,16,8], index: 6, kind: output, shape index: {}]
  %s7 = sld [smem:[#allocation0]]
  $region65: #{tpu_custom_call.1} parent=0
    _
  %s9 = ssub.s32 1, %s7
  %s10 = scalar_select 0, %s9, %s7
  loop: start=0, step=1, limit=6
  $region2: #{tpu_custom_call.1} parent=0 // loop_pre_header
    _
  $region3: #{tpu_custom_call.1} parent=0 // loop_header
    %s12 = sphi 0, %s16
    %p13 = scmp.ge.s32.totalorder %s12, 6
    %s19 = sphi 0, %s31
    %s20 = sphi 0, %s27
    %s21 = sphi 0, %s19
    %s22 = sphi 0, %s20
    %s23 = sphi 0, %s21
    %s24 = sphi 0, %s22
    %s36 = sphi 0, %s38
    %s39 = sphi 0, %s36
    %s40 = sphi 0, %s39
    %s56 = sphi 0, %s40
    %s68 = sphi 0, %s70
    %s71 = sphi 0, %s68
    %s72 = sphi 0, %s71
    %s88 = sphi 0, %s72
    %s92 = sphi 0, %s92
    %s94 = sphi 0, %s92
    %s95 = sphi 0, %s94
    %s109 = sphi 0, %s95
    %s113 = sphi 0, %s113
    %s115 = sphi 0, %s113
    %s116 = sphi 0, %s115
    %s130 = sphi 0, %s116
    %s134 = sphi 0, %s134
    %s136 = sphi 0, %s134
    %s137 = sphi 0, %s136
    %s151 = sphi 0, %s137
    %s155 = sphi 0, %s155
    %s157 = sphi 0, %s155
    %s158 = sphi 0, %s157
    %s172 = sphi 0, %s158
    %s180 = sphi 0, %s182
    %s183 = sphi 0, %s180
    %s184 = sphi 0, %s183
    %s200 = sphi 0, %s184
  $region4: #{tpu_custom_call.1} parent=0 // loop_header_branch
    %15 = sbr.rel (%p13) target = $region8
  $region5: #{tpu_custom_call.1} parent=0 // loop_body
    %s17 = ssub.s32 %s12, 1
    %s18 = ssub.s32 %s12, 2
    %s25 = sadd.s32 1, %s20
    %p26 = scmp.ge.s32.totalorder %s25, 2
    %s27 = scalar_select %p26, 0, %s25
    %s28 = sadd.s32 1, %s19
    %s29 = scalar_select %p26, %s28, %s19
    %p30 = scmp.ge.s32.totalorder %s29, 2
    %s31 = scalar_select %p30, 0, %s29
    %s32 = ssub.s32 %s19, %s31
    %s33 = ssub.s32 %s20, %s27
    %s34 = sor.u32 %s32, %s33
    %p35 = scmp.eq.s32.totalorder %s34, 0
    %s37 = sadd.s32 %s36, 1
    %s38 = scalar_select %p35, %s36, %s37
    %p41 = pneg %p35
    %p42 = scmp.eq.s32.totalorder %s12, 3
    %p43 = por %p41, %p42
    %p44 = scmp.ne.s32.totalorder %s36, %s39
    %p45 = scmp.eq.s32.totalorder %s12, 0
    %p46 = por %p44, %p45
    %p47 = scmp.ne.s32.totalorder %s36, %s39
    %p48 = scmp.eq.s32.totalorder %s17, 3
    %p49 = por %p47, %p48
    %p50 = scmp.ne.s32.totalorder %s39, %s40
    %p51 = scmp.eq.s32.totalorder %s17, 0
    %p52 = por %p50, %p51
    %p53 = scmp.ne.s32.totalorder %s39, %s40
    %p54 = scmp.eq.s32.totalorder %s18, 3
    %p55 = por %p53, %p54
    %p57 = scmp.ne.s32.totalorder %s40, %s56
    %p58 = scmp.eq.s32.totalorder %s18, 0
    %p59 = por %p57, %p58
    %s60 = sadd.s32 %s20, 1
    %s61 = smul.u32 %s60, 2
    %s62 = sadd.s32 %s27, 1
    %s63 = smul.u32 %s62, 2
    %s64 = ssub.s32 %s19, %s31
    %s65 = ssub.s32 %s61, %s63
    %s66 = sor.u32 %s64, %s65
    %p67 = scmp.eq.s32.totalorder %s66, 0
    %s69 = sadd.s32 %s68, 1
    %s70 = scalar_select %p67, %s68, %s69
    %p73 = pneg %p67
    %p74 = scmp.eq.s32.totalorder %s12, 3
    %p75 = por %p73, %p74
    %p76 = scmp.ne.s32.totalorder %s68, %s71
    %p77 = scmp.eq.s32.totalorder %s12, 0
    %p78 = por %p76, %p77
    %p79 = scmp.ne.s32.totalorder %s68, %s71
    %p80 = scmp.eq.s32.totalorder %s17, 3
    %p81 = por %p79, %p80
    %p82 = scmp.ne.s32.totalorder %s71, %s72
    %p83 = scmp.eq.s32.totalorder %s17, 0
    %p84 = por %p82, %p83
    %p85 = scmp.ne.s32.totalorder %s71, %s72
    %p86 = scmp.eq.s32.totalorder %s18, 3
    %p87 = por %p85, %p86
    %p89 = scmp.ne.s32.totalorder %s72, %s88
    %p90 = scmp.eq.s32.totalorder %s18, 0
    %p91 = por %p89, %p90
    %s93 = sadd.s32 %s92, 1
    %p96 = scmp.eq.s32.totalorder %s12, 3
    %p97 = scmp.ne.s32.totalorder %s92, %s94
    %p98 = scmp.eq.s32.totalorder %s12, 0
    %p99 = por %p97, %p98
    %p100 = scmp.ne.s32.totalorder %s92, %s94
    %p101 = scmp.eq.s32.totalorder %s17, 3
    %p102 = por %p100, %p101
    %p103 = scmp.ne.s32.totalorder %s94, %s95
    %p104 = scmp.eq.s32.totalorder %s17, 0
    %p105 = por %p103, %p104
    %p106 = scmp.ne.s32.totalorder %s94, %s95
    %p107 = scmp.eq.s32.totalorder %s18, 3
    %p108 = por %p106, %p107
    %p110 = scmp.ne.s32.totalorder %s95, %s109
    %p111 = scmp.eq.s32.totalorder %s18, 0
    %p112 = por %p110, %p111
    %s114 = sadd.s32 %s113, 1
    %p117 = scmp.eq.s32.totalorder %s12, 3
    %p118 = scmp.ne.s32.totalorder %s113, %s115
    %p119 = scmp.eq.s32.totalorder %s12, 0
    %p120 = por %p118, %p119
    %p121 = scmp.ne.s32.totalorder %s113, %s115
    %p122 = scmp.eq.s32.totalorder %s17, 3
    %p123 = por %p121, %p122
    %p124 = scmp.ne.s32.totalorder %s115, %s116
    %p125 = scmp.eq.s32.totalorder %s17, 0
    %p126 = por %p124, %p125
    %p127 = scmp.ne.s32.totalorder %s115, %s116
    %p128 = scmp.eq.s32.totalorder %s18, 3
    %p129 = por %p127, %p128
    %p131 = scmp.ne.s32.totalorder %s116, %s130
    %p132 = scmp.eq.s32.totalorder %s18, 0
    %p133 = por %p131, %p132
    %s135 = sadd.s32 %s134, 1
    %p138 = scmp.eq.s32.totalorder %s12, 3
    %p139 = scmp.ne.s32.totalorder %s134, %s136
    %p140 = scmp.eq.s32.totalorder %s12, 0
    %p141 = por %p139, %p140
    %p142 = scmp.ne.s32.totalorder %s134, %s136
    %p143 = scmp.eq.s32.totalorder %s17, 3
    %p144 = por %p142, %p143
    %p145 = scmp.ne.s32.totalorder %s136, %s137
    %p146 = scmp.eq.s32.totalorder %s17, 0
    %p147 = por %p145, %p146
    %p148 = scmp.ne.s32.totalorder %s136, %s137
    %p149 = scmp.eq.s32.totalorder %s18, 3
    %p150 = por %p148, %p149
    %p152 = scmp.ne.s32.totalorder %s137, %s151
    %p153 = scmp.eq.s32.totalorder %s18, 0
    %p154 = por %p152, %p153
    %s156 = sadd.s32 %s155, 1
    %p159 = scmp.eq.s32.totalorder %s12, 3
    %p160 = scmp.ne.s32.totalorder %s155, %s157
    %p161 = scmp.eq.s32.totalorder %s12, 0
    %p162 = por %p160, %p161
    %p163 = scmp.ne.s32.totalorder %s155, %s157
    %p164 = scmp.eq.s32.totalorder %s17, 3
    %p165 = por %p163, %p164
    %p166 = scmp.ne.s32.totalorder %s157, %s158
    %p167 = scmp.eq.s32.totalorder %s17, 0
    %p168 = por %p166, %p167
    %p169 = scmp.ne.s32.totalorder %s157, %s158
    %p170 = scmp.eq.s32.totalorder %s18, 3
    %p171 = por %p169, %p170
    %p173 = scmp.ne.s32.totalorder %s158, %s172
    %p174 = scmp.eq.s32.totalorder %s18, 0
    %p175 = por %p173, %p174
    %s176 = ssub.s32 %s19, %s31
    %s177 = ssub.s32 %s20, %s27
    %s178 = sor.u32 %s176, %s177
    %p179 = scmp.eq.s32.totalorder %s178, 0
    %s181 = sadd.s32 %s180, 1
    %s182 = scalar_select %p179, %s180, %s181
    %p185 = pneg %p179
    %p186 = scmp.eq.s32.totalorder %s12, 3
    %p187 = por %p185, %p186
    %p188 = scmp.ne.s32.totalorder %s180, %s183
    %p189 = scmp.eq.s32.totalorder %s12, 0
    %p190 = por %p188, %p189
    %p191 = scmp.ne.s32.totalorder %s180, %s183
    %p192 = scmp.eq.s32.totalorder %s17, 3
    %p193 = por %p191, %p192
    %p194 = scmp.ne.s32.totalorder %s183, %s184
    %p195 = scmp.eq.s32.totalorder %s17, 0
    %p196 = por %p194, %p195
    %p197 = scmp.ne.s32.totalorder %s183, %s184
    %p198 = scmp.eq.s32.totalorder %s18, 3
    %p199 = por %p197, %p198
    %p201 = scmp.ne.s32.totalorder %s184, %s200
    %p202 = scmp.eq.s32.totalorder %s18, 0
    %p203 = por %p201, %p202
    %p204 = scmp.le.s32.totalorder 1, %s12
    %p205 = scmp.lt.s32.totalorder %s12, 5
    %p206 = pnand %p204, %p205
    %p207 = pneg %p206
    // Predicated region
    $region9: #{tpu_custom_call.1} parent=5 // pred_check
      _
    $region10: #{tpu_custom_call.1} parent=5 // pred_check_branch
      %209 = sbr.rel (%p206) target = $region12
    $region11: #{tpu_custom_call.1} parent=5 // pred_region
      %s210 = ssub.s32 %s12, 1
      // Predicated region
      $region13: #{tpu_custom_call.1} parent=11 // pred_check
        %p211 = pneg %p105
      $region14: #{tpu_custom_call.1} parent=11 // pred_check_branch
        %213 = sbr.rel (%p211) target = $region16
      $region15: #{tpu_custom_call.1} parent=11 // pred_region
        _
      $region16: #{tpu_custom_call.1} parent=11 // pred_fallthru
        _
      // Predicated region
      $region17: #{tpu_custom_call.1} parent=11 // pred_check
        %p214 = pneg %p126
      $region18: #{tpu_custom_call.1} parent=11 // pred_check_branch
        %216 = sbr.rel (%p214) target = $region20
      $region19: #{tpu_custom_call.1} parent=11 // pred_region
        _
      $region20: #{tpu_custom_call.1} parent=11 // pred_fallthru
        _
      // Predicated region
      $region21: #{tpu_custom_call.1} parent=11 // pred_check
        %p217 = pneg %p147
      $region22: #{tpu_custom_call.1} parent=11 // pred_check_branch
        %219 = sbr.rel (%p217) target = $region24
      $region23: #{tpu_custom_call.1} parent=11 // pred_region
        _
      $region24: #{tpu_custom_call.1} parent=11 // pred_fallthru
        _
      // Predicated region
      $region25: #{tpu_custom_call.1} parent=11 // pred_check
        %p220 = pneg %p168
      $region26: #{tpu_custom_call.1} parent=11 // pred_check_branch
        %222 = sbr.rel (%p220) target = $region28
      $region27: #{tpu_custom_call.1} parent=11 // pred_region
        _
      $region28: #{tpu_custom_call.1} parent=11 // pred_fallthru
        _
    $region12: #{tpu_custom_call.1} parent=5 // pred_fallthru
      _
    %p223 = scmp.lt.s32.totalorder %s12, 4
    // Predicated region
    $region29: #{tpu_custom_call.1} parent=5 // pred_check
      %p224 = pneg %p223
    $region30: #{tpu_custom_call.1} parent=5 // pred_check_branch
      %226 = sbr.rel (%p224) target = $region32
    $region31: #{tpu_custom_call.1} parent=5 // pred_region
      // Predicated region
      $region33: #{tpu_custom_call.1} parent=31 // pred_check
        %p227 = pneg %p46
      $region34: #{tpu_custom_call.1} parent=31 // pred_check_branch
        %229 = sbr.rel (%p227) target = $region36
      $region35: #{tpu_custom_call.1} parent=31 // pred_region
        %s230 = smul.u32 8, %s20
        %s231 = ssub.s32 20, %s230
        %p232 = scmp.lt.s32.totalorder %s231, 8
        %s233 = scalar_select %p232, %s231, 8
        %s234 = smul.u32 128, %s233
        %s235 = smul.u32 %s234, 3
        %p236 = scmp.lt.s32.totalorder %s19, 1
        %s237 = scalar_select %p236, %s19, 1
        %p238 = scmp.lt.s32.totalorder %s230, 19
        %s239 = scalar_select %p238, %s230, 19
        %s240 = smul.addr %s239, 3
        %s241 = smul.addr %s237, 60
        %s242 = sadd.s32 %s240, %s241
        %s243 = smul.addr %s242, 8
        %s244 = scalar_lea.vmem %s0, %s243
        %s245 = smul.u32 8, %s20
        %s246 = ssub.s32 20, %s245
        %p247 = scmp.lt.s32.totalorder %s246, 8
        %s248 = scalar_select %p247, %s246, 8
        %s249 = smul.u32 128, %s248
        %s250 = smul.u32 %s249, 3
      $region36: #{tpu_custom_call.1} parent=31 // pred_fallthru
        _
      // Predicated region
      $region37: #{tpu_custom_call.1} parent=31 // pred_check
        %p251 = pneg %p78
      $region38: #{tpu_custom_call.1} parent=31 // pred_check_branch
        %253 = sbr.rel (%p251) target = $region40
      $region39: #{tpu_custom_call.1} parent=31 // pred_region
        %s254 = sadd.s32 %s20, 1
        %s255 = smul.u32 %s254, 2
        %s256 = smul.u32 4, %s255
        %p257 = scmp.lt.s32.totalorder %s19, 1
        %s258 = scalar_select %p257, %s19, 1
        %p259 = scmp.lt.s32.totalorder %s256, 19
        %s260 = scalar_select %p259, %s256, 19
        %s261 = smul.addr %s260, 3
        %s262 = smul.addr %s258, 60
        %s263 = sadd.s32 %s261, %s262
        %s264 = smul.addr %s263, 8
        %s265 = scalar_lea.vmem %s1, %s264
        %s266 = sadd.s32 %s20, 1
        %s267 = smul.u32 %s266, 2
        %s268 = smul.u32 4, %s267
      $region40: #{tpu_custom_call.1} parent=31 // pred_fallthru
        _
    $region32: #{tpu_custom_call.1} parent=5 // pred_fallthru
      _
    %p269 = scmp.le.s32.totalorder 1, %s12
    %p270 = scmp.lt.s32.totalorder %s12, 5
    %p271 = pnand %p269, %p270
    %p272 = pneg %p271
    // Predicated region
    $region41: #{tpu_custom_call.1} parent=5 // pred_check
      _
    $region42: #{tpu_custom_call.1} parent=5 // pred_check_branch
      %274 = sbr.rel (%p271) target = $region44
    $region43: #{tpu_custom_call.1} parent=5 // pred_region
      %s275 = ssub.s32 %s12, 1
      %s276 = smul.u32 8, %s22
      %s277 = ssub.s32 20, %s276
      %p278 = scmp.lt.s32.totalorder %s277, 8
      %s279 = scalar_select %p278, %s277, 8
      %s280 = smul.u32 128, %s279
      %s281 = smul.u32 %s280, 3
      %p282 = scmp.lt.s32.totalorder %s21, 1
      %s283 = scalar_select %p282, %s21, 1
      %p284 = scmp.lt.s32.totalorder %s276, 19
      %s285 = scalar_select %p284, %s276, 19
      %s286 = smul.addr %s285, 3
      %s287 = smul.addr %s283, 60
      %s288 = sadd.s32 %s286, %s287
      %s289 = smul.addr %s288, 8
      %s290 = scalar_lea.vmem %s0, %s289
      %p291 = pneg %p52
      %p292 = pneg %p49
      %s293 = sadd.s32 %s22, 1
      %s294 = smul.u32 %s293, 2
      %s295 = smul.u32 4, %s294
      %p296 = scmp.lt.s32.totalorder %s21, 1
      %s297 = scalar_select %p296, %s21, 1
      %p298 = scmp.lt.s32.totalorder %s295, 19
      %s299 = scalar_select %p298, %s295, 19
      %s300 = smul.addr %s299, 3
      %s301 = smul.addr %s297, 60
      %s302 = sadd.s32 %s300, %s301
      %s303 = smul.addr %s302, 8
      %s304 = scalar_lea.vmem %s1, %s303
      %p305 = pneg %p84
      %p306 = pneg %p81
      %p307 = pneg %p105
      %p308 = pneg %p102
      %p309 = pneg %p126
      %p310 = pneg %p123
      %p311 = pneg %p147
      %p312 = pneg %p144
      %p313 = pneg %p168
      %p314 = pneg %p165
      %p315 = pneg %p196
      %p316 = pneg %p193
      %s317 = smul.u32 8, %s22
      %p318 = scmp.lt.s32.totalorder %s21, 1
      %s319 = scalar_select %p318, %s21, 1
      %p320 = scmp.lt.s32.totalorder %s317, 15
      %s321 = scalar_select %p320, %s317, 15
      %s322 = smul.addr %s321, 2
      %s323 = smul.addr %s319, 32
      %s324 = sadd.s32 %s322, %s323
      %s325 = smul.addr %s324, 8
      %s326 = scalar_lea.vmem %s6, %s325
      %s327 = smul.u32 8, %s22
      %s328 = ssub.s32 20, %s327
      %p329 = scmp.lt.s32.totalorder %s328, 8
      %s330 = scalar_select %p329, %s328, 8
      %s331 = smul.u32 128, %s330
      %s332 = smul.u32 %s331, 3
      %p333 = scmp.lt.s32.totalorder %s21, 1
      %s334 = scalar_select %p333, %s21, 1
      %p335 = scmp.lt.s32.totalorder %s327, 19
      %s336 = scalar_select %p335, %s327, 19
      %s337 = smul.addr %s336, 3
      %s338 = smul.addr %s334, 60
      %s339 = sadd.s32 %s337, %s338
      %s340 = smul.addr %s339, 8
      %s341 = scalar_lea.vmem %s0, %s340
      %s342 = smul.u32 8, %s22
      %s343 = ssub.s32 20, %s342
      %p344 = scmp.lt.s32.totalorder %s343, 8
      %s345 = scalar_select %p344, %s343, 8
      %s346 = smul.u32 128, %s345
      %s347 = smul.u32 %s346, 3
      %s348 = sadd.s32 %s22, 1
      %s349 = smul.u32 %s348, 2
      %s350 = smul.u32 4, %s349
      %p351 = scmp.lt.s32.totalorder %s21, 1
      %s352 = scalar_select %p351, %s21, 1
      %p353 = scmp.lt.s32.totalorder %s350, 19
      %s354 = scalar_select %p353, %s350, 19
      %s355 = smul.addr %s354, 3
      %s356 = smul.addr %s352, 60
      %s357 = sadd.s32 %s355, %s356
      %s358 = smul.addr %s357, 8
      %s359 = scalar_lea.vmem %s1, %s358
      %s360 = sadd.s32 %s22, 1
      %s361 = smul.u32 %s360, 2
      %s362 = smul.u32 4, %s361
      %s363 = smul.u32 8, %s22
      %p364 = scmp.lt.s32.totalorder %s21, 1
      %s365 = scalar_select %p364, %s21, 1
      %p366 = scmp.lt.s32.totalorder %s363, 15
      %s367 = scalar_select %p366, %s363, 15
      %s368 = smul.addr %s367, 2
      %s369 = smul.addr %s365, 32
      %s370 = sadd.s32 %s368, %s369
      %s371 = smul.addr %s370, 8
      %s372 = scalar_lea.vmem %s6, %s371
      %s373 = smul.u32 8, %s22
      %v374 = vld [vmem:[%s341] sm:$0xff]
      %v375 = vld [vmem:[%s341 + $0x8] sm:$0xff]
      %v376 = vld [vmem:[%s341 + $0x10] sm:$0x3]
      %v377 = vld [vmem:[%s341 + $0x18] sm:$0xff]
      %v378 = vld [vmem:[%s341 + $0x20] sm:$0xff]
      %v379 = vld [vmem:[%s341 + $0x28] sm:$0x3]
      %v380 = vld [vmem:[%s341 + $0x30] sm:$0xff]
      %v381 = vld [vmem:[%s341 + $0x38] sm:$0xff]
      %v382 = vld [vmem:[%s341 + $0x40] sm:$0x3]
      %v383 = vld [vmem:[%s341 + $0x48] sm:$0xff]
      %v384 = vld [vmem:[%s341 + $0x50] sm:$0xff]
      %v385 = vld [vmem:[%s341 + $0x58] sm:$0x3]
      %v386 = vld [vmem:[%s341 + $0x60] sm:$0xff]
      %v387 = vld [vmem:[%s341 + $0x68] sm:$0xff]
      %v388 = vld [vmem:[%s341 + $0x70] sm:$0x3]
      %v389 = vld [vmem:[%s341 + $0x78] sm:$0xff]
      %v390 = vld [vmem:[%s341 + $0x80] sm:$0xff]
      %v391 = vld [vmem:[%s341 + $0x88] sm:$0x3]
      %v392 = vld [vmem:[%s341 + $0x90] sm:$0xff]
      %v393 = vld [vmem:[%s341 + $0x98] sm:$0xff]
      %v394 = vld [vmem:[%s341 + $0xa0] sm:$0x3]
      %v395 = vld [vmem:[%s341 + $0xa8] sm:$0xff]
      %v396 = vld [vmem:[%s341 + $0xb0] sm:$0xff]
      %v397 = vld [vmem:[%s341 + $0xb8] sm:$0x3]
      %v398 = vld [vmem:[%s359] sm:$0xff]
      %v399 = vld [vmem:[%s359 + $0x8] sm:$0xff]
      %v400 = vld [vmem:[%s359 + $0x10] sm:$0x3]
      %v401 = vld [vmem:[%s359 + $0x18] sm:$0xff]
      %v402 = vld [vmem:[%s359 + $0x20] sm:$0xff]
      %v403 = vld [vmem:[%s359 + $0x28] sm:$0x3]
      %v404 = vld [vmem:[%s359 + $0x30] sm:$0xff]
      %v405 = vld [vmem:[%s359 + $0x38] sm:$0xff]
      %v406 = vld [vmem:[%s359 + $0x40] sm:$0x3]
      %v407 = vld [vmem:[%s359 + $0x48] sm:$0xff]
      %v408 = vld [vmem:[%s359 + $0x50] sm:$0xff]
      %v409 = vld [vmem:[%s359 + $0x58] sm:$0x3]
      %vm440 = vcmask 1046528
      %v441 = vrot.slane %v374, 1
      %v442 = vrot.slane %v375, 1
      %v443 = vsel %vm440, %v441, %v442
      %v444 = vrot.slane %v376, 1
      %v445 = vsel %vm440, %v442, %v444
      %v446 = vrot.slane %v377, 1
      %v447 = vrot.slane %v378, 1
      %v448 = vsel %vm440, %v446, %v447
      %v449 = vrot.slane %v379, 1
      %v450 = vsel %vm440, %v447, %v449
      %v451 = vrot.slane %v380, 1
      %v452 = vrot.slane %v381, 1
      %v453 = vsel %vm440, %v451, %v452
      %v454 = vrot.slane %v382, 1
      %v455 = vsel %vm440, %v452, %v454
      %v456 = vrot.slane %v383, 1
      %v457 = vrot.slane %v384, 1
      %v458 = vsel %vm440, %v456, %v457
      %v459 = vrot.slane %v385, 1
      %v460 = vsel %vm440, %v457, %v459
      %v461 = vrot.slane %v386, 1
      %v462 = vrot.slane %v387, 1
      %v463 = vsel %vm440, %v461, %v462
      %v464 = vrot.slane %v388, 1
      %v465 = vsel %vm440, %v462, %v464
      %v466 = vrot.slane %v389, 1
      %v467 = vrot.slane %v390, 1
      %v468 = vsel %vm440, %v466, %v467
      %v469 = vrot.slane %v391, 1
      %v470 = vsel %vm440, %v467, %v469
      %v471 = vrot.slane %v392, 1
      %v472 = vrot.slane %v393, 1
      %v473 = vsel %vm440, %v471, %v472
      %v474 = vrot.slane %v394, 1
      %v475 = vsel %vm440, %v472, %v474
      %v476 = vrot.slane %v395, 1
      %v477 = vrot.slane %v396, 1
      %v478 = vsel %vm440, %v476, %v477
      %v479 = vrot.slane %v397, 1
      %v480 = vsel %vm440, %v477, %v479
      %v481 = vrot.slane %v398, 1
      %v482 = vrot.slane %v399, 1
      %v483 = vsel %vm440, %v481, %v482
      %v484 = vrot.slane %v400, 1
      %v485 = vsel %vm440, %v482, %v484
      %v486 = vrot.slane %v401, 1
      %v487 = vrot.slane %v402, 1
      %v488 = vsel %vm440, %v486, %v487
      %v489 = vrot.slane %v403, 1
      %v490 = vsel %vm440, %v487, %v489
      %491 = vrot.lane.b32.xlu0 %v443, 4
      %v492 = vpop.permute.xlu0 %491
      %493 = vrot.lane.b32.xlu0 %v445, 4
      %v494 = vpop.permute.xlu0 %493
      %495 = vrot.lane.b32.xlu0 %v448, 4
      %v496 = vpop.permute.xlu0 %495
      %497 = vrot.lane.b32.xlu0 %v450, 4
      %v498 = vpop.permute.xlu0 %497
      %499 = vrot.lane.b32.xlu0 %v453, 4
      %v500 = vpop.permute.xlu0 %499
      %501 = vrot.lane.b32.xlu0 %v455, 4
      %v502 = vpop.permute.xlu0 %501
      %503 = vrot.lane.b32.xlu0 %v458, 4
      %v504 = vpop.permute.xlu0 %503
      %505 = vrot.lane.b32.xlu0 %v460, 4
      %v506 = vpop.permute.xlu0 %505
      %507 = vrot.lane.b32.xlu0 %v463, 4
      %v508 = vpop.permute.xlu0 %507
      %509 = vrot.lane.b32.xlu0 %v465, 4
      %v510 = vpop.permute.xlu0 %509
      %511 = vrot.lane.b32.xlu0 %v468, 4
      %v512 = vpop.permute.xlu0 %511
      %513 = vrot.lane.b32.xlu0 %v470, 4
      %v514 = vpop.permute.xlu0 %513
      %515 = vrot.lane.b32.xlu0 %v473, 4
      %v516 = vpop.permute.xlu0 %515
      %517 = vrot.lane.b32.xlu0 %v475, 4
      %v518 = vpop.permute.xlu0 %517
      %519 = vrot.lane.b32.xlu0 %v478, 4
      %v520 = vpop.permute.xlu0 %519
      %521 = vrot.lane.b32.xlu0 %v480, 4
      %v522 = vpop.permute.xlu0 %521
      %523 = vrot.lane.b32.xlu0 %v483, 4
      %v524 = vpop.permute.xlu0 %523
      %525 = vrot.lane.b32.xlu0 %v485, 4
      %v526 = vpop.permute.xlu0 %525
      %527 = vrot.lane.b32.xlu0 %v488, 4
      %v528 = vpop.permute.xlu0 %527
      %529 = vrot.lane.b32.xlu0 %v490, 4
      %v530 = vpop.permute.xlu0 %529
      %vm551 = vcmask 1045504
      %v552 = vrot.slane %v374, 2
      %v553 = vrot.slane %v375, 2
      %v554 = vsel %vm551, %v552, %v553
      %v555 = vrot.slane %v376, 2
      %v556 = vsel %vm551, %v553, %v555
      %v557 = vrot.slane %v377, 2
      %v558 = vrot.slane %v378, 2
      %v559 = vsel %vm551, %v557, %v558
      %v560 = vrot.slane %v379, 2
      %v561 = vsel %vm551, %v558, %v560
      %v562 = vrot.slane %v380, 2
      %v563 = vrot.slane %v381, 2
      %v564 = vsel %vm551, %v562, %v563
      %v565 = vrot.slane %v382, 2
      %v566 = vsel %vm551, %v563, %v565
      %v567 = vrot.slane %v383, 2
      %v568 = vrot.slane %v384, 2
      %v569 = vsel %vm551, %v567, %v568
      %v570 = vrot.slane %v385, 2
      %v571 = vsel %vm551, %v568, %v570
      %v572 = vrot.slane %v386, 2
      %v573 = vrot.slane %v387, 2
      %v574 = vsel %vm551, %v572, %v573
      %v575 = vrot.slane %v388, 2
      %v576 = vsel %vm551, %v573, %v575
      %v577 = vrot.slane %v389, 2
      %v578 = vrot.slane %v390, 2
      %v579 = vsel %vm551, %v577, %v578
      %v580 = vrot.slane %v391, 2
      %v581 = vsel %vm551, %v578, %v580
      %v582 = vrot.slane %v392, 2
      %v583 = vrot.slane %v393, 2
      %v584 = vsel %vm551, %v582, %v583
      %v585 = vrot.slane %v394, 2
      %v586 = vsel %vm551, %v583, %v585
      %v587 = vrot.slane %v395, 2
      %v588 = vrot.slane %v396, 2
      %v589 = vsel %vm551, %v587, %v588
      %v590 = vrot.slane %v397, 2
      %v591 = vsel %vm551, %v588, %v590
      %v592 = vrot.slane %v398, 2
      %v593 = vrot.slane %v399, 2
      %v594 = vsel %vm551, %v592, %v593
      %v595 = vrot.slane %v400, 2
      %v596 = vsel %vm551, %v593, %v595
      %v597 = vrot.slane %v401, 2
      %v598 = vrot.slane %v402, 2
      %v599 = vsel %vm551, %v597, %v598
      %v600 = vrot.slane %v403, 2
      %v601 = vsel %vm551, %v598, %v600
      %602 = vrot.lane.b32.xlu0 %v554, 8
      %v603 = vpop.permute.xlu0 %602
      %604 = vrot.lane.b32.xlu0 %v556, 8
      %v605 = vpop.permute.xlu0 %604
      %606 = vrot.lane.b32.xlu0 %v559, 8
      %v607 = vpop.permute.xlu0 %606
      %608 = vrot.lane.b32.xlu0 %v561, 8
      %v609 = vpop.permute.xlu0 %608
      %610 = vrot.lane.b32.xlu0 %v564, 8
      %v611 = vpop.permute.xlu0 %610
      %612 = vrot.lane.b32.xlu0 %v566, 8
      %v613 = vpop.permute.xlu0 %612
      %614 = vrot.lane.b32.xlu0 %v569, 8
      %v615 = vpop.permute.xlu0 %614
      %616 = vrot.lane.b32.xlu0 %v571, 8
      %v617 = vpop.permute.xlu0 %616
      %618 = vrot.lane.b32.xlu0 %v574, 8
      %v619 = vpop.permute.xlu0 %618
      %620 = vrot.lane.b32.xlu0 %v576, 8
      %v621 = vpop.permute.xlu0 %620
      %622 = vrot.lane.b32.xlu0 %v579, 8
      %v623 = vpop.permute.xlu0 %622
      %624 = vrot.lane.b32.xlu0 %v581, 8
      %v625 = vpop.permute.xlu0 %624
      %626 = vrot.lane.b32.xlu0 %v584, 8
      %v627 = vpop.permute.xlu0 %626
      %628 = vrot.lane.b32.xlu0 %v586, 8
      %v629 = vpop.permute.xlu0 %628
      %630 = vrot.lane.b32.xlu0 %v589, 8
      %v631 = vpop.permute.xlu0 %630
      %632 = vrot.lane.b32.xlu0 %v591, 8
      %v633 = vpop.permute.xlu0 %632
      %634 = vrot.lane.b32.xlu0 %v594, 8
      %v635 = vpop.permute.xlu0 %634
      %636 = vrot.lane.b32.xlu0 %v596, 8
      %v637 = vpop.permute.xlu0 %636
      %638 = vrot.lane.b32.xlu0 %v599, 8
      %v639 = vpop.permute.xlu0 %638
      %640 = vrot.lane.b32.xlu0 %v601, 8
      %v641 = vpop.permute.xlu0 %640
      %vm662 = vcmask 31744
      %v663 = vsel %vm662, %v374, %v492
      %v664 = vsel %vm662, %v375, %v494
      %v665 = vsel %vm662, %v377, %v496
      %v666 = vsel %vm662, %v378, %v498
      %v667 = vsel %vm662, %v380, %v500
      %v668 = vsel %vm662, %v381, %v502
      %v669 = vsel %vm662, %v383, %v504
      %v670 = vsel %vm662, %v384, %v506
      %v671 = vsel %vm662, %v386, %v508
      %v672 = vsel %vm662, %v387, %v510
      %v673 = vsel %vm662, %v389, %v512
      %v674 = vsel %vm662, %v390, %v514
      %v675 = vsel %vm662, %v392, %v516
      %v676 = vsel %vm662, %v393, %v518
      %v677 = vsel %vm662, %v395, %v520
      %v678 = vsel %vm662, %v396, %v522
      %v679 = vsel %vm662, %v398, %v524
      %v680 = vsel %vm662, %v399, %v526
      %v681 = vsel %vm662, %v401, %v528
      %v682 = vsel %vm662, %v402, %v530
      %vm683 = vcmask 64512
      %v684 = vsel %vm683, %v663, %v603
      %v685 = vsel %vm683, %v664, %v605
      %v686 = vsel %vm683, %v665, %v607
      %v687 = vsel %vm683, %v666, %v609
      %v688 = vsel %vm683, %v667, %v611
      %v689 = vsel %vm683, %v668, %v613
      %v690 = vsel %vm683, %v669, %v615
      %v691 = vsel %vm683, %v670, %v617
      %v692 = vsel %vm683, %v671, %v619
      %v693 = vsel %vm683, %v672, %v621
      %v694 = vsel %vm683, %v673, %v623
      %v695 = vsel %vm683, %v674, %v625
      %v696 = vsel %vm683, %v675, %v627
      %v697 = vsel %vm683, %v676, %v629
      %v698 = vsel %vm683, %v677, %v631
      %v699 = vsel %vm683, %v678, %v633
      %v700 = vsel %vm683, %v679, %v635
      %v701 = vsel %vm683, %v680, %v637
      %v702 = vsel %vm683, %v681, %v639
      %v703 = vsel %vm683, %v682, %v641
      %v704 = vld [vmem:[%s2] sm:$0xff]
      %v705 = vld [vmem:[%s2 + $0x8] sm:$0xf]
      %vm706 = vcmask 97280
      %v708 = vsel %vm706, %v684, 0
      %v711 = vsel %vm706, %v685, 0
      %v714 = vsel %vm706, %v686, 0
      %v717 = vsel %vm706, %v687, 0
      %v720 = vsel %vm706, %v688, 0
      %v723 = vsel %vm706, %v689, 0
      %v726 = vsel %vm706, %v690, 0
      %v729 = vsel %vm706, %v691, 0
      %v732 = vsel %vm706, %v692, 0
      %v735 = vsel %vm706, %v693, 0
      %v738 = vsel %vm706, %v694, 0
      %v741 = vsel %vm706, %v695, 0
      %v744 = vsel %vm706, %v696, 0
      %v747 = vsel %vm706, %v697, 0
      %v750 = vsel %vm706, %v698, 0
      %v753 = vsel %vm706, %v699, 0
      %v756 = vsel %vm706, %v700, 0
      %v759 = vsel %vm706, %v701, 0
      %v762 = vsel %vm706, %v702, 0
      %v765 = vsel %vm706, %v703, 0
      %vm767 = vcmask 1043456
      %v769 = vsel %vm767, %v705, 0
      %771 = vmatprep.subr.mxu0 0.0
      %772 = vmatpush1.msra.mxu0 %v704
      %773 = vmatprep.subr.mxu0 0.0
      %774 = vmatpush1.msra.mxu0 %v769
      %775 = vmatprep.subr.mxu0 0.0
      %776 = vmatpush1.msra.mxu0 0.0
      %777 = vmatprep.subr.mxu0 0.0
      %778 = vmatpush1.msra.mxu0 0.0
      %779 = vmatprep.subr.mxu0 0.0
      %780 = vmatpush1.msra.mxu0 0.0
      %781 = vmatprep.subr.mxu0 0.0
      %782 = vmatpush1.msra.mxu0 0.0
      %783 = vmatprep.subr.mxu0 0.0
      %784 = vmatpush1.msra.mxu0 0.0
      %785 = vmatprep.subr.mxu0 0.0
      %786 = vmatpush1.msra.mxu0 0.0
      %787 = vmatprep.subr.mxu0 0.0
      %788 = vmatpush1.msra.mxu0 0.0
      %789 = vmatprep.subr.mxu0 0.0
      %790 = vmatpush1.msra.mxu0 0.0
      %791 = vmatprep.subr.mxu0 0.0
      %792 = vmatpush1.msra.mxu0 0.0
      %793 = vmatprep.subr.mxu0 0.0
      %794 = vmatpush1.msra.mxu0 0.0
      %795 = vmatprep.subr.mxu0 0.0
      %796 = vmatpush1.msra.mxu0 0.0
      %797 = vmatprep.subr.mxu0 0.0
      %798 = vmatpush1.msra.mxu0 0.0
      %799 = vmatprep.subr.mxu0 0.0
      %800 = vmatpush1.msra.mxu0 0.0
      %801 = vmatprep.subr.mxu0 0.0
      %802 = vmatpush1.msra.mxu0 0.0
      %803 = vmatprep.subr.mxu0 0.0
      %804 = vmatpush1.msra.mxu0 0.0
      %805 = vmatprep.subr.mxu0 0.0
      %806 = vmatpush1.msra.mxu0 0.0
      %807 = vmatprep.subr.mxu0 0.0
      %808 = vmatpush1.msra.mxu0 0.0
      %809 = vmatprep.subr.mxu0 0.0
      %810 = vmatpush1.msra.mxu0 0.0
      %811 = vmatprep.subr.mxu0 0.0
      %812 = vmatpush1.msra.mxu0 0.0
      %813 = vmatprep.subr.mxu0 0.0
      %814 = vmatpush1.msra.mxu0 0.0
      %815 = vmatprep.subr.mxu0 0.0
      %816 = vmatpush1.msra.mxu0 0.0
      %817 = vmatprep.subr.mxu0 0.0
      %818 = vmatpush1.msra.mxu0 0.0
      %819 = vmatprep.subr.mxu0 0.0
      %820 = vmatpush1.msra.mxu0 0.0
      %821 = vmatprep.subr.mxu0 0.0
      %822 = vmatpush1.msra.mxu0 0.0
      %823 = vmatprep.subr.mxu0 0.0
      %824 = vmatpush1.msra.mxu0 0.0
      %825 = vmatprep.subr.mxu0 0.0
      %826 = vmatpush1.msra.mxu0 0.0
      %827 = vmatprep.subr.mxu0 0.0
      %828 = vmatpush1.msra.mxu0 0.0
      %829 = vmatprep.subr.mxu0 0.0
      %830 = vmatpush1.msra.mxu0 0.0
      %831 = vmatprep.subr.mxu0 0.0
      %832 = vmatpush1.msra.mxu0 0.0
      %833 = vmatprep.subr.mxu0 0.0
      %834 = vmatpush1.msra.mxu0 0.0
      %835 = vmatprep.mubr.f32.mxu0 0.0
      %836 = vmatmul.mubr.f32.gmra.mrb[0].mxu0 %v708
      %v837 = vpop.f32.mrb[0].mxu0
      %v838 = vadd.f32 0.0, %v837
      %v839 = vpop.f32.mrb[0].mxu0
      %840 = vmatprep.mubr.f32.mxu0 0.0
      %841 = vmatmul.mubr.f32.gmra.mrb[0].mxu0 %v711
      %v842 = vpop.f32.mrb[0].mxu0
      %v843 = vadd.f32 0.0, %v842
      %v844 = vpop.f32.mrb[0].mxu0
      %845 = vmatprep.mubr.f32.mxu0 0.0
      %846 = vmatmul.mubr.f32.gmra.mrb[0].mxu0 %v714
      %v847 = vpop.f32.mrb[0].mxu0
      %v848 = vadd.f32 0.0, %v847
      %v849 = vpop.f32.mrb[0].mxu0
      %850 = vmatprep.mubr.f32.mxu0 0.0
      %851 = vmatmul.mubr.f32.gmra.mrb[0].mxu0 %v717
      %v852 = vpop.f32.mrb[0].mxu0
      %v853 = vadd.f32 0.0, %v852
      %v854 = vpop.f32.mrb[0].mxu0
      %855 = vmatprep.mubr.f32.mxu0 0.0
      %856 = vmatmul.mubr.f32.gmra.mrb[0].mxu0 %v720
      %v857 = vpop.f32.mrb[0].mxu0
      %v858 = vadd.f32 0.0, %v857
      %v859 = vpop.f32.mrb[0].mxu0
      %860 = vmatprep.mubr.f32.mxu0 0.0
      %861 = vmatmul.mubr.f32.gmra.mrb[0].mxu0 %v723
      %v862 = vpop.f32.mrb[0].mxu0
      %v863 = vadd.f32 0.0, %v862
      %v864 = vpop.f32.mrb[0].mxu0
      %865 = vmatprep.mubr.f32.mxu0 0.0
      %866 = vmatmul.mubr.f32.gmra.mrb[0].mxu0 %v726
      %v867 = vpop.f32.mrb[0].mxu0
      %v868 = vadd.f32 0.0, %v867
      %v869 = vpop.f32.mrb[0].mxu0
      %870 = vmatprep.mubr.f32.mxu0 0.0
      %871 = vmatmul.mubr.f32.gmra.mrb[0].mxu0 %v729
      %v872 = vpop.f32.mrb[0].mxu0
      %v873 = vadd.f32 0.0, %v872
      %v874 = vpop.f32.mrb[0].mxu0
      %875 = vmatprep.mubr.f32.mxu0 0.0
      %876 = vmatmul.mubr.f32.gmra.mrb[0].mxu0 %v732
      %v877 = vpop.f32.mrb[0].mxu0
      %v878 = vadd.f32 0.0, %v877
      %v879 = vpop.f32.mrb[0].mxu0
      %880 = vmatprep.mubr.f32.mxu0 0.0
      %881 = vmatmul.mubr.f32.gmra.mrb[0].mxu0 %v735
      %v882 = vpop.f32.mrb[0].mxu0
      %v883 = vadd.f32 0.0, %v882
      %v884 = vpop.f32.mrb[0].mxu0
      %885 = vmatprep.mubr.f32.mxu0 0.0
      %886 = vmatmul.mubr.f32.gmra.mrb[0].mxu0 %v738
      %v887 = vpop.f32.mrb[0].mxu0
      %v888 = vadd.f32 0.0, %v887
      %v889 = vpop.f32.mrb[0].mxu0
      %890 = vmatprep.mubr.f32.mxu0 0.0
      %891 = vmatmul.mubr.f32.gmra.mrb[0].mxu0 %v741
      %v892 = vpop.f32.mrb[0].mxu0
      %v893 = vadd.f32 0.0, %v892
      %v894 = vpop.f32.mrb[0].mxu0
      %895 = vmatprep.mubr.f32.mxu0 0.0
      %896 = vmatmul.mubr.f32.gmra.mrb[0].mxu0 %v744
      %v897 = vpop.f32.mrb[0].mxu0
      %v898 = vadd.f32 0.0, %v897
      %v899 = vpop.f32.mrb[0].mxu0
      %900 = vmatprep.mubr.f32.mxu0 0.0
      %901 = vmatmul.mubr.f32.gmra.mrb[0].mxu0 %v747
      %v902 = vpop.f32.mrb[0].mxu0
      %v903 = vadd.f32 0.0, %v902
      %v904 = vpop.f32.mrb[0].mxu0
      %905 = vmatprep.mubr.f32.mxu0 0.0
      %906 = vmatmul.mubr.f32.gmra.mrb[0].mxu0 %v750
      %v907 = vpop.f32.mrb[0].mxu0
      %v908 = vadd.f32 0.0, %v907
      %v909 = vpop.f32.mrb[0].mxu0
      %910 = vmatprep.mubr.f32.mxu0 0.0
      %911 = vmatmul.mubr.f32.gmra.mrb[0].mxu0 %v753
      %v912 = vpop.f32.mrb[0].mxu0
      %v913 = vadd.f32 0.0, %v912
      %v914 = vpop.f32.mrb[0].mxu0
      %915 = vmatprep.mubr.f32.mxu0 0.0
      %916 = vmatmul.mubr.f32.gmra.mrb[0].mxu0 %v756
      %v917 = vpop.f32.mrb[0].mxu0
      %v918 = vadd.f32 0.0, %v917
      %v919 = vpop.f32.mrb[0].mxu0
      %920 = vmatprep.mubr.f32.mxu0 0.0
      %921 = vmatmul.mubr.f32.gmra.mrb[0].mxu0 %v759
      %v922 = vpop.f32.mrb[0].mxu0
      %v923 = vadd.f32 0.0, %v922
      %v924 = vpop.f32.mrb[0].mxu0
      %925 = vmatprep.mubr.f32.mxu0 0.0
      %926 = vmatmul.mubr.f32.gmra.mrb[0].mxu0 %v762
      %v927 = vpop.f32.mrb[0].mxu0
      %v928 = vadd.f32 0.0, %v927
      %v929 = vpop.f32.mrb[0].mxu0
      %930 = vmatprep.mubr.f32.mxu0 0.0
      %931 = vmatmul.mubr.f32.gmra.mrb[0].mxu0 %v765
      %v932 = vpop.f32.mrb[0].mxu0
      %v933 = vadd.f32 0.0, %v932
      %v934 = vpop.f32.mrb[0].mxu0
      %935 = vdwg.mxu0
      %936 = vst.msk [vmem:[#allocation3] sm:$0xff] %vm683, %v838
      %937 = vst.msk [vmem:[#allocation3 + $0x8] sm:$0xff] %vm683, %v843
      %938 = vst.msk [vmem:[#allocation3 + $0x10] sm:$0xff] %vm683, %v848
      %939 = vst.msk [vmem:[#allocation3 + $0x18] sm:$0xff] %vm683, %v853
      %940 = vst.msk [vmem:[#allocation3 + $0x20] sm:$0xff] %vm683, %v858
      %941 = vst.msk [vmem:[#allocation3 + $0x28] sm:$0xff] %vm683, %v863
      %942 = vst.msk [vmem:[#allocation3 + $0x30] sm:$0xff] %vm683, %v868
      %943 = vst.msk [vmem:[#allocation3 + $0x38] sm:$0xff] %vm683, %v873
      %944 = vst.msk [vmem:[#allocation3 + $0x40] sm:$0xff] %vm683, %v878
      %945 = vst.msk [vmem:[#allocation3 + $0x48] sm:$0xff] %vm683, %v883
      %946 = vst.msk [vmem:[#allocation3 + $0x50] sm:$0xff] %vm683, %v888
      %947 = vst.msk [vmem:[#allocation3 + $0x58] sm:$0xff] %vm683, %v893
      %948 = vst.msk [vmem:[#allocation3 + $0x60] sm:$0xff] %vm683, %v898
      %949 = vst.msk [vmem:[#allocation3 + $0x68] sm:$0xff] %vm683, %v903
      %950 = vst.msk [vmem:[#allocation3 + $0x70] sm:$0xff] %vm683, %v908
      %951 = vst.msk [vmem:[#allocation3 + $0x78] sm:$0xff] %vm683, %v913
      %952 = vst.msk [vmem:[#allocation3 + $0x80] sm:$0xff] %vm683, %v918
      %953 = vst.msk [vmem:[#allocation3 + $0x88] sm:$0xff] %vm683, %v923
      %954 = vst.msk [vmem:[#allocation3 + $0x90] sm:$0xff] %vm683, %v928
      %955 = vst.msk [vmem:[#allocation3 + $0x98] sm:$0xff] %vm683, %v933
      %v959 = vrot.slane %v404, 1
      %v960 = vrot.slane %v405, 1
      %v961 = vsel %vm440, %v959, %v960
      %v962 = vrot.slane %v406, 1
      %v963 = vsel %vm440, %v960, %v962
      %964 = vrot.lane.b32.xlu0 %v961, 4
      %v965 = vpop.permute.xlu0 %964
      %966 = vrot.lane.b32.xlu0 %v963, 4
      %v967 = vpop.permute.xlu0 %966
      %v970 = vrot.slane %v404, 2
      %v971 = vrot.slane %v405, 2
      %v972 = vsel %vm551, %v970, %v971
      %v973 = vrot.slane %v406, 2
      %v974 = vsel %vm551, %v971, %v973
      %975 = vrot.lane.b32.xlu0 %v972, 8
      %v976 = vpop.permute.xlu0 %975
      %977 = vrot.lane.b32.xlu0 %v974, 8
      %v978 = vpop.permute.xlu0 %977
      %v981 = vsel %vm662, %v404, %v965
      %v982 = vsel %vm662, %v405, %v967
      %v983 = vsel %vm683, %v981, %v976
      %v984 = vsel %vm683, %v982, %v978
      %s985 = scalar_lea.vmem %s2, 16
      %v986 = vld [vmem:[%s985] sm:$0xff]
      %v987 = vld [vmem:[%s985 + $0x8] sm:$0xf]
      %v989 = vsel %vm706, %v983, 0
      %v992 = vsel %vm706, %v984, 0
      %v995 = vsel %vm767, %v987, 0
      %997 = vmatprep.subr.mxu0 0.0
      %998 = vmatpush1.msra.mxu0 %v986
      %999 = vmatprep.subr.mxu0 0.0
      %1000 = vmatpush1.msra.mxu0 %v995
      %1001 = vmatprep.subr.mxu0 0.0
      %1002 = vmatpush1.msra.mxu0 0.0
      %1003 = vmatprep.subr.mxu0 0.0
      %1004 = vmatpush1.msra.mxu0 0.0
      %1005 = vmatprep.subr.mxu0 0.0
      %1006 = vmatpush1.msra.mxu0 0.0
      %1007 = vmatprep.subr.mxu0 0.0
      %1008 = vmatpush1.msra.mxu0 0.0
      %1009 = vmatprep.subr.mxu0 0.0
      %1010 = vmatpush1.msra.mxu0 0.0
      %1011 = vmatprep.subr.mxu0 0.0
      %1012 = vmatpush1.msra.mxu0 0.0
      %1013 = vmatprep.subr.mxu0 0.0
      %1014 = vmatpush1.msra.mxu0 0.0
      %1015 = vmatprep.subr.mxu0 0.0
      %1016 = vmatpush1.msra.mxu0 0.0
      %1017 = vmatprep.subr.mxu0 0.0
      %1018 = vmatpush1.msra.mxu0 0.0
      %1019 = vmatprep.subr.mxu0 0.0
      %1020 = vmatpush1.msra.mxu0 0.0
      %1021 = vmatprep.subr.mxu0 0.0
      %1022 = vmatpush1.msra.mxu0 0.0
      %1023 = vmatprep.subr.mxu0 0.0
      %1024 = vmatpush1.msra.mxu0 0.0
      %1025 = vmatprep.subr.mxu0 0.0
      %1026 = vmatpush1.msra.mxu0 0.0
      %1027 = vmatprep.subr.mxu0 0.0
      %1028 = vmatpush1.msra.mxu0 0.0
      %1029 = vmatprep.subr.mxu0 0.0
      %1030 = vmatpush1.msra.mxu0 0.0
      %1031 = vmatprep.subr.mxu0 0.0
      %1032 = vmatpush1.msra.mxu0 0.0
      %1033 = vmatprep.subr.mxu0 0.0
      %1034 = vmatpush1.msra.mxu0 0.0
      %1035 = vmatprep.subr.mxu0 0.0
      %1036 = vmatpush1.msra.mxu0 0.0
      %1037 = vmatprep.subr.mxu0 0.0
      %1038 = vmatpush1.msra.mxu0 0.0
      %1039 = vmatprep.subr.mxu0 0.0
      %1040 = vmatpush1.msra.mxu0 0.0
      %1041 = vmatprep.subr.mxu0 0.0
      %1042 = vmatpush1.msra.mxu0 0.0
      %1043 = vmatprep.subr.mxu0 0.0
      %1044 = vmatpush1.msra.mxu0 0.0
      %1045 = vmatprep.subr.mxu0 0.0
      %1046 = vmatpush1.msra.mxu0 0.0
      %1047 = vmatprep.subr.mxu0 0.0
      %1048 = vmatpush1.msra.mxu0 0.0
      %1049 = vmatprep.subr.mxu0 0.0
      %1050 = vmatpush1.msra.mxu0 0.0
      %1051 = vmatprep.subr.mxu0 0.0
      %1052 = vmatpush1.msra.mxu0 0.0
      %1053 = vmatprep.subr.mxu0 0.0
      %1054 = vmatpush1.msra.mxu0 0.0
      %1055 = vmatprep.subr.mxu0 0.0
      %1056 = vmatpush1.msra.mxu0 0.0
      %1057 = vmatprep.subr.mxu0 0.0
      %1058 = vmatpush1.msra.mxu0 0.0
      %1059 = vmatprep.subr.mxu0 0.0
      %1060 = vmatpush1.msra.mxu0 0.0
      %1061 = vmatprep.mubr.f32.mxu0 0.0
      %1062 = vmatmul.mubr.f32.gmra.mrb[0].mxu0 %v714
      %v1063 = vpop.f32.mrb[0].mxu0
      %v1064 = vadd.f32 0.0, %v1063
      %v1065 = vpop.f32.mrb[0].mxu0
      %1066 = vmatprep.mubr.f32.mxu0 0.0
      %1067 = vmatmul.mubr.f32.gmra.mrb[0].mxu0 %v717
      %v1068 = vpop.f32.mrb[0].mxu0
      %v1069 = vadd.f32 0.0, %v1068
      %v1070 = vpop.f32.mrb[0].mxu0
      %1071 = vmatprep.mubr.f32.mxu0 0.0
      %1072 = vmatmul.mubr.f32.gmra.mrb[0].mxu0 %v720
      %v1073 = vpop.f32.mrb[0].mxu0
      %v1074 = vadd.f32 0.0, %v1073
      %v1075 = vpop.f32.mrb[0].mxu0
      %1076 = vmatprep.mubr.f32.mxu0 0.0
      %1077 = vmatmul.mubr.f32.gmra.mrb[0].mxu0 %v723
      %v1078 = vpop.f32.mrb[0].mxu0
      %v1079 = vadd.f32 0.0, %v1078
      %v1080 = vpop.f32.mrb[0].mxu0
      %1081 = vmatprep.mubr.f32.mxu0 0.0
      %1082 = vmatmul.mubr.f32.gmra.mrb[0].mxu0 %v726
      %v1083 = vpop.f32.mrb[0].mxu0
      %v1084 = vadd.f32 0.0, %v1083
      %v1085 = vpop.f32.mrb[0].mxu0
      %1086 = vmatprep.mubr.f32.mxu0 0.0
      %1087 = vmatmul.mubr.f32.gmra.mrb[0].mxu0 %v729
      %v1088 = vpop.f32.mrb[0].mxu0
      %v1089 = vadd.f32 0.0, %v1088
      %v1090 = vpop.f32.mrb[0].mxu0
      %1091 = vmatprep.mubr.f32.mxu0 0.0
      %1092 = vmatmul.mubr.f32.gmra.mrb[0].mxu0 %v732
      %v1093 = vpop.f32.mrb[0].mxu0
      %v1094 = vadd.f32 0.0, %v1093
      %v1095 = vpop.f32.mrb[0].mxu0
      %1096 = vmatprep.mubr.f32.mxu0 0.0
      %1097 = vmatmul.mubr.f32.gmra.mrb[0].mxu0 %v735
      %v1098 = vpop.f32.mrb[0].mxu0
      %v1099 = vadd.f32 0.0, %v1098
      %v1100 = vpop.f32.mrb[0].mxu0
      %1101 = vmatprep.mubr.f32.mxu0 0.0
      %1102 = vmatmul.mubr.f32.gmra.mrb[0].mxu0 %v738
      %v1103 = vpop.f32.mrb[0].mxu0
      %v1104 = vadd.f32 0.0, %v1103
      %v1105 = vpop.f32.mrb[0].mxu0
      %1106 = vmatprep.mubr.f32.mxu0 0.0
      %1107 = vmatmul.mubr.f32.gmra.mrb[0].mxu0 %v741
      %v1108 = vpop.f32.mrb[0].mxu0
      %v1109 = vadd.f32 0.0, %v1108
      %v1110 = vpop.f32.mrb[0].mxu0
      %1111 = vmatprep.mubr.f32.mxu0 0.0
      %1112 = vmatmul.mubr.f32.gmra.mrb[0].mxu0 %v744
      %v1113 = vpop.f32.mrb[0].mxu0
      %v1114 = vadd.f32 0.0, %v1113
      %v1115 = vpop.f32.mrb[0].mxu0
      %1116 = vmatprep.mubr.f32.mxu0 0.0
      %1117 = vmatmul.mubr.f32.gmra.mrb[0].mxu0 %v747
      %v1118 = vpop.f32.mrb[0].mxu0
      %v1119 = vadd.f32 0.0, %v1118
      %v1120 = vpop.f32.mrb[0].mxu0
      %1121 = vmatprep.mubr.f32.mxu0 0.0
      %1122 = vmatmul.mubr.f32.gmra.mrb[0].mxu0 %v750
      %v1123 = vpop.f32.mrb[0].mxu0
      %v1124 = vadd.f32 0.0, %v1123
      %v1125 = vpop.f32.mrb[0].mxu0
      %1126 = vmatprep.mubr.f32.mxu0 0.0
      %1127 = vmatmul.mubr.f32.gmra.mrb[0].mxu0 %v753
      %v1128 = vpop.f32.mrb[0].mxu0
      %v1129 = vadd.f32 0.0, %v1128
      %v1130 = vpop.f32.mrb[0].mxu0
      %1131 = vmatprep.mubr.f32.mxu0 0.0
      %1132 = vmatmul.mubr.f32.gmra.mrb[0].mxu0 %v756
      %v1133 = vpop.f32.mrb[0].mxu0
      %v1134 = vadd.f32 0.0, %v1133
      %v1135 = vpop.f32.mrb[0].mxu0
      %1136 = vmatprep.mubr.f32.mxu0 0.0
      %1137 = vmatmul.mubr.f32.gmra.mrb[0].mxu0 %v759
      %v1138 = vpop.f32.mrb[0].mxu0
      %v1139 = vadd.f32 0.0, %v1138
      %v1140 = vpop.f32.mrb[0].mxu0
      %1141 = vmatprep.mubr.f32.mxu0 0.0
      %1142 = vmatmul.mubr.f32.gmra.mrb[0].mxu0 %v762
      %v1143 = vpop.f32.mrb[0].mxu0
      %v1144 = vadd.f32 0.0, %v1143
      %v1145 = vpop.f32.mrb[0].mxu0
      %1146 = vmatprep.mubr.f32.mxu0 0.0
      %1147 = vmatmul.mubr.f32.gmra.mrb[0].mxu0 %v765
      %v1148 = vpop.f32.mrb[0].mxu0
      %v1149 = vadd.f32 0.0, %v1148
      %v1150 = vpop.f32.mrb[0].mxu0
      %1151 = vmatprep.mubr.f32.mxu0 0.0
      %1152 = vmatmul.mubr.f32.gmra.mrb[0].mxu0 %v989
      %v1153 = vpop.f32.mrb[0].mxu0
      %v1154 = vadd.f32 0.0, %v1153
      %v1155 = vpop.f32.mrb[0].mxu0
      %1156 = vmatprep.mubr.f32.mxu0 0.0
      %1157 = vmatmul.mubr.f32.gmra.mrb[0].mxu0 %v992
      %v1158 = vpop.f32.mrb[0].mxu0
      %v1159 = vadd.f32 0.0, %v1158
      %v1160 = vpop.f32.mrb[0].mxu0
      %1161 = vdwg.mxu0
      %v1162 = vld [vmem:[#allocation3] sm:$0xff]
      %v1163 = vld [vmem:[#allocation3 + $0x8] sm:$0xff]
      %v1164 = vld [vmem:[#allocation3 + $0x10] sm:$0xff]
      %v1165 = vld [vmem:[#allocation3 + $0x18] sm:$0xff]
      %v1166 = vld [vmem:[#allocation3 + $0x20] sm:$0xff]
      %v1167 = vld [vmem:[#allocation3 + $0x28] sm:$0xff]
      %v1168 = vld [vmem:[#allocation3 + $0x30] sm:$0xff]
      %v1169 = vld [vmem:[#allocation3 + $0x38] sm:$0xff]
      %v1170 = vld [vmem:[#allocation3 + $0x40] sm:$0xff]
      %v1171 = vld [vmem:[#allocation3 + $0x48] sm:$0xff]
      %v1172 = vld [vmem:[#allocation3 + $0x50] sm:$0xff]
      %v1173 = vld [vmem:[#allocation3 + $0x58] sm:$0xff]
      %v1174 = vld [vmem:[#allocation3 + $0x60] sm:$0xff]
      %v1175 = vld [vmem:[#allocation3 + $0x68] sm:$0xff]
      %v1176 = vld [vmem:[#allocation3 + $0x70] sm:$0xff]
      %v1177 = vld [vmem:[#allocation3 + $0x78] sm:$0xff]
      %v1178 = vld [vmem:[#allocation3 + $0x80] sm:$0xff]
      %v1179 = vld [vmem:[#allocation3 + $0x88] sm:$0xff]
      %v1180 = vld [vmem:[#allocation3 + $0x90] sm:$0xff]
      %v1181 = vld [vmem:[#allocation3 + $0x98] sm:$0xff]
      %v1182 = vadd.f32 %v1162, %v1064
      %v1183 = vadd.f32 %v1163, %v1069
      %v1184 = vadd.f32 %v1164, %v1074
      %v1185 = vadd.f32 %v1165, %v1079
      %v1186 = vadd.f32 %v1166, %v1084
      %v1187 = vadd.f32 %v1167, %v1089
      %v1188 = vadd.f32 %v1168, %v1094
      %v1189 = vadd.f32 %v1169, %v1099
      %v1190 = vadd.f32 %v1170, %v1104
      %v1191 = vadd.f32 %v1171, %v1109
      %v1192 = vadd.f32 %v1172, %v1114
      %v1193 = vadd.f32 %v1173, %v1119
      %v1194 = vadd.f32 %v1174, %v1124
      %v1195 = vadd.f32 %v1175, %v1129
      %v1196 = vadd.f32 %v1176, %v1134
      %v1197 = vadd.f32 %v1177, %v1139
      %v1198 = vadd.f32 %v1178, %v1144
      %v1199 = vadd.f32 %v1179, %v1149
      %v1200 = vadd.f32 %v1180, %v1154
      %v1201 = vadd.f32 %v1181, %v1159
      %1202 = vst.msk [vmem:[#allocation3] sm:$0xff] %vm683, %v1182
      %1203 = vst.msk [vmem:[#allocation3 + $0x8] sm:$0xff] %vm683, %v1183
      %1204 = vst.msk [vmem:[#allocation3 + $0x10] sm:$0xff] %vm683, %v1184
      %1205 = vst.msk [vmem:[#allocation3 + $0x18] sm:$0xff] %vm683, %v1185
      %1206 = vst.msk [vmem:[#allocation3 + $0x20] sm:$0xff] %vm683, %v1186
      %1207 = vst.msk [vmem:[#allocation3 + $0x28] sm:$0xff] %vm683, %v1187
      %1208 = vst.msk [vmem:[#allocation3 + $0x30] sm:$0xff] %vm683, %v1188
      %1209 = vst.msk [vmem:[#allocation3 + $0x38] sm:$0xff] %vm683, %v1189
      %1210 = vst.msk [vmem:[#allocation3 + $0x40] sm:$0xff] %vm683, %v1190
      %1211 = vst.msk [vmem:[#allocation3 + $0x48] sm:$0xff] %vm683, %v1191
      %1212 = vst.msk [vmem:[#allocation3 + $0x50] sm:$0xff] %vm683, %v1192
      %1213 = vst.msk [vmem:[#allocation3 + $0x58] sm:$0xff] %vm683, %v1193
      %1214 = vst.msk [vmem:[#allocation3 + $0x60] sm:$0xff] %vm683, %v1194
      %1215 = vst.msk [vmem:[#allocation3 + $0x68] sm:$0xff] %vm683, %v1195
      %1216 = vst.msk [vmem:[#allocation3 + $0x70] sm:$0xff] %vm683, %v1196
      %1217 = vst.msk [vmem:[#allocation3 + $0x78] sm:$0xff] %vm683, %v1197
      %1218 = vst.msk [vmem:[#allocation3 + $0x80] sm:$0xff] %vm683, %v1198
      %1219 = vst.msk [vmem:[#allocation3 + $0x88] sm:$0xff] %vm683, %v1199
      %1220 = vst.msk [vmem:[#allocation3 + $0x90] sm:$0xff] %vm683, %v1200
      %1221 = vst.msk [vmem:[#allocation3 + $0x98] sm:$0xff] %vm683, %v1201
      %v1225 = vrot.slane %v407, 1
      %v1226 = vrot.slane %v408, 1
      %v1227 = vsel %vm440, %v1225, %v1226
      %v1228 = vrot.slane %v409, 1
      %v1229 = vsel %vm440, %v1226, %v1228
      %1230 = vrot.lane.b32.xlu0 %v1227, 4
      %v1231 = vpop.permute.xlu0 %1230
      %1232 = vrot.lane.b32.xlu0 %v1229, 4
      %v1233 = vpop.permute.xlu0 %1232
      %v1236 = vrot.slane %v407, 2
      %v1237 = vrot.slane %v408, 2
      %v1238 = vsel %vm551, %v1236, %v1237
      %v1239 = vrot.slane %v409, 2
      %v1240 = vsel %vm551, %v1237, %v1239
      %1241 = vrot.lane.b32.xlu0 %v1238, 8
      %v1242 = vpop.permute.xlu0 %1241
      %1243 = vrot.lane.b32.xlu0 %v1240, 8
      %v1244 = vpop.permute.xlu0 %1243
      %v1247 = vsel %vm662, %v407, %v1231
      %v1248 = vsel %vm662, %v408, %v1233
      %v1249 = vsel %vm683, %v1247, %v1242
      %v1250 = vsel %vm683, %v1248, %v1244
      %s1251 = scalar_lea.vmem %s2, 32
      %v1252 = vld [vmem:[%s1251] sm:$0xff]
      %v1253 = vld [vmem:[%s1251 + $0x8] sm:$0xf]
      %v1255 = vsel %vm706, %v1249, 0
      %v1258 = vsel %vm706, %v1250, 0
      %v1261 = vsel %vm767, %v1253, 0
      %1263 = vmatprep.subr.mxu0 0.0
      %1264 = vmatpush1.msra.mxu0 %v1252
      %1265 = vmatprep.subr.mxu0 0.0
      %1266 = vmatpush1.msra.mxu0 %v1261
      %1267 = vmatprep.subr.mxu0 0.0
      %1268 = vmatpush1.msra.mxu0 0.0
      %1269 = vmatprep.subr.mxu0 0.0
      %1270 = vmatpush1.msra.mxu0 0.0
      %1271 = vmatprep.subr.mxu0 0.0
      %1272 = vmatpush1.msra.mxu0 0.0
      %1273 = vmatprep.subr.mxu0 0.0
      %1274 = vmatpush1.msra.mxu0 0.0
      %1275 = vmatprep.subr.mxu0 0.0
      %1276 = vmatpush1.msra.mxu0 0.0
      %1277 = vmatprep.subr.mxu0 0.0
      %1278 = vmatpush1.msra.mxu0 0.0
      %1279 = vmatprep.subr.mxu0 0.0
      %1280 = vmatpush1.msra.mxu0 0.0
      %1281 = vmatprep.subr.mxu0 0.0
      %1282 = vmatpush1.msra.mxu0 0.0
      %1283 = vmatprep.subr.mxu0 0.0
      %1284 = vmatpush1.msra.mxu0 0.0
      %1285 = vmatprep.subr.mxu0 0.0
      %1286 = vmatpush1.msra.mxu0 0.0
      %1287 = vmatprep.subr.mxu0 0.0
      %1288 = vmatpush1.msra.mxu0 0.0
      %1289 = vmatprep.subr.mxu0 0.0
      %1290 = vmatpush1.msra.mxu0 0.0
      %1291 = vmatprep.subr.mxu0 0.0
      %1292 = vmatpush1.msra.mxu0 0.0
      %1293 = vmatprep.subr.mxu0 0.0
      %1294 = vmatpush1.msra.mxu0 0.0
      %1295 = vmatprep.subr.mxu0 0.0
      %1296 = vmatpush1.msra.mxu0 0.0
      %1297 = vmatprep.subr.mxu0 0.0
      %1298 = vmatpush1.msra.mxu0 0.0
      %1299 = vmatprep.subr.mxu0 0.0
      %1300 = vmatpush1.msra.mxu0 0.0
      %1301 = vmatprep.subr.mxu0 0.0
      %1302 = vmatpush1.msra.mxu0 0.0
      %1303 = vmatprep.subr.mxu0 0.0
      %1304 = vmatpush1.msra.mxu0 0.0
      %1305 = vmatprep.subr.mxu0 0.0
      %1306 = vmatpush1.msra.mxu0 0.0
      %1307 = vmatprep.subr.mxu0 0.0
      %1308 = vmatpush1.msra.mxu0 0.0
      %1309 = vmatprep.subr.mxu0 0.0
      %1310 = vmatpush1.msra.mxu0 0.0
      %1311 = vmatprep.subr.mxu0 0.0
      %1312 = vmatpush1.msra.mxu0 0.0
      %1313 = vmatprep.subr.mxu0 0.0
      %1314 = vmatpush1.msra.mxu0 0.0
      %1315 = vmatprep.subr.mxu0 0.0
      %1316 = vmatpush1.msra.mxu0 0.0
      %1317 = vmatprep.subr.mxu0 0.0
      %1318 = vmatpush1.msra.mxu0 0.0
      %1319 = vmatprep.subr.mxu0 0.0
      %1320 = vmatpush1.msra.mxu0 0.0
      %1321 = vmatprep.subr.mxu0 0.0
      %1322 = vmatpush1.msra.mxu0 0.0
      %1323 = vmatprep.subr.mxu0 0.0
      %1324 = vmatpush1.msra.mxu0 0.0
      %1325 = vmatprep.subr.mxu0 0.0
      %1326 = vmatpush1.msra.mxu0 0.0
      %1327 = vmatprep.mubr.f32.mxu0 0.0
      %1328 = vmatmul.mubr.f32.gmra.mrb[0].mxu0 %v720
      %v1329 = vpop.f32.mrb[0].mxu0
      %v1330 = vadd.f32 0.0, %v1329
      %v1331 = vpop.f32.mrb[0].mxu0
      %1332 = vmatprep.mubr.f32.mxu0 0.0
      %1333 = vmatmul.mubr.f32.gmra.mrb[0].mxu0 %v723
      %v1334 = vpop.f32.mrb[0].mxu0
      %v1335 = vadd.f32 0.0, %v1334
      %v1336 = vpop.f32.mrb[0].mxu0
      %1337 = vmatprep.mubr.f32.mxu0 0.0
      %1338 = vmatmul.mubr.f32.gmra.mrb[0].mxu0 %v726
      %v1339 = vpop.f32.mrb[0].mxu0
      %v1340 = vadd.f32 0.0, %v1339
      %v1341 = vpop.f32.mrb[0].mxu0
      %1342 = vmatprep.mubr.f32.mxu0 0.0
      %1343 = vmatmul.mubr.f32.gmra.mrb[0].mxu0 %v729
      %v1344 = vpop.f32.mrb[0].mxu0
      %v1345 = vadd.f32 0.0, %v1344
      %v1346 = vpop.f32.mrb[0].mxu0
      %1347 = vmatprep.mubr.f32.mxu0 0.0
      %1348 = vmatmul.mubr.f32.gmra.mrb[0].mxu0 %v732
      %v1349 = vpop.f32.mrb[0].mxu0
      %v1350 = vadd.f32 0.0, %v1349
      %v1351 = vpop.f32.mrb[0].mxu0
      %1352 = vmatprep.mubr.f32.mxu0 0.0
      %1353 = vmatmul.mubr.f32.gmra.mrb[0].mxu0 %v735
      %v1354 = vpop.f32.mrb[0].mxu0
      %v1355 = vadd.f32 0.0, %v1354
      %v1356 = vpop.f32.mrb[0].mxu0
      %1357 = vmatprep.mubr.f32.mxu0 0.0
      %1358 = vmatmul.mubr.f32.gmra.mrb[0].mxu0 %v738
      %v1359 = vpop.f32.mrb[0].mxu0
      %v1360 = vadd.f32 0.0, %v1359
      %v1361 = vpop.f32.mrb[0].mxu0
      %1362 = vmatprep.mubr.f32.mxu0 0.0
      %1363 = vmatmul.mubr.f32.gmra.mrb[0].mxu0 %v741
      %v1364 = vpop.f32.mrb[0].mxu0
      %v1365 = vadd.f32 0.0, %v1364
      %v1366 = vpop.f32.mrb[0].mxu0
      %1367 = vmatprep.mubr.f32.mxu0 0.0
      %1368 = vmatmul.mubr.f32.gmra.mrb[0].mxu0 %v744
      %v1369 = vpop.f32.mrb[0].mxu0
      %v1370 = vadd.f32 0.0, %v1369
      %v1371 = vpop.f32.mrb[0].mxu0
      %1372 = vmatprep.mubr.f32.mxu0 0.0
      %1373 = vmatmul.mubr.f32.gmra.mrb[0].mxu0 %v747
      %v1374 = vpop.f32.mrb[0].mxu0
      %v1375 = vadd.f32 0.0, %v1374
      %v1376 = vpop.f32.mrb[0].mxu0
      %1377 = vmatprep.mubr.f32.mxu0 0.0
      %1378 = vmatmul.mubr.f32.gmra.mrb[0].mxu0 %v750
      %v1379 = vpop.f32.mrb[0].mxu0
      %v1380 = vadd.f32 0.0, %v1379
      %v1381 = vpop.f32.mrb[0].mxu0
      %1382 = vmatprep.mubr.f32.mxu0 0.0
      %1383 = vmatmul.mubr.f32.gmra.mrb[0].mxu0 %v753
      %v1384 = vpop.f32.mrb[0].mxu0
      %v1385 = vadd.f32 0.0, %v1384
      %v1386 = vpop.f32.mrb[0].mxu0
      %1387 = vmatprep.mubr.f32.mxu0 0.0
      %1388 = vmatmul.mubr.f32.gmra.mrb[0].mxu0 %v756
      %v1389 = vpop.f32.mrb[0].mxu0
      %v1390 = vadd.f32 0.0, %v1389
      %v1391 = vpop.f32.mrb[0].mxu0
      %1392 = vmatprep.mubr.f32.mxu0 0.0
      %1393 = vmatmul.mubr.f32.gmra.mrb[0].mxu0 %v759
      %v1394 = vpop.f32.mrb[0].mxu0
      %v1395 = vadd.f32 0.0, %v1394
      %v1396 = vpop.f32.mrb[0].mxu0
      %1397 = vmatprep.mubr.f32.mxu0 0.0
      %1398 = vmatmul.mubr.f32.gmra.mrb[0].mxu0 %v762
      %v1399 = vpop.f32.mrb[0].mxu0
      %v1400 = vadd.f32 0.0, %v1399
      %v1401 = vpop.f32.mrb[0].mxu0
      %1402 = vmatprep.mubr.f32.mxu0 0.0
      %1403 = vmatmul.mubr.f32.gmra.mrb[0].mxu0 %v765
      %v1404 = vpop.f32.mrb[0].mxu0
      %v1405 = vadd.f32 0.0, %v1404
      %v1406 = vpop.f32.mrb[0].mxu0
      %1407 = vmatprep.mubr.f32.mxu0 0.0
      %1408 = vmatmul.mubr.f32.gmra.mrb[0].mxu0 %v989
      %v1409 = vpop.f32.mrb[0].mxu0
      %v1410 = vadd.f32 0.0, %v1409
      %v1411 = vpop.f32.mrb[0].mxu0
      %1412 = vmatprep.mubr.f32.mxu0 0.0
      %1413 = vmatmul.mubr.f32.gmra.mrb[0].mxu0 %v992
      %v1414 = vpop.f32.mrb[0].mxu0
      %v1415 = vadd.f32 0.0, %v1414
      %v1416 = vpop.f32.mrb[0].mxu0
      %1417 = vmatprep.mubr.f32.mxu0 0.0
      %1418 = vmatmul.mubr.f32.gmra.mrb[0].mxu0 %v1255
      %v1419 = vpop.f32.mrb[0].mxu0
      %v1420 = vadd.f32 0.0, %v1419
      %v1421 = vpop.f32.mrb[0].mxu0
      %1422 = vmatprep.mubr.f32.mxu0 0.0
      %1423 = vmatmul.mubr.f32.gmra.mrb[0].mxu0 %v1258
      %v1424 = vpop.f32.mrb[0].mxu0
      %v1425 = vadd.f32 0.0, %v1424
      %v1426 = vpop.f32.mrb[0].mxu0
      %1427 = vdwg.mxu0
      %v1428 = vld [vmem:[#allocation3] sm:$0xff]
      %v1429 = vld [vmem:[#allocation3 + $0x8] sm:$0xff]
      %v1430 = vld [vmem:[#allocation3 + $0x10] sm:$0xff]
      %v1431 = vld [vmem:[#allocation3 + $0x18] sm:$0xff]
      %v1432 = vld [vmem:[#allocation3 + $0x20] sm:$0xff]
      %v1433 = vld [vmem:[#allocation3 + $0x28] sm:$0xff]
      %v1434 = vld [vmem:[#allocation3 + $0x30] sm:$0xff]
      %v1435 = vld [vmem:[#allocation3 + $0x38] sm:$0xff]
      %v1436 = vld [vmem:[#allocation3 + $0x40] sm:$0xff]
      %v1437 = vld [vmem:[#allocation3 + $0x48] sm:$0xff]
      %v1438 = vld [vmem:[#allocation3 + $0x50] sm:$0xff]
      %v1439 = vld [vmem:[#allocation3 + $0x58] sm:$0xff]
      %v1440 = vld [vmem:[#allocation3 + $0x60] sm:$0xff]
      %v1441 = vld [vmem:[#allocation3 + $0x68] sm:$0xff]
      %v1442 = vld [vmem:[#allocation3 + $0x70] sm:$0xff]
      %v1443 = vld [vmem:[#allocation3 + $0x78] sm:$0xff]
      %v1444 = vld [vmem:[#allocation3 + $0x80] sm:$0xff]
      %v1445 = vld [vmem:[#allocation3 + $0x88] sm:$0xff]
      %v1446 = vld [vmem:[#allocation3 + $0x90] sm:$0xff]
      %v1447 = vld [vmem:[#allocation3 + $0x98] sm:$0xff]
      %v1448 = vadd.f32 %v1428, %v1330
      %v1449 = vadd.f32 %v1429, %v1335
      %v1450 = vadd.f32 %v1430, %v1340
      %v1451 = vadd.f32 %v1431, %v1345
      %v1452 = vadd.f32 %v1432, %v1350
      %v1453 = vadd.f32 %v1433, %v1355
      %v1454 = vadd.f32 %v1434, %v1360
      %v1455 = vadd.f32 %v1435, %v1365
      %v1456 = vadd.f32 %v1436, %v1370
      %v1457 = vadd.f32 %v1437, %v1375
      %v1458 = vadd.f32 %v1438, %v1380
      %v1459 = vadd.f32 %v1439, %v1385
      %v1460 = vadd.f32 %v1440, %v1390
      %v1461 = vadd.f32 %v1441, %v1395
      %v1462 = vadd.f32 %v1442, %v1400
      %v1463 = vadd.f32 %v1443, %v1405
      %v1464 = vadd.f32 %v1444, %v1410
      %v1465 = vadd.f32 %v1445, %v1415
      %v1466 = vadd.f32 %v1446, %v1420
      %v1467 = vadd.f32 %v1447, %v1425
      %1468 = vst.msk [vmem:[#allocation3] sm:$0xff] %vm683, %v1448
      %1469 = vst.msk [vmem:[#allocation3 + $0x8] sm:$0xff] %vm683, %v1449
      %1470 = vst.msk [vmem:[#allocation3 + $0x10] sm:$0xff] %vm683, %v1450
      %1471 = vst.msk [vmem:[#allocation3 + $0x18] sm:$0xff] %vm683, %v1451
      %1472 = vst.msk [vmem:[#allocation3 + $0x20] sm:$0xff] %vm683, %v1452
      %1473 = vst.msk [vmem:[#allocation3 + $0x28] sm:$0xff] %vm683, %v1453
      %1474 = vst.msk [vmem:[#allocation3 + $0x30] sm:$0xff] %vm683, %v1454
      %1475 = vst.msk [vmem:[#allocation3 + $0x38] sm:$0xff] %vm683, %v1455
      %1476 = vst.msk [vmem:[#allocation3 + $0x40] sm:$0xff] %vm683, %v1456
      %1477 = vst.msk [vmem:[#allocation3 + $0x48] sm:$0xff] %vm683, %v1457
      %1478 = vst.msk [vmem:[#allocation3 + $0x50] sm:$0xff] %vm683, %v1458
      %1479 = vst.msk [vmem:[#allocation3 + $0x58] sm:$0xff] %vm683, %v1459
      %1480 = vst.msk [vmem:[#allocation3 + $0x60] sm:$0xff] %vm683, %v1460
      %1481 = vst.msk [vmem:[#allocation3 + $0x68] sm:$0xff] %vm683, %v1461
      %1482 = vst.msk [vmem:[#allocation3 + $0x70] sm:$0xff] %vm683, %v1462
      %1483 = vst.msk [vmem:[#allocation3 + $0x78] sm:$0xff] %vm683, %v1463
      %1484 = vst.msk [vmem:[#allocation3 + $0x80] sm:$0xff] %vm683, %v1464
      %1485 = vst.msk [vmem:[#allocation3 + $0x88] sm:$0xff] %vm683, %v1465
      %1486 = vst.msk [vmem:[#allocation3 + $0x90] sm:$0xff] %vm683, %v1466
      %1487 = vst.msk [vmem:[#allocation3 + $0x98] sm:$0xff] %vm683, %v1467
      %v1488 = vld [vmem:[#allocation3] sm:$0xff]
      %v1489 = vld [vmem:[#allocation3 + $0x8] sm:$0xff]
      %v1490 = vld [vmem:[#allocation3 + $0x10] sm:$0xff]
      %v1491 = vld [vmem:[#allocation3 + $0x18] sm:$0xff]
      %v1492 = vld [vmem:[#allocation3 + $0x20] sm:$0xff]
      %v1493 = vld [vmem:[#allocation3 + $0x28] sm:$0xff]
      %v1494 = vld [vmem:[#allocation3 + $0x30] sm:$0xff]
      %v1495 = vld [vmem:[#allocation3 + $0x38] sm:$0xff]
      %v1496 = vld [vmem:[#allocation3 + $0x40] sm:$0xff]
      %v1497 = vld [vmem:[#allocation3 + $0x48] sm:$0xff]
      %v1498 = vld [vmem:[#allocation3 + $0x50] sm:$0xff]
      %v1499 = vld [vmem:[#allocation3 + $0x58] sm:$0xff]
      %v1500 = vld [vmem:[#allocation3 + $0x60] sm:$0xff]
      %v1501 = vld [vmem:[#allocation3 + $0x68] sm:$0xff]
      %v1502 = vld [vmem:[#allocation3 + $0x70] sm:$0xff]
      %v1503 = vld [vmem:[#allocation3 + $0x78] sm:$0xff]
      %v1504 = vld [vmem:[#allocation3 + $0x80] sm:$0xff]
      %v1505 = vld [vmem:[#allocation3 + $0x88] sm:$0xff]
      %v1506 = vld [vmem:[#allocation3 + $0x90] sm:$0xff]
      %v1507 = vld [vmem:[#allocation3 + $0x98] sm:$0xff]
      %v1508 = vld [vmem:[%s3] sm:$0x1]
      %v1510 = vlaneseq
      %v1511 = vshrl.u32 %v1510, 7
      %v1512 = vsub.s32 0, %v1511
      %v1513 = vrot.slane %v1508, %v1512
      %v1515 = vadd.f32 %v1488, %v1513
      %v1516 = vadd.f32 %v1489, %v1513
      %v1517 = vadd.f32 %v1490, %v1513
      %v1518 = vadd.f32 %v1491, %v1513
      %v1519 = vadd.f32 %v1492, %v1513
      %v1520 = vadd.f32 %v1493, %v1513
      %v1521 = vadd.f32 %v1494, %v1513
      %v1522 = vadd.f32 %v1495, %v1513
      %v1523 = vadd.f32 %v1496, %v1513
      %v1524 = vadd.f32 %v1497, %v1513
      %v1525 = vadd.f32 %v1498, %v1513
      %v1526 = vadd.f32 %v1499, %v1513
      %v1527 = vadd.f32 %v1500, %v1513
      %v1528 = vadd.f32 %v1501, %v1513
      %v1529 = vadd.f32 %v1502, %v1513
      %v1530 = vadd.f32 %v1503, %v1513
      %v1531 = vadd.f32 %v1504, %v1513
      %v1532 = vadd.f32 %v1505, %v1513
      %v1533 = vadd.f32 %v1506, %v1513
      %v1534 = vadd.f32 %v1507, %v1513
      %v1535 = vmax.f32 %v1515, 0.0
      %v1536 = vmax.f32 %v1516, 0.0
      %v1537 = vmax.f32 %v1517, 0.0
      %v1538 = vmax.f32 %v1518, 0.0
      %v1539 = vmax.f32 %v1519, 0.0
      %v1540 = vmax.f32 %v1520, 0.0
      %v1541 = vmax.f32 %v1521, 0.0
      %v1542 = vmax.f32 %v1522, 0.0
      %v1543 = vmax.f32 %v1523, 0.0
      %v1544 = vmax.f32 %v1524, 0.0
      %v1545 = vmax.f32 %v1525, 0.0
      %v1546 = vmax.f32 %v1526, 0.0
      %v1547 = vmax.f32 %v1527, 0.0
      %v1548 = vmax.f32 %v1528, 0.0
      %v1549 = vmax.f32 %v1529, 0.0
      %v1550 = vmax.f32 %v1530, 0.0
      %v1551 = vmax.f32 %v1531, 0.0
      %v1552 = vmax.f32 %v1532, 0.0
      %v1553 = vmax.f32 %v1533, 0.0
      %v1554 = vmax.f32 %v1534, 0.0
      %1555 = vst.msk [vmem:[#allocation2 + $0x1] sm:$0xff] %vm683, %v1535
      %1556 = vst.msk [vmem:[#allocation2 + $0x9] sm:$0xff] %vm683, %v1536
      %1557 = vst.msk [vmem:[#allocation2 + $0x19] sm:$0xff] %vm683, %v1537
      %1558 = vst.msk [vmem:[#allocation2 + $0x21] sm:$0xff] %vm683, %v1538
      %1559 = vst.msk [vmem:[#allocation2 + $0x31] sm:$0xff] %vm683, %v1539
      %1560 = vst.msk [vmem:[#allocation2 + $0x39] sm:$0xff] %vm683, %v1540
      %1561 = vst.msk [vmem:[#allocation2 + $0x49] sm:$0xff] %vm683, %v1541
      %1562 = vst.msk [vmem:[#allocation2 + $0x51] sm:$0xff] %vm683, %v1542
      %1563 = vst.msk [vmem:[#allocation2 + $0x61] sm:$0xff] %vm683, %v1543
      %1564 = vst.msk [vmem:[#allocation2 + $0x69] sm:$0xff] %vm683, %v1544
      %1565 = vst.msk [vmem:[#allocation2 + $0x79] sm:$0xff] %vm683, %v1545
      %1566 = vst.msk [vmem:[#allocation2 + $0x81] sm:$0xff] %vm683, %v1546
      %1567 = vst.msk [vmem:[#allocation2 + $0x91] sm:$0xff] %vm683, %v1547
      %1568 = vst.msk [vmem:[#allocation2 + $0x99] sm:$0xff] %vm683, %v1548
      %1569 = vst.msk [vmem:[#allocation2 + $0xa9] sm:$0xff] %vm683, %v1549
      %1570 = vst.msk [vmem:[#allocation2 + $0xb1] sm:$0xff] %vm683, %v1550
      %1571 = vst.msk [vmem:[#allocation2 + $0xc1] sm:$0xff] %vm683, %v1551
      %1572 = vst.msk [vmem:[#allocation2 + $0xc9] sm:$0xff] %vm683, %v1552
      %1573 = vst.msk [vmem:[#allocation2 + $0xd9] sm:$0xff] %vm683, %v1553
      %1574 = vst.msk [vmem:[#allocation2 + $0xe1] sm:$0xff] %vm683, %v1554
      %vm1575 = vcmask 57344
      %1576 = vst.msk [vmem:[#allocation2] sm:$0x1] %vm1575, 0.0
      %1577 = vst.msk [vmem:[#allocation2 + $0x18] sm:$0x1] %vm1575, 0.0
      %1578 = vst.msk [vmem:[#allocation2 + $0x30] sm:$0x1] %vm1575, 0.0
      %1579 = vst.msk [vmem:[#allocation2 + $0x48] sm:$0x1] %vm1575, 0.0
      %1580 = vst.msk [vmem:[#allocation2 + $0x60] sm:$0x1] %vm1575, 0.0
      %1581 = vst.msk [vmem:[#allocation2 + $0x78] sm:$0x1] %vm1575, 0.0
      %1582 = vst.msk [vmem:[#allocation2 + $0x90] sm:$0x1] %vm1575, 0.0
      %1583 = vst.msk [vmem:[#allocation2 + $0xa8] sm:$0x1] %vm1575, 0.0
      %1584 = vst.msk [vmem:[#allocation2 + $0xc0] sm:$0x1] %vm1575, 0.0
      %1585 = vst.msk [vmem:[#allocation2 + $0xd8] sm:$0x1] %vm1575, 0.0
      %1586 = vst.msk [vmem:[#allocation2 + $0x11] sm:$0x1] %vm1575, 0.0
      %1587 = vst.msk [vmem:[#allocation2 + $0x29] sm:$0x1] %vm1575, 0.0
      %1588 = vst.msk [vmem:[#allocation2 + $0x41] sm:$0x1] %vm1575, 0.0
      %1589 = vst.msk [vmem:[#allocation2 + $0x59] sm:$0x1] %vm1575, 0.0
      %1590 = vst.msk [vmem:[#allocation2 + $0x71] sm:$0x1] %vm1575, 0.0
      %1591 = vst.msk [vmem:[#allocation2 + $0x89] sm:$0x1] %vm1575, 0.0
      %1592 = vst.msk [vmem:[#allocation2 + $0xa1] sm:$0x1] %vm1575, 0.0
      %1593 = vst.msk [vmem:[#allocation2 + $0xb9] sm:$0x1] %vm1575, 0.0
      %1594 = vst.msk [vmem:[#allocation2 + $0xd1] sm:$0x1] %vm1575, 0.0
      %1595 = vst.msk [vmem:[#allocation2 + $0xe9] sm:$0x1] %vm1575, 0.0
      %p1596 = scmp.eq.s32.totalorder %s22, 0
      // Predicated region
      $region45: #{tpu_custom_call.1} parent=43 // pred_check
        %p1597 = pneg %p1596
      $region46: #{tpu_custom_call.1} parent=43 // pred_check_branch
        %1599 = sbr.rel (%p1597) target = $region48
      $region47: #{tpu_custom_call.1} parent=43 // pred_region
        %1600 = vst.msk [vmem:[#allocation2] sm:$0xff] %vm683, 0.0
        %1601 = vst.msk [vmem:[#allocation2 + $0x8] sm:$0xff] %vm683, 0.0
        %vm1602 = vcmask 58368
        %1603 = vst.msk [vmem:[#allocation2 + $0x10] sm:$0x3] %vm1602, 0.0
      $region48: #{tpu_custom_call.1} parent=43 // pred_fallthru
        _
      %p1604 = scmp.eq.s32.totalorder %s22, 1
      // Predicated region
      $region49: #{tpu_custom_call.1} parent=43 // pred_check
        %p1605 = pneg %p1604
      $region50: #{tpu_custom_call.1} parent=43 // pred_check_branch
        %1607 = sbr.rel (%p1605) target = $region52
      $region51: #{tpu_custom_call.1} parent=43 // pred_region
        %s1608 = scalar_lea.vmem [#allocation2], 216
        %1609 = vst.msk [vmem:[%s1608] sm:$0xff] %vm683, 0.0
        %1610 = vst.msk [vmem:[%s1608 + $0x8] sm:$0xff] %vm683, 0.0
        %vm1611 = vcmask 58368
        %1612 = vst.msk [vmem:[%s1608 + $0x10] sm:$0x3] %vm1611, 0.0
      $region52: #{tpu_custom_call.1} parent=43 // pred_fallthru
        _
      %v1613 = vld [vmem:[#allocation2] sm:$0xff]
      %v1614 = vld [vmem:[#allocation2 + $0x8] sm:$0xff]
      %v1615 = vld [vmem:[#allocation2 + $0x10] sm:$0x3]
      %v1616 = vld [vmem:[#allocation2 + $0x18] sm:$0xff]
      %v1617 = vld [vmem:[#allocation2 + $0x20] sm:$0xff]
      %v1618 = vld [vmem:[#allocation2 + $0x28] sm:$0x3]
      %v1619 = vld [vmem:[#allocation2 + $0x30] sm:$0xff]
      %v1620 = vld [vmem:[#allocation2 + $0x38] sm:$0xff]
      %v1621 = vld [vmem:[#allocation2 + $0x40] sm:$0x3]
      %v1622 = vld [vmem:[#allocation2 + $0x48] sm:$0xff]
      %v1623 = vld [vmem:[#allocation2 + $0x50] sm:$0xff]
      %v1624 = vld [vmem:[#allocation2 + $0x58] sm:$0x3]
      %v1625 = vld [vmem:[#allocation2 + $0x60] sm:$0xff]
      %v1626 = vld [vmem:[#allocation2 + $0x68] sm:$0xff]
      %v1627 = vld [vmem:[#allocation2 + $0x70] sm:$0x3]
      %v1628 = vld [vmem:[#allocation2 + $0x78] sm:$0xff]
      %v1629 = vld [vmem:[#allocation2 + $0x80] sm:$0xff]
      %v1630 = vld [vmem:[#allocation2 + $0x88] sm:$0x3]
      %v1631 = vld [vmem:[#allocation2 + $0x90] sm:$0xff]
      %v1632 = vld [vmem:[#allocation2 + $0x98] sm:$0xff]
      %v1633 = vld [vmem:[#allocation2 + $0xa0] sm:$0x3]
      %v1634 = vld [vmem:[#allocation2 + $0xa8] sm:$0xff]
      %v1635 = vld [vmem:[#allocation2 + $0xb0] sm:$0xff]
      %v1636 = vld [vmem:[#allocation2 + $0xb8] sm:$0x3]
      %v1661 = vrot.slane %v1613, 1
      %v1662 = vrot.slane %v1614, 1
      %v1663 = vsel %vm440, %v1661, %v1662
      %v1664 = vrot.slane %v1615, 1
      %v1665 = vsel %vm440, %v1662, %v1664
      %v1666 = vrot.slane %v1616, 1
      %v1667 = vrot.slane %v1617, 1
      %v1668 = vsel %vm440, %v1666, %v1667
      %v1669 = vrot.slane %v1618, 1
      %v1670 = vsel %vm440, %v1667, %v1669
      %v1671 = vrot.slane %v1619, 1
      %v1672 = vrot.slane %v1620, 1
      %v1673 = vsel %vm440, %v1671, %v1672
      %v1674 = vrot.slane %v1621, 1
      %v1675 = vsel %vm440, %v1672, %v1674
      %v1676 = vrot.slane %v1622, 1
      %v1677 = vrot.slane %v1623, 1
      %v1678 = vsel %vm440, %v1676, %v1677
      %v1679 = vrot.slane %v1624, 1
      %v1680 = vsel %vm440, %v1677, %v1679
      %v1681 = vrot.slane %v1625, 1
      %v1682 = vrot.slane %v1626, 1
      %v1683 = vsel %vm440, %v1681, %v1682
      %v1684 = vrot.slane %v1627, 1
      %v1685 = vsel %vm440, %v1682, %v1684
      %v1686 = vrot.slane %v1628, 1
      %v1687 = vrot.slane %v1629, 1
      %v1688 = vsel %vm440, %v1686, %v1687
      %v1689 = vrot.slane %v1630, 1
      %v1690 = vsel %vm440, %v1687, %v1689
      %v1691 = vrot.slane %v1631, 1
      %v1692 = vrot.slane %v1632, 1
      %v1693 = vsel %vm440, %v1691, %v1692
      %v1694 = vrot.slane %v1633, 1
      %v1695 = vsel %vm440, %v1692, %v1694
      %v1696 = vrot.slane %v1634, 1
      %v1697 = vrot.slane %v1635, 1
      %v1698 = vsel %vm440, %v1696, %v1697
      %v1699 = vrot.slane %v1636, 1
      %v1700 = vsel %vm440, %v1697, %v1699
      %1701 = vrot.lane.b32.xlu0 %v1663, 8
      %v1702 = vpop.permute.xlu0 %1701
      %1703 = vrot.lane.b32.xlu0 %v1665, 8
      %v1704 = vpop.permute.xlu0 %1703
      %1705 = vrot.lane.b32.xlu0 %v1668, 8
      %v1706 = vpop.permute.xlu0 %1705
      %1707 = vrot.lane.b32.xlu0 %v1670, 8
      %v1708 = vpop.permute.xlu0 %1707
      %1709 = vrot.lane.b32.xlu0 %v1673, 8
      %v1710 = vpop.permute.xlu0 %1709
      %1711 = vrot.lane.b32.xlu0 %v1675, 8
      %v1712 = vpop.permute.xlu0 %1711
      %1713 = vrot.lane.b32.xlu0 %v1678, 8
      %v1714 = vpop.permute.xlu0 %1713
      %1715 = vrot.lane.b32.xlu0 %v1680, 8
      %v1716 = vpop.permute.xlu0 %1715
      %1717 = vrot.lane.b32.xlu0 %v1683, 8
      %v1718 = vpop.permute.xlu0 %1717
      %1719 = vrot.lane.b32.xlu0 %v1685, 8
      %v1720 = vpop.permute.xlu0 %1719
      %1721 = vrot.lane.b32.xlu0 %v1688, 8
      %v1722 = vpop.permute.xlu0 %1721
      %1723 = vrot.lane.b32.xlu0 %v1690, 8
      %v1724 = vpop.permute.xlu0 %1723
      %1725 = vrot.lane.b32.xlu0 %v1693, 8
      %v1726 = vpop.permute.xlu0 %1725
      %1727 = vrot.lane.b32.xlu0 %v1695, 8
      %v1728 = vpop.permute.xlu0 %1727
      %1729 = vrot.lane.b32.xlu0 %v1698, 8
      %v1730 = vpop.permute.xlu0 %1729
      %1731 = vrot.lane.b32.xlu0 %v1700, 8
      %v1732 = vpop.permute.xlu0 %1731
      %v1749 = vrot.slane %v1613, 2
      %v1750 = vrot.slane %v1614, 2
      %v1751 = vsel %vm551, %v1749, %v1750
      %v1752 = vrot.slane %v1615, 2
      %v1753 = vsel %vm551, %v1750, %v1752
      %v1754 = vrot.slane %v1616, 2
      %v1755 = vrot.slane %v1617, 2
      %v1756 = vsel %vm551, %v1754, %v1755
      %v1757 = vrot.slane %v1618, 2
      %v1758 = vsel %vm551, %v1755, %v1757
      %v1759 = vrot.slane %v1619, 2
      %v1760 = vrot.slane %v1620, 2
      %v1761 = vsel %vm551, %v1759, %v1760
      %v1762 = vrot.slane %v1621, 2
      %v1763 = vsel %vm551, %v1760, %v1762
      %v1764 = vrot.slane %v1622, 2
      %v1765 = vrot.slane %v1623, 2
      %v1766 = vsel %vm551, %v1764, %v1765
      %v1767 = vrot.slane %v1624, 2
      %v1768 = vsel %vm551, %v1765, %v1767
      %v1769 = vrot.slane %v1625, 2
      %v1770 = vrot.slane %v1626, 2
      %v1771 = vsel %vm551, %v1769, %v1770
      %v1772 = vrot.slane %v1627, 2
      %v1773 = vsel %vm551, %v1770, %v1772
      %v1774 = vrot.slane %v1628, 2
      %v1775 = vrot.slane %v1629, 2
      %v1776 = vsel %vm551, %v1774, %v1775
      %v1777 = vrot.slane %v1630, 2
      %v1778 = vsel %vm551, %v1775, %v1777
      %v1779 = vrot.slane %v1631, 2
      %v1780 = vrot.slane %v1632, 2
      %v1781 = vsel %vm551, %v1779, %v1780
      %v1782 = vrot.slane %v1633, 2
      %v1783 = vsel %vm551, %v1780, %v1782
      %v1784 = vrot.slane %v1634, 2
      %v1785 = vrot.slane %v1635, 2
      %v1786 = vsel %vm551, %v1784, %v1785
      %v1787 = vrot.slane %v1636, 2
      %v1788 = vsel %vm551, %v1785, %v1787
      %1789 = vrot.lane.b32.xlu0 %v1751, 16
      %v1790 = vpop.permute.xlu0 %1789
      %1791 = vrot.lane.b32.xlu0 %v1753, 16
      %v1792 = vpop.permute.xlu0 %1791
      %1793 = vrot.lane.b32.xlu0 %v1756, 16
      %v1794 = vpop.permute.xlu0 %1793
      %1795 = vrot.lane.b32.xlu0 %v1758, 16
      %v1796 = vpop.permute.xlu0 %1795
      %1797 = vrot.lane.b32.xlu0 %v1761, 16
      %v1798 = vpop.permute.xlu0 %1797
      %1799 = vrot.lane.b32.xlu0 %v1763, 16
      %v1800 = vpop.permute.xlu0 %1799
      %1801 = vrot.lane.b32.xlu0 %v1766, 16
      %v1802 = vpop.permute.xlu0 %1801
      %1803 = vrot.lane.b32.xlu0 %v1768, 16
      %v1804 = vpop.permute.xlu0 %1803
      %1805 = vrot.lane.b32.xlu0 %v1771, 16
      %v1806 = vpop.permute.xlu0 %1805
      %1807 = vrot.lane.b32.xlu0 %v1773, 16
      %v1808 = vpop.permute.xlu0 %1807
      %1809 = vrot.lane.b32.xlu0 %v1776, 16
      %v1810 = vpop.permute.xlu0 %1809
      %1811 = vrot.lane.b32.xlu0 %v1778, 16
      %v1812 = vpop.permute.xlu0 %1811
      %1813 = vrot.lane.b32.xlu0 %v1781, 16
      %v1814 = vpop.permute.xlu0 %1813
      %1815 = vrot.lane.b32.xlu0 %v1783, 16
      %v1816 = vpop.permute.xlu0 %1815
      %1817 = vrot.lane.b32.xlu0 %v1786, 16
      %v1818 = vpop.permute.xlu0 %1817
      %1819 = vrot.lane.b32.xlu0 %v1788, 16
      %v1820 = vpop.permute.xlu0 %1819
      %v1837 = vsel %vm683, %v1613, %v1702
      %v1838 = vsel %vm683, %v1614, %v1704
      %v1839 = vsel %vm683, %v1616, %v1706
      %v1840 = vsel %vm683, %v1617, %v1708
      %v1841 = vsel %vm683, %v1619, %v1710
      %v1842 = vsel %vm683, %v1620, %v1712
      %v1843 = vsel %vm683, %v1622, %v1714
      %v1844 = vsel %vm683, %v1623, %v1716
      %v1845 = vsel %vm683, %v1625, %v1718
      %v1846 = vsel %vm683, %v1626, %v1720
      %v1847 = vsel %vm683, %v1628, %v1722
      %v1848 = vsel %vm683, %v1629, %v1724
      %v1849 = vsel %vm683, %v1631, %v1726
      %v1850 = vsel %vm683, %v1632, %v1728
      %v1851 = vsel %vm683, %v1634, %v1730
      %v1852 = vsel %vm683, %v1635, %v1732
      %vm1853 = vcmask 130048
      %v1854 = vsel %vm1853, %v1837, %v1790
      %v1855 = vsel %vm1853, %v1838, %v1792
      %v1856 = vsel %vm1853, %v1839, %v1794
      %v1857 = vsel %vm1853, %v1840, %v1796
      %v1858 = vsel %vm1853, %v1841, %v1798
      %v1859 = vsel %vm1853, %v1842, %v1800
      %v1860 = vsel %vm1853, %v1843, %v1802
      %v1861 = vsel %vm1853, %v1844, %v1804
      %v1862 = vsel %vm1853, %v1845, %v1806
      %v1863 = vsel %vm1853, %v1846, %v1808
      %v1864 = vsel %vm1853, %v1847, %v1810
      %v1865 = vsel %vm1853, %v1848, %v1812
      %v1866 = vsel %vm1853, %v1849, %v1814
      %v1867 = vsel %vm1853, %v1850, %v1816
      %v1868 = vsel %vm1853, %v1851, %v1818
      %v1869 = vsel %vm1853, %v1852, %v1820
      %v1870 = vld [vmem:[%s4] sm:$0xff]
      %v1871 = vld [vmem:[%s4 + $0x8] sm:$0xff]
      %v1872 = vld [vmem:[%s4 + $0x10] sm:$0xff]
      %vm1873 = vcmask 195584
      %v1875 = vsel %vm1873, %v1854, 0
      %v1878 = vsel %vm1873, %v1855, 0
      %v1881 = vsel %vm1873, %v1856, 0
      %v1884 = vsel %vm1873, %v1857, 0
      %v1887 = vsel %vm1873, %v1858, 0
      %v1890 = vsel %vm1873, %v1859, 0
      %v1893 = vsel %vm1873, %v1860, 0
      %v1896 = vsel %vm1873, %v1861, 0
      %v1899 = vsel %vm1873, %v1862, 0
      %v1902 = vsel %vm1873, %v1863, 0
      %v1905 = vsel %vm1873, %v1864, 0
      %v1908 = vsel %vm1873, %v1865, 0
      %v1911 = vsel %vm1873, %v1866, 0
      %v1914 = vsel %vm1873, %v1867, 0
      %v1917 = vsel %vm1873, %v1868, 0
      %v1920 = vsel %vm1873, %v1869, 0
      %1922 = vmatprep.subr.mxu0 0.0
      %1923 = vmatpush1.msra.mxu0 %v1870
      %1924 = vmatprep.subr.mxu0 0.0
      %1925 = vmatpush1.msra.mxu0 %v1871
      %1926 = vmatprep.subr.mxu0 0.0
      %1927 = vmatpush1.msra.mxu0 %v1872
      %1928 = vmatprep.subr.mxu0 0.0
      %1929 = vmatpush1.msra.mxu0 0.0
      %1930 = vmatprep.subr.mxu0 0.0
      %1931 = vmatpush1.msra.mxu0 0.0
      %1932 = vmatprep.subr.mxu0 0.0
      %1933 = vmatpush1.msra.mxu0 0.0
      %1934 = vmatprep.subr.mxu0 0.0
      %1935 = vmatpush1.msra.mxu0 0.0
      %1936 = vmatprep.subr.mxu0 0.0
      %1937 = vmatpush1.msra.mxu0 0.0
      %1938 = vmatprep.subr.mxu0 0.0
      %1939 = vmatpush1.msra.mxu0 0.0
      %1940 = vmatprep.subr.mxu0 0.0
      %1941 = vmatpush1.msra.mxu0 0.0
      %1942 = vmatprep.subr.mxu0 0.0
      %1943 = vmatpush1.msra.mxu0 0.0
      %1944 = vmatprep.subr.mxu0 0.0
      %1945 = vmatpush1.msra.mxu0 0.0
      %1946 = vmatprep.subr.mxu0 0.0
      %1947 = vmatpush1.msra.mxu0 0.0
      %1948 = vmatprep.subr.mxu0 0.0
      %1949 = vmatpush1.msra.mxu0 0.0
      %1950 = vmatprep.subr.mxu0 0.0
      %1951 = vmatpush1.msra.mxu0 0.0
      %1952 = vmatprep.subr.mxu0 0.0
      %1953 = vmatpush1.msra.mxu0 0.0
      %1954 = vmatprep.subr.mxu0 0.0
      %1955 = vmatpush1.msra.mxu0 0.0
      %1956 = vmatprep.subr.mxu0 0.0
      %1957 = vmatpush1.msra.mxu0 0.0
      %1958 = vmatprep.subr.mxu0 0.0
      %1959 = vmatpush1.msra.mxu0 0.0
      %1960 = vmatprep.subr.mxu0 0.0
      %1961 = vmatpush1.msra.mxu0 0.0
      %1962 = vmatprep.subr.mxu0 0.0
      %1963 = vmatpush1.msra.mxu0 0.0
      %1964 = vmatprep.subr.mxu0 0.0
      %1965 = vmatpush1.msra.mxu0 0.0
      %1966 = vmatprep.subr.mxu0 0.0
      %1967 = vmatpush1.msra.mxu0 0.0
      %1968 = vmatprep.subr.mxu0 0.0
      %1969 = vmatpush1.msra.mxu0 0.0
      %1970 = vmatprep.subr.mxu0 0.0
      %1971 = vmatpush1.msra.mxu0 0.0
      %1972 = vmatprep.subr.mxu0 0.0
      %1973 = vmatpush1.msra.mxu0 0.0
      %1974 = vmatprep.subr.mxu0 0.0
      %1975 = vmatpush1.msra.mxu0 0.0
      %1976 = vmatprep.subr.mxu0 0.0
      %1977 = vmatpush1.msra.mxu0 0.0
      %1978 = vmatprep.subr.mxu0 0.0
      %1979 = vmatpush1.msra.mxu0 0.0
      %1980 = vmatprep.subr.mxu0 0.0
      %1981 = vmatpush1.msra.mxu0 0.0
      %1982 = vmatprep.subr.mxu0 0.0
      %1983 = vmatpush1.msra.mxu0 0.0
      %1984 = vmatprep.subr.mxu0 0.0
      %1985 = vmatpush1.msra.mxu0 0.0
      %1986 = vmatprep.mubr.f32.mxu0 0.0
      %1987 = vmatmul.mubr.f32.gmra.mrb[0].mxu0 %v1875
      %v1988 = vpop.f32.mrb[0].mxu0
      %v1989 = vadd.f32 0.0, %v1988
      %v1990 = vpop.f32.mrb[0].mxu0
      %1991 = vmatprep.mubr.f32.mxu0 0.0
      %1992 = vmatmul.mubr.f32.gmra.mrb[0].mxu0 %v1878
      %v1993 = vpop.f32.mrb[0].mxu0
      %v1994 = vadd.f32 0.0, %v1993
      %v1995 = vpop.f32.mrb[0].mxu0
      %1996 = vmatprep.mubr.f32.mxu0 0.0
      %1997 = vmatmul.mubr.f32.gmra.mrb[0].mxu0 %v1881
      %v1998 = vpop.f32.mrb[0].mxu0
      %v1999 = vadd.f32 0.0, %v1998
      %v2000 = vpop.f32.mrb[0].mxu0
      %2001 = vmatprep.mubr.f32.mxu0 0.0
      %2002 = vmatmul.mubr.f32.gmra.mrb[0].mxu0 %v1884
      %v2003 = vpop.f32.mrb[0].mxu0
      %v2004 = vadd.f32 0.0, %v2003
      %v2005 = vpop.f32.mrb[0].mxu0
      %2006 = vmatprep.mubr.f32.mxu0 0.0
      %2007 = vmatmul.mubr.f32.gmra.mrb[0].mxu0 %v1887
      %v2008 = vpop.f32.mrb[0].mxu0
      %v2009 = vadd.f32 0.0, %v2008
      %v2010 = vpop.f32.mrb[0].mxu0
      %2011 = vmatprep.mubr.f32.mxu0 0.0
      %2012 = vmatmul.mubr.f32.gmra.mrb[0].mxu0 %v1890
      %v2013 = vpop.f32.mrb[0].mxu0
      %v2014 = vadd.f32 0.0, %v2013
      %v2015 = vpop.f32.mrb[0].mxu0
      %2016 = vmatprep.mubr.f32.mxu0 0.0
      %2017 = vmatmul.mubr.f32.gmra.mrb[0].mxu0 %v1893
      %v2018 = vpop.f32.mrb[0].mxu0
      %v2019 = vadd.f32 0.0, %v2018
      %v2020 = vpop.f32.mrb[0].mxu0
      %2021 = vmatprep.mubr.f32.mxu0 0.0
      %2022 = vmatmul.mubr.f32.gmra.mrb[0].mxu0 %v1896
      %v2023 = vpop.f32.mrb[0].mxu0
      %v2024 = vadd.f32 0.0, %v2023
      %v2025 = vpop.f32.mrb[0].mxu0
      %2026 = vmatprep.mubr.f32.mxu0 0.0
      %2027 = vmatmul.mubr.f32.gmra.mrb[0].mxu0 %v1899
      %v2028 = vpop.f32.mrb[0].mxu0
      %v2029 = vadd.f32 0.0, %v2028
      %v2030 = vpop.f32.mrb[0].mxu0
      %2031 = vmatprep.mubr.f32.mxu0 0.0
      %2032 = vmatmul.mubr.f32.gmra.mrb[0].mxu0 %v1902
      %v2033 = vpop.f32.mrb[0].mxu0
      %v2034 = vadd.f32 0.0, %v2033
      %v2035 = vpop.f32.mrb[0].mxu0
      %2036 = vmatprep.mubr.f32.mxu0 0.0
      %2037 = vmatmul.mubr.f32.gmra.mrb[0].mxu0 %v1905
      %v2038 = vpop.f32.mrb[0].mxu0
      %v2039 = vadd.f32 0.0, %v2038
      %v2040 = vpop.f32.mrb[0].mxu0
      %2041 = vmatprep.mubr.f32.mxu0 0.0
      %2042 = vmatmul.mubr.f32.gmra.mrb[0].mxu0 %v1908
      %v2043 = vpop.f32.mrb[0].mxu0
      %v2044 = vadd.f32 0.0, %v2043
      %v2045 = vpop.f32.mrb[0].mxu0
      %2046 = vmatprep.mubr.f32.mxu0 0.0
      %2047 = vmatmul.mubr.f32.gmra.mrb[0].mxu0 %v1911
      %v2048 = vpop.f32.mrb[0].mxu0
      %v2049 = vadd.f32 0.0, %v2048
      %v2050 = vpop.f32.mrb[0].mxu0
      %2051 = vmatprep.mubr.f32.mxu0 0.0
      %2052 = vmatmul.mubr.f32.gmra.mrb[0].mxu0 %v1914
      %v2053 = vpop.f32.mrb[0].mxu0
      %v2054 = vadd.f32 0.0, %v2053
      %v2055 = vpop.f32.mrb[0].mxu0
      %2056 = vmatprep.mubr.f32.mxu0 0.0
      %2057 = vmatmul.mubr.f32.gmra.mrb[0].mxu0 %v1917
      %v2058 = vpop.f32.mrb[0].mxu0
      %v2059 = vadd.f32 0.0, %v2058
      %v2060 = vpop.f32.mrb[0].mxu0
      %2061 = vmatprep.mubr.f32.mxu0 0.0
      %2062 = vmatmul.mubr.f32.gmra.mrb[0].mxu0 %v1920
      %v2063 = vpop.f32.mrb[0].mxu0
      %v2064 = vadd.f32 0.0, %v2063
      %v2065 = vpop.f32.mrb[0].mxu0
      %2066 = vdwg.mxu0
      %2067 = vst.msk [vmem:[#allocation4] sm:$0xff] %vm683, %v1989
      %2068 = vst.msk [vmem:[#allocation4 + $0x8] sm:$0xff] %vm683, %v1994
      %2069 = vst.msk [vmem:[#allocation4 + $0x10] sm:$0xff] %vm683, %v1999
      %2070 = vst.msk [vmem:[#allocation4 + $0x18] sm:$0xff] %vm683, %v2004
      %2071 = vst.msk [vmem:[#allocation4 + $0x20] sm:$0xff] %vm683, %v2009
      %2072 = vst.msk [vmem:[#allocation4 + $0x28] sm:$0xff] %vm683, %v2014
      %2073 = vst.msk [vmem:[#allocation4 + $0x30] sm:$0xff] %vm683, %v2019
      %2074 = vst.msk [vmem:[#allocation4 + $0x38] sm:$0xff] %vm683, %v2024
      %2075 = vst.msk [vmem:[#allocation4 + $0x40] sm:$0xff] %vm683, %v2029
      %2076 = vst.msk [vmem:[#allocation4 + $0x48] sm:$0xff] %vm683, %v2034
      %2077 = vst.msk [vmem:[#allocation4 + $0x50] sm:$0xff] %vm683, %v2039
      %2078 = vst.msk [vmem:[#allocation4 + $0x58] sm:$0xff] %vm683, %v2044
      %2079 = vst.msk [vmem:[#allocation4 + $0x60] sm:$0xff] %vm683, %v2049
      %2080 = vst.msk [vmem:[#allocation4 + $0x68] sm:$0xff] %vm683, %v2054
      %2081 = vst.msk [vmem:[#allocation4 + $0x70] sm:$0xff] %vm683, %v2059
      %2082 = vst.msk [vmem:[#allocation4 + $0x78] sm:$0xff] %vm683, %v2064
      %s2083 = scalar_lea.vmem [#allocation2], 24
      %v2084 = vld [vmem:[%s2083] sm:$0xff]
      %v2085 = vld [vmem:[%s2083 + $0x8] sm:$0xff]
      %v2086 = vld [vmem:[%s2083 + $0x10] sm:$0x3]
      %v2087 = vld [vmem:[%s2083 + $0x18] sm:$0xff]
      %v2088 = vld [vmem:[%s2083 + $0x20] sm:$0xff]
      %v2089 = vld [vmem:[%s2083 + $0x28] sm:$0x3]
      %v2090 = vld [vmem:[%s2083 + $0x30] sm:$0xff]
      %v2091 = vld [vmem:[%s2083 + $0x38] sm:$0xff]
      %v2092 = vld [vmem:[%s2083 + $0x40] sm:$0x3]
      %v2093 = vld [vmem:[%s2083 + $0x48] sm:$0xff]
      %v2094 = vld [vmem:[%s2083 + $0x50] sm:$0xff]
      %v2095 = vld [vmem:[%s2083 + $0x58] sm:$0x3]
      %v2096 = vld [vmem:[%s2083 + $0x60] sm:$0xff]
      %v2097 = vld [vmem:[%s2083 + $0x68] sm:$0xff]
      %v2098 = vld [vmem:[%s2083 + $0x70] sm:$0x3]
      %v2099 = vld [vmem:[%s2083 + $0x78] sm:$0xff]
      %v2100 = vld [vmem:[%s2083 + $0x80] sm:$0xff]
      %v2101 = vld [vmem:[%s2083 + $0x88] sm:$0x3]
      %v2102 = vld [vmem:[%s2083 + $0x90] sm:$0xff]
      %v2103 = vld [vmem:[%s2083 + $0x98] sm:$0xff]
      %v2104 = vld [vmem:[%s2083 + $0xa0] sm:$0x3]
      %v2105 = vld [vmem:[%s2083 + $0xa8] sm:$0xff]
      %v2106 = vld [vmem:[%s2083 + $0xb0] sm:$0xff]
      %v2107 = vld [vmem:[%s2083 + $0xb8] sm:$0x3]
      %v2132 = vrot.slane %v2084, 1
      %v2133 = vrot.slane %v2085, 1
      %v2134 = vsel %vm440, %v2132, %v2133
      %v2135 = vrot.slane %v2086, 1
      %v2136 = vsel %vm440, %v2133, %v2135
      %v2137 = vrot.slane %v2087, 1
      %v2138 = vrot.slane %v2088, 1
      %v2139 = vsel %vm440, %v2137, %v2138
      %v2140 = vrot.slane %v2089, 1
      %v2141 = vsel %vm440, %v2138, %v2140
      %v2142 = vrot.slane %v2090, 1
      %v2143 = vrot.slane %v2091, 1
      %v2144 = vsel %vm440, %v2142, %v2143
      %v2145 = vrot.slane %v2092, 1
      %v2146 = vsel %vm440, %v2143, %v2145
      %v2147 = vrot.slane %v2093, 1
      %v2148 = vrot.slane %v2094, 1
      %v2149 = vsel %vm440, %v2147, %v2148
      %v2150 = vrot.slane %v2095, 1
      %v2151 = vsel %vm440, %v2148, %v2150
      %v2152 = vrot.slane %v2096, 1
      %v2153 = vrot.slane %v2097, 1
      %v2154 = vsel %vm440, %v2152, %v2153
      %v2155 = vrot.slane %v2098, 1
      %v2156 = vsel %vm440, %v2153, %v2155
      %v2157 = vrot.slane %v2099, 1
      %v2158 = vrot.slane %v2100, 1
      %v2159 = vsel %vm440, %v2157, %v2158
      %v2160 = vrot.slane %v2101, 1
      %v2161 = vsel %vm440, %v2158, %v2160
      %v2162 = vrot.slane %v2102, 1
      %v2163 = vrot.slane %v2103, 1
      %v2164 = vsel %vm440, %v2162, %v2163
      %v2165 = vrot.slane %v2104, 1
      %v2166 = vsel %vm440, %v2163, %v2165
      %v2167 = vrot.slane %v2105, 1
      %v2168 = vrot.slane %v2106, 1
      %v2169 = vsel %vm440, %v2167, %v2168
      %v2170 = vrot.slane %v2107, 1
      %v2171 = vsel %vm440, %v2168, %v2170
      %2172 = vrot.lane.b32.xlu0 %v2134, 8
      %v2173 = vpop.permute.xlu0 %2172
      %2174 = vrot.lane.b32.xlu0 %v2136, 8
      %v2175 = vpop.permute.xlu0 %2174
      %2176 = vrot.lane.b32.xlu0 %v2139, 8
      %v2177 = vpop.permute.xlu0 %2176
      %2178 = vrot.lane.b32.xlu0 %v2141, 8
      %v2179 = vpop.permute.xlu0 %2178
      %2180 = vrot.lane.b32.xlu0 %v2144, 8
      %v2181 = vpop.permute.xlu0 %2180
      %2182 = vrot.lane.b32.xlu0 %v2146, 8
      %v2183 = vpop.permute.xlu0 %2182
      %2184 = vrot.lane.b32.xlu0 %v2149, 8
      %v2185 = vpop.permute.xlu0 %2184
      %2186 = vrot.lane.b32.xlu0 %v2151, 8
      %v2187 = vpop.permute.xlu0 %2186
      %2188 = vrot.lane.b32.xlu0 %v2154, 8
      %v2189 = vpop.permute.xlu0 %2188
      %2190 = vrot.lane.b32.xlu0 %v2156, 8
      %v2191 = vpop.permute.xlu0 %2190
      %2192 = vrot.lane.b32.xlu0 %v2159, 8
      %v2193 = vpop.permute.xlu0 %2192
      %2194 = vrot.lane.b32.xlu0 %v2161, 8
      %v2195 = vpop.permute.xlu0 %2194
      %2196 = vrot.lane.b32.xlu0 %v2164, 8
      %v2197 = vpop.permute.xlu0 %2196
      %2198 = vrot.lane.b32.xlu0 %v2166, 8
      %v2199 = vpop.permute.xlu0 %2198
      %2200 = vrot.lane.b32.xlu0 %v2169, 8
      %v2201 = vpop.permute.xlu0 %2200
      %2202 = vrot.lane.b32.xlu0 %v2171, 8
      %v2203 = vpop.permute.xlu0 %2202
      %v2220 = vrot.slane %v2084, 2
      %v2221 = vrot.slane %v2085, 2
      %v2222 = vsel %vm551, %v2220, %v2221
      %v2223 = vrot.slane %v2086, 2
      %v2224 = vsel %vm551, %v2221, %v2223
      %v2225 = vrot.slane %v2087, 2
      %v2226 = vrot.slane %v2088, 2
      %v2227 = vsel %vm551, %v2225, %v2226
      %v2228 = vrot.slane %v2089, 2
      %v2229 = vsel %vm551, %v2226, %v2228
      %v2230 = vrot.slane %v2090, 2
      %v2231 = vrot.slane %v2091, 2
      %v2232 = vsel %vm551, %v2230, %v2231
      %v2233 = vrot.slane %v2092, 2
      %v2234 = vsel %vm551, %v2231, %v2233
      %v2235 = vrot.slane %v2093, 2
      %v2236 = vrot.slane %v2094, 2
      %v2237 = vsel %vm551, %v2235, %v2236
      %v2238 = vrot.slane %v2095, 2
      %v2239 = vsel %vm551, %v2236, %v2238
      %v2240 = vrot.slane %v2096, 2
      %v2241 = vrot.slane %v2097, 2
      %v2242 = vsel %vm551, %v2240, %v2241
      %v2243 = vrot.slane %v2098, 2
      %v2244 = vsel %vm551, %v2241, %v2243
      %v2245 = vrot.slane %v2099, 2
      %v2246 = vrot.slane %v2100, 2
      %v2247 = vsel %vm551, %v2245, %v2246
      %v2248 = vrot.slane %v2101, 2
      %v2249 = vsel %vm551, %v2246, %v2248
      %v2250 = vrot.slane %v2102, 2
      %v2251 = vrot.slane %v2103, 2
      %v2252 = vsel %vm551, %v2250, %v2251
      %v2253 = vrot.slane %v2104, 2
      %v2254 = vsel %vm551, %v2251, %v2253
      %v2255 = vrot.slane %v2105, 2
      %v2256 = vrot.slane %v2106, 2
      %v2257 = vsel %vm551, %v2255, %v2256
      %v2258 = vrot.slane %v2107, 2
      %v2259 = vsel %vm551, %v2256, %v2258
      %2260 = vrot.lane.b32.xlu0 %v2222, 16
      %v2261 = vpop.permute.xlu0 %2260
      %2262 = vrot.lane.b32.xlu0 %v2224, 16
      %v2263 = vpop.permute.xlu0 %2262
      %2264 = vrot.lane.b32.xlu0 %v2227, 16
      %v2265 = vpop.permute.xlu0 %2264
      %2266 = vrot.lane.b32.xlu0 %v2229, 16
      %v2267 = vpop.permute.xlu0 %2266
      %2268 = vrot.lane.b32.xlu0 %v2232, 16
      %v2269 = vpop.permute.xlu0 %2268
      %2270 = vrot.lane.b32.xlu0 %v2234, 16
      %v2271 = vpop.permute.xlu0 %2270
      %2272 = vrot.lane.b32.xlu0 %v2237, 16
      %v2273 = vpop.permute.xlu0 %2272
      %2274 = vrot.lane.b32.xlu0 %v2239, 16
      %v2275 = vpop.permute.xlu0 %2274
      %2276 = vrot.lane.b32.xlu0 %v2242, 16
      %v2277 = vpop.permute.xlu0 %2276
      %2278 = vrot.lane.b32.xlu0 %v2244, 16
      %v2279 = vpop.permute.xlu0 %2278
      %2280 = vrot.lane.b32.xlu0 %v2247, 16
      %v2281 = vpop.permute.xlu0 %2280
      %2282 = vrot.lane.b32.xlu0 %v2249, 16
      %v2283 = vpop.permute.xlu0 %2282
      %2284 = vrot.lane.b32.xlu0 %v2252, 16
      %v2285 = vpop.permute.xlu0 %2284
      %2286 = vrot.lane.b32.xlu0 %v2254, 16
      %v2287 = vpop.permute.xlu0 %2286
      %2288 = vrot.lane.b32.xlu0 %v2257, 16
      %v2289 = vpop.permute.xlu0 %2288
      %2290 = vrot.lane.b32.xlu0 %v2259, 16
      %v2291 = vpop.permute.xlu0 %2290
      %v2308 = vsel %vm683, %v2084, %v2173
      %v2309 = vsel %vm683, %v2085, %v2175
      %v2310 = vsel %vm683, %v2087, %v2177
      %v2311 = vsel %vm683, %v2088, %v2179
      %v2312 = vsel %vm683, %v2090, %v2181
      %v2313 = vsel %vm683, %v2091, %v2183
      %v2314 = vsel %vm683, %v2093, %v2185
      %v2315 = vsel %vm683, %v2094, %v2187
      %v2316 = vsel %vm683, %v2096, %v2189
      %v2317 = vsel %vm683, %v2097, %v2191
      %v2318 = vsel %vm683, %v2099, %v2193
      %v2319 = vsel %vm683, %v2100, %v2195
      %v2320 = vsel %vm683, %v2102, %v2197
      %v2321 = vsel %vm683, %v2103, %v2199
      %v2322 = vsel %vm683, %v2105, %v2201
      %v2323 = vsel %vm683, %v2106, %v2203
      %v2324 = vsel %vm1853, %v2308, %v2261
      %v2325 = vsel %vm1853, %v2309, %v2263
      %v2326 = vsel %vm1853, %v2310, %v2265
      %v2327 = vsel %vm1853, %v2311, %v2267
      %v2328 = vsel %vm1853, %v2312, %v2269
      %v2329 = vsel %vm1853, %v2313, %v2271
      %v2330 = vsel %vm1853, %v2314, %v2273
      %v2331 = vsel %vm1853, %v2315, %v2275
      %v2332 = vsel %vm1853, %v2316, %v2277
      %v2333 = vsel %vm1853, %v2317, %v2279
      %v2334 = vsel %vm1853, %v2318, %v2281
      %v2335 = vsel %vm1853, %v2319, %v2283
      %v2336 = vsel %vm1853, %v2320, %v2285
      %v2337 = vsel %vm1853, %v2321, %v2287
      %v2338 = vsel %vm1853, %v2322, %v2289
      %v2339 = vsel %vm1853, %v2323, %v2291
      %s2340 = scalar_lea.vmem %s4, 24
      %v2341 = vld [vmem:[%s2340] sm:$0xff]
      %v2342 = vld [vmem:[%s2340 + $0x8] sm:$0xff]
      %v2343 = vld [vmem:[%s2340 + $0x10] sm:$0xff]
      %v2345 = vsel %vm1873, %v2324, 0
      %v2348 = vsel %vm1873, %v2325, 0
      %v2351 = vsel %vm1873, %v2326, 0
      %v2354 = vsel %vm1873, %v2327, 0
      %v2357 = vsel %vm1873, %v2328, 0
      %v2360 = vsel %vm1873, %v2329, 0
      %v2363 = vsel %vm1873, %v2330, 0
      %v2366 = vsel %vm1873, %v2331, 0
      %v2369 = vsel %vm1873, %v2332, 0
      %v2372 = vsel %vm1873, %v2333, 0
      %v2375 = vsel %vm1873, %v2334, 0
      %v2378 = vsel %vm1873, %v2335, 0
      %v2381 = vsel %vm1873, %v2336, 0
      %v2384 = vsel %vm1873, %v2337, 0
      %v2387 = vsel %vm1873, %v2338, 0
      %v2390 = vsel %vm1873, %v2339, 0
      %2392 = vmatprep.subr.mxu0 0.0
      %2393 = vmatpush1.msra.mxu0 %v2341
      %2394 = vmatprep.subr.mxu0 0.0
      %2395 = vmatpush1.msra.mxu0 %v2342
      %2396 = vmatprep.subr.mxu0 0.0
      %2397 = vmatpush1.msra.mxu0 %v2343
      %2398 = vmatprep.subr.mxu0 0.0
      %2399 = vmatpush1.msra.mxu0 0.0
      %2400 = vmatprep.subr.mxu0 0.0
      %2401 = vmatpush1.msra.mxu0 0.0
      %2402 = vmatprep.subr.mxu0 0.0
      %2403 = vmatpush1.msra.mxu0 0.0
      %2404 = vmatprep.subr.mxu0 0.0
      %2405 = vmatpush1.msra.mxu0 0.0
      %2406 = vmatprep.subr.mxu0 0.0
      %2407 = vmatpush1.msra.mxu0 0.0
      %2408 = vmatprep.subr.mxu0 0.0
      %2409 = vmatpush1.msra.mxu0 0.0
      %2410 = vmatprep.subr.mxu0 0.0
      %2411 = vmatpush1.msra.mxu0 0.0
      %2412 = vmatprep.subr.mxu0 0.0
      %2413 = vmatpush1.msra.mxu0 0.0
      %2414 = vmatprep.subr.mxu0 0.0
      %2415 = vmatpush1.msra.mxu0 0.0
      %2416 = vmatprep.subr.mxu0 0.0
      %2417 = vmatpush1.msra.mxu0 0.0
      %2418 = vmatprep.subr.mxu0 0.0
      %2419 = vmatpush1.msra.mxu0 0.0
      %2420 = vmatprep.subr.mxu0 0.0
      %2421 = vmatpush1.msra.mxu0 0.0
      %2422 = vmatprep.subr.mxu0 0.0
      %2423 = vmatpush1.msra.mxu0 0.0
      %2424 = vmatprep.subr.mxu0 0.0
      %2425 = vmatpush1.msra.mxu0 0.0
      %2426 = vmatprep.subr.mxu0 0.0
      %2427 = vmatpush1.msra.mxu0 0.0
      %2428 = vmatprep.subr.mxu0 0.0
      %2429 = vmatpush1.msra.mxu0 0.0
      %2430 = vmatprep.subr.mxu0 0.0
      %2431 = vmatpush1.msra.mxu0 0.0
      %2432 = vmatprep.subr.mxu0 0.0
      %2433 = vmatpush1.msra.mxu0 0.0
      %2434 = vmatprep.subr.mxu0 0.0
      %2435 = vmatpush1.msra.mxu0 0.0
      %2436 = vmatprep.subr.mxu0 0.0
      %2437 = vmatpush1.msra.mxu0 0.0
      %2438 = vmatprep.subr.mxu0 0.0
      %2439 = vmatpush1.msra.mxu0 0.0
      %2440 = vmatprep.subr.mxu0 0.0
      %2441 = vmatpush1.msra.mxu0 0.0
      %2442 = vmatprep.subr.mxu0 0.0
      %2443 = vmatpush1.msra.mxu0 0.0
      %2444 = vmatprep.subr.mxu0 0.0
      %2445 = vmatpush1.msra.mxu0 0.0
      %2446 = vmatprep.subr.mxu0 0.0
      %2447 = vmatpush1.msra.mxu0 0.0
      %2448 = vmatprep.subr.mxu0 0.0
      %2449 = vmatpush1.msra.mxu0 0.0
      %2450 = vmatprep.subr.mxu0 0.0
      %2451 = vmatpush1.msra.mxu0 0.0
      %2452 = vmatprep.subr.mxu0 0.0
      %2453 = vmatpush1.msra.mxu0 0.0
      %2454 = vmatprep.subr.mxu0 0.0
      %2455 = vmatpush1.msra.mxu0 0.0
      %2456 = vmatprep.mubr.f32.mxu0 0.0
      %2457 = vmatmul.mubr.f32.gmra.mrb[0].mxu0 %v2345
      %v2458 = vpop.f32.mrb[0].mxu0
      %v2459 = vadd.f32 0.0, %v2458
      %v2460 = vpop.f32.mrb[0].mxu0
      %2461 = vmatprep.mubr.f32.mxu0 0.0
      %2462 = vmatmul.mubr.f32.gmra.mrb[0].mxu0 %v2348
      %v2463 = vpop.f32.mrb[0].mxu0
      %v2464 = vadd.f32 0.0, %v2463
      %v2465 = vpop.f32.mrb[0].mxu0
      %2466 = vmatprep.mubr.f32.mxu0 0.0
      %2467 = vmatmul.mubr.f32.gmra.mrb[0].mxu0 %v2351
      %v2468 = vpop.f32.mrb[0].mxu0
      %v2469 = vadd.f32 0.0, %v2468
      %v2470 = vpop.f32.mrb[0].mxu0
      %2471 = vmatprep.mubr.f32.mxu0 0.0
      %2472 = vmatmul.mubr.f32.gmra.mrb[0].mxu0 %v2354
      %v2473 = vpop.f32.mrb[0].mxu0
      %v2474 = vadd.f32 0.0, %v2473
      %v2475 = vpop.f32.mrb[0].mxu0
      %2476 = vmatprep.mubr.f32.mxu0 0.0
      %2477 = vmatmul.mubr.f32.gmra.mrb[0].mxu0 %v2357
      %v2478 = vpop.f32.mrb[0].mxu0
      %v2479 = vadd.f32 0.0, %v2478
      %v2480 = vpop.f32.mrb[0].mxu0
      %2481 = vmatprep.mubr.f32.mxu0 0.0
      %2482 = vmatmul.mubr.f32.gmra.mrb[0].mxu0 %v2360
      %v2483 = vpop.f32.mrb[0].mxu0
      %v2484 = vadd.f32 0.0, %v2483
      %v2485 = vpop.f32.mrb[0].mxu0
      %2486 = vmatprep.mubr.f32.mxu0 0.0
      %2487 = vmatmul.mubr.f32.gmra.mrb[0].mxu0 %v2363
      %v2488 = vpop.f32.mrb[0].mxu0
      %v2489 = vadd.f32 0.0, %v2488
      %v2490 = vpop.f32.mrb[0].mxu0
      %2491 = vmatprep.mubr.f32.mxu0 0.0
      %2492 = vmatmul.mubr.f32.gmra.mrb[0].mxu0 %v2366
      %v2493 = vpop.f32.mrb[0].mxu0
      %v2494 = vadd.f32 0.0, %v2493
      %v2495 = vpop.f32.mrb[0].mxu0
      %2496 = vmatprep.mubr.f32.mxu0 0.0
      %2497 = vmatmul.mubr.f32.gmra.mrb[0].mxu0 %v2369
      %v2498 = vpop.f32.mrb[0].mxu0
      %v2499 = vadd.f32 0.0, %v2498
      %v2500 = vpop.f32.mrb[0].mxu0
      %2501 = vmatprep.mubr.f32.mxu0 0.0
      %2502 = vmatmul.mubr.f32.gmra.mrb[0].mxu0 %v2372
      %v2503 = vpop.f32.mrb[0].mxu0
      %v2504 = vadd.f32 0.0, %v2503
      %v2505 = vpop.f32.mrb[0].mxu0
      %2506 = vmatprep.mubr.f32.mxu0 0.0
      %2507 = vmatmul.mubr.f32.gmra.mrb[0].mxu0 %v2375
      %v2508 = vpop.f32.mrb[0].mxu0
      %v2509 = vadd.f32 0.0, %v2508
      %v2510 = vpop.f32.mrb[0].mxu0
      %2511 = vmatprep.mubr.f32.mxu0 0.0
      %2512 = vmatmul.mubr.f32.gmra.mrb[0].mxu0 %v2378
      %v2513 = vpop.f32.mrb[0].mxu0
      %v2514 = vadd.f32 0.0, %v2513
      %v2515 = vpop.f32.mrb[0].mxu0
      %2516 = vmatprep.mubr.f32.mxu0 0.0
      %2517 = vmatmul.mubr.f32.gmra.mrb[0].mxu0 %v2381
      %v2518 = vpop.f32.mrb[0].mxu0
      %v2519 = vadd.f32 0.0, %v2518
      %v2520 = vpop.f32.mrb[0].mxu0
      %2521 = vmatprep.mubr.f32.mxu0 0.0
      %2522 = vmatmul.mubr.f32.gmra.mrb[0].mxu0 %v2384
      %v2523 = vpop.f32.mrb[0].mxu0
      %v2524 = vadd.f32 0.0, %v2523
      %v2525 = vpop.f32.mrb[0].mxu0
      %2526 = vmatprep.mubr.f32.mxu0 0.0
      %2527 = vmatmul.mubr.f32.gmra.mrb[0].mxu0 %v2387
      %v2528 = vpop.f32.mrb[0].mxu0
      %v2529 = vadd.f32 0.0, %v2528
      %v2530 = vpop.f32.mrb[0].mxu0
      %2531 = vmatprep.mubr.f32.mxu0 0.0
      %2532 = vmatmul.mubr.f32.gmra.mrb[0].mxu0 %v2390
      %v2533 = vpop.f32.mrb[0].mxu0
      %v2534 = vadd.f32 0.0, %v2533
      %v2535 = vpop.f32.mrb[0].mxu0
      %2536 = vdwg.mxu0
      %v2537 = vld [vmem:[#allocation4] sm:$0xff]
      %v2538 = vld [vmem:[#allocation4 + $0x8] sm:$0xff]
      %v2539 = vld [vmem:[#allocation4 + $0x10] sm:$0xff]
      %v2540 = vld [vmem:[#allocation4 + $0x18] sm:$0xff]
      %v2541 = vld [vmem:[#allocation4 + $0x20] sm:$0xff]
      %v2542 = vld [vmem:[#allocation4 + $0x28] sm:$0xff]
      %v2543 = vld [vmem:[#allocation4 + $0x30] sm:$0xff]
      %v2544 = vld [vmem:[#allocation4 + $0x38] sm:$0xff]
      %v2545 = vld [vmem:[#allocation4 + $0x40] sm:$0xff]
      %v2546 = vld [vmem:[#allocation4 + $0x48] sm:$0xff]
      %v2547 = vld [vmem:[#allocation4 + $0x50] sm:$0xff]
      %v2548 = vld [vmem:[#allocation4 + $0x58] sm:$0xff]
      %v2549 = vld [vmem:[#allocation4 + $0x60] sm:$0xff]
      %v2550 = vld [vmem:[#allocation4 + $0x68] sm:$0xff]
      %v2551 = vld [vmem:[#allocation4 + $0x70] sm:$0xff]
      %v2552 = vld [vmem:[#allocation4 + $0x78] sm:$0xff]
      %v2553 = vadd.f32 %v2537, %v2459
      %v2554 = vadd.f32 %v2538, %v2464
      %v2555 = vadd.f32 %v2539, %v2469
      %v2556 = vadd.f32 %v2540, %v2474
      %v2557 = vadd.f32 %v2541, %v2479
      %v2558 = vadd.f32 %v2542, %v2484
      %v2559 = vadd.f32 %v2543, %v2489
      %v2560 = vadd.f32 %v2544, %v2494
      %v2561 = vadd.f32 %v2545, %v2499
      %v2562 = vadd.f32 %v2546, %v2504
      %v2563 = vadd.f32 %v2547, %v2509
      %v2564 = vadd.f32 %v2548, %v2514
      %v2565 = vadd.f32 %v2549, %v2519
      %v2566 = vadd.f32 %v2550, %v2524
      %v2567 = vadd.f32 %v2551, %v2529
      %v2568 = vadd.f32 %v2552, %v2534
      %2569 = vst.msk [vmem:[#allocation4] sm:$0xff] %vm683, %v2553
      %2570 = vst.msk [vmem:[#allocation4 + $0x8] sm:$0xff] %vm683, %v2554
      %2571 = vst.msk [vmem:[#allocation4 + $0x10] sm:$0xff] %vm683, %v2555
      %2572 = vst.msk [vmem:[#allocation4 + $0x18] sm:$0xff] %vm683, %v2556
      %2573 = vst.msk [vmem:[#allocation4 + $0x20] sm:$0xff] %vm683, %v2557
      %2574 = vst.msk [vmem:[#allocation4 + $0x28] sm:$0xff] %vm683, %v2558
      %2575 = vst.msk [vmem:[#allocation4 + $0x30] sm:$0xff] %vm683, %v2559
      %2576 = vst.msk [vmem:[#allocation4 + $0x38] sm:$0xff] %vm683, %v2560
      %2577 = vst.msk [vmem:[#allocation4 + $0x40] sm:$0xff] %vm683, %v2561
      %2578 = vst.msk [vmem:[#allocation4 + $0x48] sm:$0xff] %vm683, %v2562
      %2579 = vst.msk [vmem:[#allocation4 + $0x50] sm:$0xff] %vm683, %v2563
      %2580 = vst.msk [vmem:[#allocation4 + $0x58] sm:$0xff] %vm683, %v2564
      %2581 = vst.msk [vmem:[#allocation4 + $0x60] sm:$0xff] %vm683, %v2565
      %2582 = vst.msk [vmem:[#allocation4 + $0x68] sm:$0xff] %vm683, %v2566
      %2583 = vst.msk [vmem:[#allocation4 + $0x70] sm:$0xff] %vm683, %v2567
      %2584 = vst.msk [vmem:[#allocation4 + $0x78] sm:$0xff] %vm683, %v2568
      %s2585 = scalar_lea.vmem [#allocation2], 48
      %v2586 = vld [vmem:[%s2585] sm:$0xff]
      %v2587 = vld [vmem:[%s2585 + $0x8] sm:$0xff]
      %v2588 = vld [vmem:[%s2585 + $0x10] sm:$0x3]
      %v2589 = vld [vmem:[%s2585 + $0x18] sm:$0xff]
      %v2590 = vld [vmem:[%s2585 + $0x20] sm:$0xff]
      %v2591 = vld [vmem:[%s2585 + $0x28] sm:$0x3]
      %v2592 = vld [vmem:[%s2585 + $0x30] sm:$0xff]
      %v2593 = vld [vmem:[%s2585 + $0x38] sm:$0xff]
      %v2594 = vld [vmem:[%s2585 + $0x40] sm:$0x3]
      %v2595 = vld [vmem:[%s2585 + $0x48] sm:$0xff]
      %v2596 = vld [vmem:[%s2585 + $0x50] sm:$0xff]
      %v2597 = vld [vmem:[%s2585 + $0x58] sm:$0x3]
      %v2598 = vld [vmem:[%s2585 + $0x60] sm:$0xff]
      %v2599 = vld [vmem:[%s2585 + $0x68] sm:$0xff]
      %v2600 = vld [vmem:[%s2585 + $0x70] sm:$0x3]
      %v2601 = vld [vmem:[%s2585 + $0x78] sm:$0xff]
      %v2602 = vld [vmem:[%s2585 + $0x80] sm:$0xff]
      %v2603 = vld [vmem:[%s2585 + $0x88] sm:$0x3]
      %v2604 = vld [vmem:[%s2585 + $0x90] sm:$0xff]
      %v2605 = vld [vmem:[%s2585 + $0x98] sm:$0xff]
      %v2606 = vld [vmem:[%s2585 + $0xa0] sm:$0x3]
      %v2607 = vld [vmem:[%s2585 + $0xa8] sm:$0xff]
      %v2608 = vld [vmem:[%s2585 + $0xb0] sm:$0xff]
      %v2609 = vld [vmem:[%s2585 + $0xb8] sm:$0x3]
      %v2634 = vrot.slane %v2586, 1
      %v2635 = vrot.slane %v2587, 1
      %v2636 = vsel %vm440, %v2634, %v2635
      %v2637 = vrot.slane %v2588, 1
      %v2638 = vsel %vm440, %v2635, %v2637
      %v2639 = vrot.slane %v2589, 1
      %v2640 = vrot.slane %v2590, 1
      %v2641 = vsel %vm440, %v2639, %v2640
      %v2642 = vrot.slane %v2591, 1
      %v2643 = vsel %vm440, %v2640, %v2642
      %v2644 = vrot.slane %v2592, 1
      %v2645 = vrot.slane %v2593, 1
      %v2646 = vsel %vm440, %v2644, %v2645
      %v2647 = vrot.slane %v2594, 1
      %v2648 = vsel %vm440, %v2645, %v2647
      %v2649 = vrot.slane %v2595, 1
      %v2650 = vrot.slane %v2596, 1
      %v2651 = vsel %vm440, %v2649, %v2650
      %v2652 = vrot.slane %v2597, 1
      %v2653 = vsel %vm440, %v2650, %v2652
      %v2654 = vrot.slane %v2598, 1
      %v2655 = vrot.slane %v2599, 1
      %v2656 = vsel %vm440, %v2654, %v2655
      %v2657 = vrot.slane %v2600, 1
      %v2658 = vsel %vm440, %v2655, %v2657
      %v2659 = vrot.slane %v2601, 1
      %v2660 = vrot.slane %v2602, 1
      %v2661 = vsel %vm440, %v2659, %v2660
      %v2662 = vrot.slane %v2603, 1
      %v2663 = vsel %vm440, %v2660, %v2662
      %v2664 = vrot.slane %v2604, 1
      %v2665 = vrot.slane %v2605, 1
      %v2666 = vsel %vm440, %v2664, %v2665
      %v2667 = vrot.slane %v2606, 1
      %v2668 = vsel %vm440, %v2665, %v2667
      %v2669 = vrot.slane %v2607, 1
      %v2670 = vrot.slane %v2608, 1
      %v2671 = vsel %vm440, %v2669, %v2670
      %v2672 = vrot.slane %v2609, 1
      %v2673 = vsel %vm440, %v2670, %v2672
      %2674 = vrot.lane.b32.xlu0 %v2636, 8
      %v2675 = vpop.permute.xlu0 %2674
      %2676 = vrot.lane.b32.xlu0 %v2638, 8
      %v2677 = vpop.permute.xlu0 %2676
      %2678 = vrot.lane.b32.xlu0 %v2641, 8
      %v2679 = vpop.permute.xlu0 %2678
      %2680 = vrot.lane.b32.xlu0 %v2643, 8
      %v2681 = vpop.permute.xlu0 %2680
      %2682 = vrot.lane.b32.xlu0 %v2646, 8
      %v2683 = vpop.permute.xlu0 %2682
      %2684 = vrot.lane.b32.xlu0 %v2648, 8
      %v2685 = vpop.permute.xlu0 %2684
      %2686 = vrot.lane.b32.xlu0 %v2651, 8
      %v2687 = vpop.permute.xlu0 %2686
      %2688 = vrot.lane.b32.xlu0 %v2653, 8
      %v2689 = vpop.permute.xlu0 %2688
      %2690 = vrot.lane.b32.xlu0 %v2656, 8
      %v2691 = vpop.permute.xlu0 %2690
      %2692 = vrot.lane.b32.xlu0 %v2658, 8
      %v2693 = vpop.permute.xlu0 %2692
      %2694 = vrot.lane.b32.xlu0 %v2661, 8
      %v2695 = vpop.permute.xlu0 %2694
      %2696 = vrot.lane.b32.xlu0 %v2663, 8
      %v2697 = vpop.permute.xlu0 %2696
      %2698 = vrot.lane.b32.xlu0 %v2666, 8
      %v2699 = vpop.permute.xlu0 %2698
      %2700 = vrot.lane.b32.xlu0 %v2668, 8
      %v2701 = vpop.permute.xlu0 %2700
      %2702 = vrot.lane.b32.xlu0 %v2671, 8
      %v2703 = vpop.permute.xlu0 %2702
      %2704 = vrot.lane.b32.xlu0 %v2673, 8
      %v2705 = vpop.permute.xlu0 %2704
      %v2722 = vrot.slane %v2586, 2
      %v2723 = vrot.slane %v2587, 2
      %v2724 = vsel %vm551, %v2722, %v2723
      %v2725 = vrot.slane %v2588, 2
      %v2726 = vsel %vm551, %v2723, %v2725
      %v2727 = vrot.slane %v2589, 2
      %v2728 = vrot.slane %v2590, 2
      %v2729 = vsel %vm551, %v2727, %v2728
      %v2730 = vrot.slane %v2591, 2
      %v2731 = vsel %vm551, %v2728, %v2730
      %v2732 = vrot.slane %v2592, 2
      %v2733 = vrot.slane %v2593, 2
      %v2734 = vsel %vm551, %v2732, %v2733
      %v2735 = vrot.slane %v2594, 2
      %v2736 = vsel %vm551, %v2733, %v2735
      %v2737 = vrot.slane %v2595, 2
      %v2738 = vrot.slane %v2596, 2
      %v2739 = vsel %vm551, %v2737, %v2738
      %v2740 = vrot.slane %v2597, 2
      %v2741 = vsel %vm551, %v2738, %v2740
      %v2742 = vrot.slane %v2598, 2
      %v2743 = vrot.slane %v2599, 2
      %v2744 = vsel %vm551, %v2742, %v2743
      %v2745 = vrot.slane %v2600, 2
      %v2746 = vsel %vm551, %v2743, %v2745
      %v2747 = vrot.slane %v2601, 2
      %v2748 = vrot.slane %v2602, 2
      %v2749 = vsel %vm551, %v2747, %v2748
      %v2750 = vrot.slane %v2603, 2
      %v2751 = vsel %vm551, %v2748, %v2750
      %v2752 = vrot.slane %v2604, 2
      %v2753 = vrot.slane %v2605, 2
      %v2754 = vsel %vm551, %v2752, %v2753
      %v2755 = vrot.slane %v2606, 2
      %v2756 = vsel %vm551, %v2753, %v2755
      %v2757 = vrot.slane %v2607, 2
      %v2758 = vrot.slane %v2608, 2
      %v2759 = vsel %vm551, %v2757, %v2758
      %v2760 = vrot.slane %v2609, 2
      %v2761 = vsel %vm551, %v2758, %v2760
      %2762 = vrot.lane.b32.xlu0 %v2724, 16
      %v2763 = vpop.permute.xlu0 %2762
      %2764 = vrot.lane.b32.xlu0 %v2726, 16
      %v2765 = vpop.permute.xlu0 %2764
      %2766 = vrot.lane.b32.xlu0 %v2729, 16
      %v2767 = vpop.permute.xlu0 %2766
      %2768 = vrot.lane.b32.xlu0 %v2731, 16
      %v2769 = vpop.permute.xlu0 %2768
      %2770 = vrot.lane.b32.xlu0 %v2734, 16
      %v2771 = vpop.permute.xlu0 %2770
      %2772 = vrot.lane.b32.xlu0 %v2736, 16
      %v2773 = vpop.permute.xlu0 %2772
      %2774 = vrot.lane.b32.xlu0 %v2739, 16
      %v2775 = vpop.permute.xlu0 %2774
      %2776 = vrot.lane.b32.xlu0 %v2741, 16
      %v2777 = vpop.permute.xlu0 %2776
      %2778 = vrot.lane.b32.xlu0 %v2744, 16
      %v2779 = vpop.permute.xlu0 %2778
      %2780 = vrot.lane.b32.xlu0 %v2746, 16
      %v2781 = vpop.permute.xlu0 %2780
      %2782 = vrot.lane.b32.xlu0 %v2749, 16
      %v2783 = vpop.permute.xlu0 %2782
      %2784 = vrot.lane.b32.xlu0 %v2751, 16
      %v2785 = vpop.permute.xlu0 %2784
      %2786 = vrot.lane.b32.xlu0 %v2754, 16
      %v2787 = vpop.permute.xlu0 %2786
      %2788 = vrot.lane.b32.xlu0 %v2756, 16
      %v2789 = vpop.permute.xlu0 %2788
      %2790 = vrot.lane.b32.xlu0 %v2759, 16
      %v2791 = vpop.permute.xlu0 %2790
      %2792 = vrot.lane.b32.xlu0 %v2761, 16
      %v2793 = vpop.permute.xlu0 %2792
      %v2810 = vsel %vm683, %v2586, %v2675
      %v2811 = vsel %vm683, %v2587, %v2677
      %v2812 = vsel %vm683, %v2589, %v2679
      %v2813 = vsel %vm683, %v2590, %v2681
      %v2814 = vsel %vm683, %v2592, %v2683
      %v2815 = vsel %vm683, %v2593, %v2685
      %v2816 = vsel %vm683, %v2595, %v2687
      %v2817 = vsel %vm683, %v2596, %v2689
      %v2818 = vsel %vm683, %v2598, %v2691
      %v2819 = vsel %vm683, %v2599, %v2693
      %v2820 = vsel %vm683, %v2601, %v2695
      %v2821 = vsel %vm683, %v2602, %v2697
      %v2822 = vsel %vm683, %v2604, %v2699
      %v2823 = vsel %vm683, %v2605, %v2701
      %v2824 = vsel %vm683, %v2607, %v2703
      %v2825 = vsel %vm683, %v2608, %v2705
      %v2826 = vsel %vm1853, %v2810, %v2763
      %v2827 = vsel %vm1853, %v2811, %v2765
      %v2828 = vsel %vm1853, %v2812, %v2767
      %v2829 = vsel %vm1853, %v2813, %v2769
      %v2830 = vsel %vm1853, %v2814, %v2771
      %v2831 = vsel %vm1853, %v2815, %v2773
      %v2832 = vsel %vm1853, %v2816, %v2775
      %v2833 = vsel %vm1853, %v2817, %v2777
      %v2834 = vsel %vm1853, %v2818, %v2779
      %v2835 = vsel %vm1853, %v2819, %v2781
      %v2836 = vsel %vm1853, %v2820, %v2783
      %v2837 = vsel %vm1853, %v2821, %v2785
      %v2838 = vsel %vm1853, %v2822, %v2787
      %v2839 = vsel %vm1853, %v2823, %v2789
      %v2840 = vsel %vm1853, %v2824, %v2791
      %v2841 = vsel %vm1853, %v2825, %v2793
      %s2842 = scalar_lea.vmem %s4, 48
      %v2843 = vld [vmem:[%s2842] sm:$0xff]
      %v2844 = vld [vmem:[%s2842 + $0x8] sm:$0xff]
      %v2845 = vld [vmem:[%s2842 + $0x10] sm:$0xff]
      %v2847 = vsel %vm1873, %v2826, 0
      %v2850 = vsel %vm1873, %v2827, 0
      %v2853 = vsel %vm1873, %v2828, 0
      %v2856 = vsel %vm1873, %v2829, 0
      %v2859 = vsel %vm1873, %v2830, 0
      %v2862 = vsel %vm1873, %v2831, 0
      %v2865 = vsel %vm1873, %v2832, 0
      %v2868 = vsel %vm1873, %v2833, 0
      %v2871 = vsel %vm1873, %v2834, 0
      %v2874 = vsel %vm1873, %v2835, 0
      %v2877 = vsel %vm1873, %v2836, 0
      %v2880 = vsel %vm1873, %v2837, 0
      %v2883 = vsel %vm1873, %v2838, 0
      %v2886 = vsel %vm1873, %v2839, 0
      %v2889 = vsel %vm1873, %v2840, 0
      %v2892 = vsel %vm1873, %v2841, 0
      %2894 = vmatprep.subr.mxu0 0.0
      %2895 = vmatpush1.msra.mxu0 %v2843
      %2896 = vmatprep.subr.mxu0 0.0
      %2897 = vmatpush1.msra.mxu0 %v2844
      %2898 = vmatprep.subr.mxu0 0.0
      %2899 = vmatpush1.msra.mxu0 %v2845
      %2900 = vmatprep.subr.mxu0 0.0
      %2901 = vmatpush1.msra.mxu0 0.0
      %2902 = vmatprep.subr.mxu0 0.0
      %2903 = vmatpush1.msra.mxu0 0.0
      %2904 = vmatprep.subr.mxu0 0.0
      %2905 = vmatpush1.msra.mxu0 0.0
      %2906 = vmatprep.subr.mxu0 0.0
      %2907 = vmatpush1.msra.mxu0 0.0
      %2908 = vmatprep.subr.mxu0 0.0
      %2909 = vmatpush1.msra.mxu0 0.0
      %2910 = vmatprep.subr.mxu0 0.0
      %2911 = vmatpush1.msra.mxu0 0.0
      %2912 = vmatprep.subr.mxu0 0.0
      %2913 = vmatpush1.msra.mxu0 0.0
      %2914 = vmatprep.subr.mxu0 0.0
      %2915 = vmatpush1.msra.mxu0 0.0
      %2916 = vmatprep.subr.mxu0 0.0
      %2917 = vmatpush1.msra.mxu0 0.0
      %2918 = vmatprep.subr.mxu0 0.0
      %2919 = vmatpush1.msra.mxu0 0.0
      %2920 = vmatprep.subr.mxu0 0.0
      %2921 = vmatpush1.msra.mxu0 0.0
      %2922 = vmatprep.subr.mxu0 0.0
      %2923 = vmatpush1.msra.mxu0 0.0
      %2924 = vmatprep.subr.mxu0 0.0
      %2925 = vmatpush1.msra.mxu0 0.0
      %2926 = vmatprep.subr.mxu0 0.0
      %2927 = vmatpush1.msra.mxu0 0.0
      %2928 = vmatprep.subr.mxu0 0.0
      %2929 = vmatpush1.msra.mxu0 0.0
      %2930 = vmatprep.subr.mxu0 0.0
      %2931 = vmatpush1.msra.mxu0 0.0
      %2932 = vmatprep.subr.mxu0 0.0
      %2933 = vmatpush1.msra.mxu0 0.0
      %2934 = vmatprep.subr.mxu0 0.0
      %2935 = vmatpush1.msra.mxu0 0.0
      %2936 = vmatprep.subr.mxu0 0.0
      %2937 = vmatpush1.msra.mxu0 0.0
      %2938 = vmatprep.subr.mxu0 0.0
      %2939 = vmatpush1.msra.mxu0 0.0
      %2940 = vmatprep.subr.mxu0 0.0
      %2941 = vmatpush1.msra.mxu0 0.0
      %2942 = vmatprep.subr.mxu0 0.0
      %2943 = vmatpush1.msra.mxu0 0.0
      %2944 = vmatprep.subr.mxu0 0.0
      %2945 = vmatpush1.msra.mxu0 0.0
      %2946 = vmatprep.subr.mxu0 0.0
      %2947 = vmatpush1.msra.mxu0 0.0
      %2948 = vmatprep.subr.mxu0 0.0
      %2949 = vmatpush1.msra.mxu0 0.0
      %2950 = vmatprep.subr.mxu0 0.0
      %2951 = vmatpush1.msra.mxu0 0.0
      %2952 = vmatprep.subr.mxu0 0.0
      %2953 = vmatpush1.msra.mxu0 0.0
      %2954 = vmatprep.subr.mxu0 0.0
      %2955 = vmatpush1.msra.mxu0 0.0
      %2956 = vmatprep.subr.mxu0 0.0
      %2957 = vmatpush1.msra.mxu0 0.0
      %2958 = vmatprep.mubr.f32.mxu0 0.0
      %2959 = vmatmul.mubr.f32.gmra.mrb[0].mxu0 %v2847
      %v2960 = vpop.f32.mrb[0].mxu0
      %v2961 = vadd.f32 0.0, %v2960
      %v2962 = vpop.f32.mrb[0].mxu0
      %2963 = vmatprep.mubr.f32.mxu0 0.0
      %2964 = vmatmul.mubr.f32.gmra.mrb[0].mxu0 %v2850
      %v2965 = vpop.f32.mrb[0].mxu0
      %v2966 = vadd.f32 0.0, %v2965
      %v2967 = vpop.f32.mrb[0].mxu0
      %2968 = vmatprep.mubr.f32.mxu0 0.0
      %2969 = vmatmul.mubr.f32.gmra.mrb[0].mxu0 %v2853
      %v2970 = vpop.f32.mrb[0].mxu0
      %v2971 = vadd.f32 0.0, %v2970
      %v2972 = vpop.f32.mrb[0].mxu0
      %2973 = vmatprep.mubr.f32.mxu0 0.0
      %2974 = vmatmul.mubr.f32.gmra.mrb[0].mxu0 %v2856
      %v2975 = vpop.f32.mrb[0].mxu0
      %v2976 = vadd.f32 0.0, %v2975
      %v2977 = vpop.f32.mrb[0].mxu0
      %2978 = vmatprep.mubr.f32.mxu0 0.0
      %2979 = vmatmul.mubr.f32.gmra.mrb[0].mxu0 %v2859
      %v2980 = vpop.f32.mrb[0].mxu0
      %v2981 = vadd.f32 0.0, %v2980
      %v2982 = vpop.f32.mrb[0].mxu0
      %2983 = vmatprep.mubr.f32.mxu0 0.0
      %2984 = vmatmul.mubr.f32.gmra.mrb[0].mxu0 %v2862
      %v2985 = vpop.f32.mrb[0].mxu0
      %v2986 = vadd.f32 0.0, %v2985
      %v2987 = vpop.f32.mrb[0].mxu0
      %2988 = vmatprep.mubr.f32.mxu0 0.0
      %2989 = vmatmul.mubr.f32.gmra.mrb[0].mxu0 %v2865
      %v2990 = vpop.f32.mrb[0].mxu0
      %v2991 = vadd.f32 0.0, %v2990
      %v2992 = vpop.f32.mrb[0].mxu0
      %2993 = vmatprep.mubr.f32.mxu0 0.0
      %2994 = vmatmul.mubr.f32.gmra.mrb[0].mxu0 %v2868
      %v2995 = vpop.f32.mrb[0].mxu0
      %v2996 = vadd.f32 0.0, %v2995
      %v2997 = vpop.f32.mrb[0].mxu0
      %2998 = vmatprep.mubr.f32.mxu0 0.0
      %2999 = vmatmul.mubr.f32.gmra.mrb[0].mxu0 %v2871
      %v3000 = vpop.f32.mrb[0].mxu0
      %v3001 = vadd.f32 0.0, %v3000
      %v3002 = vpop.f32.mrb[0].mxu0
      %3003 = vmatprep.mubr.f32.mxu0 0.0
      %3004 = vmatmul.mubr.f32.gmra.mrb[0].mxu0 %v2874
      %v3005 = vpop.f32.mrb[0].mxu0
      %v3006 = vadd.f32 0.0, %v3005
      %v3007 = vpop.f32.mrb[0].mxu0
      %3008 = vmatprep.mubr.f32.mxu0 0.0
      %3009 = vmatmul.mubr.f32.gmra.mrb[0].mxu0 %v2877
      %v3010 = vpop.f32.mrb[0].mxu0
      %v3011 = vadd.f32 0.0, %v3010
      %v3012 = vpop.f32.mrb[0].mxu0
      %3013 = vmatprep.mubr.f32.mxu0 0.0
      %3014 = vmatmul.mubr.f32.gmra.mrb[0].mxu0 %v2880
      %v3015 = vpop.f32.mrb[0].mxu0
      %v3016 = vadd.f32 0.0, %v3015
      %v3017 = vpop.f32.mrb[0].mxu0
      %3018 = vmatprep.mubr.f32.mxu0 0.0
      %3019 = vmatmul.mubr.f32.gmra.mrb[0].mxu0 %v2883
      %v3020 = vpop.f32.mrb[0].mxu0
      %v3021 = vadd.f32 0.0, %v3020
      %v3022 = vpop.f32.mrb[0].mxu0
      %3023 = vmatprep.mubr.f32.mxu0 0.0
      %3024 = vmatmul.mubr.f32.gmra.mrb[0].mxu0 %v2886
      %v3025 = vpop.f32.mrb[0].mxu0
      %v3026 = vadd.f32 0.0, %v3025
      %v3027 = vpop.f32.mrb[0].mxu0
      %3028 = vmatprep.mubr.f32.mxu0 0.0
      %3029 = vmatmul.mubr.f32.gmra.mrb[0].mxu0 %v2889
      %v3030 = vpop.f32.mrb[0].mxu0
      %v3031 = vadd.f32 0.0, %v3030
      %v3032 = vpop.f32.mrb[0].mxu0
      %3033 = vmatprep.mubr.f32.mxu0 0.0
      %3034 = vmatmul.mubr.f32.gmra.mrb[0].mxu0 %v2892
      %v3035 = vpop.f32.mrb[0].mxu0
      %v3036 = vadd.f32 0.0, %v3035
      %v3037 = vpop.f32.mrb[0].mxu0
      %3038 = vdwg.mxu0
      %v3039 = vld [vmem:[#allocation4] sm:$0xff]
      %v3040 = vld [vmem:[#allocation4 + $0x8] sm:$0xff]
      %v3041 = vld [vmem:[#allocation4 + $0x10] sm:$0xff]
      %v3042 = vld [vmem:[#allocation4 + $0x18] sm:$0xff]
      %v3043 = vld [vmem:[#allocation4 + $0x20] sm:$0xff]
      %v3044 = vld [vmem:[#allocation4 + $0x28] sm:$0xff]
      %v3045 = vld [vmem:[#allocation4 + $0x30] sm:$0xff]
      %v3046 = vld [vmem:[#allocation4 + $0x38] sm:$0xff]
      %v3047 = vld [vmem:[#allocation4 + $0x40] sm:$0xff]
      %v3048 = vld [vmem:[#allocation4 + $0x48] sm:$0xff]
      %v3049 = vld [vmem:[#allocation4 + $0x50] sm:$0xff]
      %v3050 = vld [vmem:[#allocation4 + $0x58] sm:$0xff]
      %v3051 = vld [vmem:[#allocation4 + $0x60] sm:$0xff]
      %v3052 = vld [vmem:[#allocation4 + $0x68] sm:$0xff]
      %v3053 = vld [vmem:[#allocation4 + $0x70] sm:$0xff]
      %v3054 = vld [vmem:[#allocation4 + $0x78] sm:$0xff]
      %v3055 = vadd.f32 %v3039, %v2961
      %v3056 = vadd.f32 %v3040, %v2966
      %v3057 = vadd.f32 %v3041, %v2971
      %v3058 = vadd.f32 %v3042, %v2976
      %v3059 = vadd.f32 %v3043, %v2981
      %v3060 = vadd.f32 %v3044, %v2986
      %v3061 = vadd.f32 %v3045, %v2991
      %v3062 = vadd.f32 %v3046, %v2996
      %v3063 = vadd.f32 %v3047, %v3001
      %v3064 = vadd.f32 %v3048, %v3006
      %v3065 = vadd.f32 %v3049, %v3011
      %v3066 = vadd.f32 %v3050, %v3016
      %v3067 = vadd.f32 %v3051, %v3021
      %v3068 = vadd.f32 %v3052, %v3026
      %v3069 = vadd.f32 %v3053, %v3031
      %v3070 = vadd.f32 %v3054, %v3036
      %3071 = vst.msk [vmem:[#allocation4] sm:$0xff] %vm683, %v3055
      %3072 = vst.msk [vmem:[#allocation4 + $0x8] sm:$0xff] %vm683, %v3056
      %3073 = vst.msk [vmem:[#allocation4 + $0x10] sm:$0xff] %vm683, %v3057
      %3074 = vst.msk [vmem:[#allocation4 + $0x18] sm:$0xff] %vm683, %v3058
      %3075 = vst.msk [vmem:[#allocation4 + $0x20] sm:$0xff] %vm683, %v3059
      %3076 = vst.msk [vmem:[#allocation4 + $0x28] sm:$0xff] %vm683, %v3060
      %3077 = vst.msk [vmem:[#allocation4 + $0x30] sm:$0xff] %vm683, %v3061
      %3078 = vst.msk [vmem:[#allocation4 + $0x38] sm:$0xff] %vm683, %v3062
      %3079 = vst.msk [vmem:[#allocation4 + $0x40] sm:$0xff] %vm683, %v3063
      %3080 = vst.msk [vmem:[#allocation4 + $0x48] sm:$0xff] %vm683, %v3064
      %3081 = vst.msk [vmem:[#allocation4 + $0x50] sm:$0xff] %vm683, %v3065
      %3082 = vst.msk [vmem:[#allocation4 + $0x58] sm:$0xff] %vm683, %v3066
      %3083 = vst.msk [vmem:[#allocation4 + $0x60] sm:$0xff] %vm683, %v3067
      %3084 = vst.msk [vmem:[#allocation4 + $0x68] sm:$0xff] %vm683, %v3068
      %3085 = vst.msk [vmem:[#allocation4 + $0x70] sm:$0xff] %vm683, %v3069
      %3086 = vst.msk [vmem:[#allocation4 + $0x78] sm:$0xff] %vm683, %v3070
      %v3087 = vld [vmem:[#allocation4] sm:$0xff]
      %v3088 = vld [vmem:[#allocation4 + $0x8] sm:$0xff]
      %v3089 = vld [vmem:[#allocation4 + $0x10] sm:$0xff]
      %v3090 = vld [vmem:[#allocation4 + $0x18] sm:$0xff]
      %v3091 = vld [vmem:[#allocation4 + $0x20] sm:$0xff]
      %v3092 = vld [vmem:[#allocation4 + $0x28] sm:$0xff]
      %v3093 = vld [vmem:[#allocation4 + $0x30] sm:$0xff]
      %v3094 = vld [vmem:[#allocation4 + $0x38] sm:$0xff]
      %v3095 = vld [vmem:[#allocation4 + $0x40] sm:$0xff]
      %v3096 = vld [vmem:[#allocation4 + $0x48] sm:$0xff]
      %v3097 = vld [vmem:[#allocation4 + $0x50] sm:$0xff]
      %v3098 = vld [vmem:[#allocation4 + $0x58] sm:$0xff]
      %v3099 = vld [vmem:[#allocation4 + $0x60] sm:$0xff]
      %v3100 = vld [vmem:[#allocation4 + $0x68] sm:$0xff]
      %v3101 = vld [vmem:[#allocation4 + $0x70] sm:$0xff]
      %v3102 = vld [vmem:[#allocation4 + $0x78] sm:$0xff]
      %v3103 = vld [vmem:[%s5] sm:$0x1]
      %v3105 = vlaneseq
      %v3106 = vshrl.u32 %v3105, 7
      %v3107 = vsub.s32 0, %v3106
      %v3108 = vrot.slane %v3103, %v3107
      %v3110 = vadd.f32 %v3087, %v3108
      %v3111 = vadd.f32 %v3088, %v3108
      %v3112 = vadd.f32 %v3089, %v3108
      %v3113 = vadd.f32 %v3090, %v3108
      %v3114 = vadd.f32 %v3091, %v3108
      %v3115 = vadd.f32 %v3092, %v3108
      %v3116 = vadd.f32 %v3093, %v3108
      %v3117 = vadd.f32 %v3094, %v3108
      %v3118 = vadd.f32 %v3095, %v3108
      %v3119 = vadd.f32 %v3096, %v3108
      %v3120 = vadd.f32 %v3097, %v3108
      %v3121 = vadd.f32 %v3098, %v3108
      %v3122 = vadd.f32 %v3099, %v3108
      %v3123 = vadd.f32 %v3100, %v3108
      %v3124 = vadd.f32 %v3101, %v3108
      %v3125 = vadd.f32 %v3102, %v3108
      %v3126 = vmax.f32 %v3110, 0.0
      %v3127 = vmax.f32 %v3111, 0.0
      %v3128 = vmax.f32 %v3112, 0.0
      %v3129 = vmax.f32 %v3113, 0.0
      %v3130 = vmax.f32 %v3114, 0.0
      %v3131 = vmax.f32 %v3115, 0.0
      %v3132 = vmax.f32 %v3116, 0.0
      %v3133 = vmax.f32 %v3117, 0.0
      %v3134 = vmax.f32 %v3118, 0.0
      %v3135 = vmax.f32 %v3119, 0.0
      %v3136 = vmax.f32 %v3120, 0.0
      %v3137 = vmax.f32 %v3121, 0.0
      %v3138 = vmax.f32 %v3122, 0.0
      %v3139 = vmax.f32 %v3123, 0.0
      %v3140 = vmax.f32 %v3124, 0.0
      %v3141 = vmax.f32 %v3125, 0.0
      %3142 = vst.msk [vmem:[%s372] sm:$0xff] %vm683, %v3126
      %3143 = vst.msk [vmem:[%s372 + $0x8] sm:$0xff] %vm683, %v3127
      %3144 = vst.msk [vmem:[%s372 + $0x10] sm:$0xff] %vm683, %v3128
      %3145 = vst.msk [vmem:[%s372 + $0x18] sm:$0xff] %vm683, %v3129
      %3146 = vst.msk [vmem:[%s372 + $0x20] sm:$0xff] %vm683, %v3130
      %3147 = vst.msk [vmem:[%s372 + $0x28] sm:$0xff] %vm683, %v3131
      %3148 = vst.msk [vmem:[%s372 + $0x30] sm:$0xff] %vm683, %v3132
      %3149 = vst.msk [vmem:[%s372 + $0x38] sm:$0xff] %vm683, %v3133
      %3150 = vst.msk [vmem:[%s372 + $0x40] sm:$0xff] %vm683, %v3134
      %3151 = vst.msk [vmem:[%s372 + $0x48] sm:$0xff] %vm683, %v3135
      %3152 = vst.msk [vmem:[%s372 + $0x50] sm:$0xff] %vm683, %v3136
      %3153 = vst.msk [vmem:[%s372 + $0x58] sm:$0xff] %vm683, %v3137
      %3154 = vst.msk [vmem:[%s372 + $0x60] sm:$0xff] %vm683, %v3138
      %3155 = vst.msk [vmem:[%s372 + $0x68] sm:$0xff] %vm683, %v3139
      %3156 = vst.msk [vmem:[%s372 + $0x70] sm:$0xff] %vm683, %v3140
      %3157 = vst.msk [vmem:[%s372 + $0x78] sm:$0xff] %vm683, %v3141
      %s3158 = smul.u32 8, %s22
      %p3159 = scmp.lt.s32.totalorder %s21, 1
      %s3160 = scalar_select %p3159, %s21, 1
      %p3161 = scmp.lt.s32.totalorder %s3158, 15
      %s3162 = scalar_select %p3161, %s3158, 15
      %s3163 = smul.addr %s3162, 2
      %s3164 = smul.addr %s3160, 32
      %s3165 = sadd.s32 %s3163, %s3164
      %s3166 = smul.addr %s3165, 8
      %s3167 = scalar_lea.vmem %s6, %s3166
      // Predicated region
      $region53: #{tpu_custom_call.1} parent=43 // pred_check
        %p3168 = pneg %p193
      $region54: #{tpu_custom_call.1} parent=43 // pred_check_branch
        %3170 = sbr.rel (%p3168) target = $region56
      $region55: #{tpu_custom_call.1} parent=43 // pred_region
        %s3171 = smul.u32 8, %s22
      $region56: #{tpu_custom_call.1} parent=43 // pred_fallthru
        _
    $region44: #{tpu_custom_call.1} parent=5 // pred_fallthru
      _
    %p3172 = scmp.le.s32.totalorder 2, %s12
    // Predicated region
    $region57: #{tpu_custom_call.1} parent=5 // pred_check
      %p3173 = pneg %p3172
    $region58: #{tpu_custom_call.1} parent=5 // pred_check_branch
      %3175 = sbr.rel (%p3173) target = $region60
    $region59: #{tpu_custom_call.1} parent=5 // pred_region
      %s3176 = ssub.s32 %s12, 2
      // Predicated region
      $region61: #{tpu_custom_call.1} parent=59 // pred_check
        %p3177 = pneg %p199
      $region62: #{tpu_custom_call.1} parent=59 // pred_check_branch
        %3179 = sbr.rel (%p3177) target = $region64
      $region63: #{tpu_custom_call.1} parent=59 // pred_region
        %s3180 = smul.u32 8, %s24
        %p3181 = scmp.lt.s32.totalorder %s23, 1
        %s3182 = scalar_select %p3181, %s23, 1
        %p3183 = scmp.lt.s32.totalorder %s3180, 15
        %s3184 = scalar_select %p3183, %s3180, 15
        %s3185 = smul.addr %s3184, 2
        %s3186 = smul.addr %s3182, 32
        %s3187 = sadd.s32 %s3185, %s3186
        %s3188 = smul.addr %s3187, 8
        %s3189 = scalar_lea.vmem %s6, %s3188
      $region64: #{tpu_custom_call.1} parent=59 // pred_fallthru
        _
    $region60: #{tpu_custom_call.1} parent=5 // pred_fallthru
      _
  $region6: #{tpu_custom_call.1} parent=0 // loop_footer
    %s16 = sadd.s32 1, %s12
  $region7: #{tpu_custom_call.1} parent=0 // loop_footer_branch
    %11 = sbr.rel target = $region3
  $region8: #{tpu_custom_call.1} parent=0 // loop_exit
    _

</llo_original>
